<compile_context>
chip_gen: v7x
topology: tpu7x:2x2x1
jax: 0.10.0
libtpu: 0.0.40
codegen_flags: <defaults>
</compile_context>

<pallas_src>
import numpy as np
import jax
import jax.numpy as jnp
from jax import lax
from jax.experimental import pallas as pl
from jax.experimental.pallas import tpu as pltpu

EPS = 1e-5
REF_PREC = lax.Precision.HIGHEST   # used only by the pure-JAX reference (ground truth)


# ------------------------------ fused Pallas kernel -------------------------------
def _make_fused_call(N, T, H, W, cin, ix):
    """One pallas_call computing the whole MultiFiberUnit forward for N samples.

    Lane-fused layout: activations are (T, H, W*C); lane index = w*C + c."""
    TH = T * H
    L = W * cin          # fused lane width of in/out/mux-parity tensors (128 in the demo)
    Lx = W * ix          # fused lane width of the bottleneck tensors (64 in the demo)

    def kernel(x_ref, bn1_ref, w1_ref, bn2_ref, w2_ref, bnm1_ref,
               wm1_ref, bnm2_ref, wm2_ref, out_ref, apad_ref):
        # ---- pointwise residual block: x + Conv_i2(relu(BN(Conv_i1(relu(BN(x)))))) ----
        # Block-diagonal weights make each 1x1x1 conv a single MXU matmul in the W-fused layout.
        x2 = x_ref[0]                                                        # (TH, L)
        a1 = jnp.maximum(x2 * bn1_ref[0:1, :] + bn1_ref[1:2, :], 0.0)        # BN_i1 + ReLU
        h1 = jnp.dot(a1, w1_ref[...], preferred_element_type=jnp.float32)    # Conv_i1
        a2 = jnp.maximum(h1 * bn2_ref[0:1, :] + bn2_ref[1:2, :], 0.0)        # BN_i2 + ReLU
        xin = x2 + jnp.dot(a2, w2_ref[...], preferred_element_type=jnp.float32)  # Conv_i2 + res
        am1 = jnp.maximum(xin * bnm1_ref[0:1, :] + bnm1_ref[1:2, :], 0.0)    # BN_m1 + ReLU

        # ---- tap-shift helpers: H and W tap shifts are rolls + boundary masks (XLU/VPU) ----
        hrow = lax.broadcasted_iota(jnp.int32, (T, H, L), 1)
        lcol = lax.broadcasted_iota(jnp.int32, (T, H, L), 2)
        h_lo, h_hi = hrow < 1, hrow >= H - 1
        w_lo, w_hi = lcol < cin, lcol >= L - cin

        def shift_h(z, kh):        # value at output h taken from input h + kh - 1 (zero pad)
            if kh == 0:
                return jnp.where(h_lo, 0.0, pltpu.roll(z, 1, 1))
            if kh == 2:
                return jnp.where(h_hi, 0.0, pltpu.roll(z, H - 1, 1))
            return z

        def shift_w(z, kw):        # value at output w taken from input w + kw - 1 (zero pad)
            if kw == 0:
                return jnp.where(w_lo, 0.0, pltpu.roll(z, cin, 2))
            if kw == 2:
                return jnp.where(w_hi, 0.0, pltpu.roll(z, L - cin, 2))
            return z

        # ---- conv_m1: grouped 3x3x3 (depthwise, output multiplier 2) on the VPU ----
        # T padding via a zero-padded VMEM scratch (full-tile stores on the leading dim only).
        apad_ref[...] = jnp.zeros_like(apad_ref)
        apad_ref[1:T + 1, :, :] = am1.reshape(T, H, L)

        acc_e = jnp.zeros((T, H, L), jnp.float32)    # even output channels 2g
        acc_o = jnp.zeros((T, H, L), jnp.float32)    # odd  output channels 2g+1
        for kt in range(3):
            a_t = apad_ref[kt:kt + T, :, :]
            for kh in range(3):
                a_th = shift_h(a_t, kh)
                for kw in range(3):
                    s = shift_w(a_th, kw)
                    k = (kt * 3 + kh) * 3 + kw
                    acc_e = acc_e + wm1_ref[0, k:k + 1, :] * s
                    acc_o = acc_o + wm1_ref[1, k:k + 1, :] * s

        # BN_m2 + ReLU on the two output-channel parities
        b_e = jnp.maximum(acc_e * bnm2_ref[0:1, :] + bnm2_ref[1:2, :], 0.0)
        b_o = jnp.maximum(acc_o * bnm2_ref[2:3, :] + bnm2_ref[3:4, :], 0.0)

        # ---- conv_m2: grouped (1,3,3) (2 inputs -> 1 output per group) + residual ----
        acc = x2.reshape(T, H, L)                    # out = conv_m2(...) + x
        for kh in range(3):
            be_h = shift_h(b_e, kh)
            bo_h = shift_h(b_o, kh)
            for kw in range(3):
                k = kh * 3 + kw
                acc = (acc
                       + wm2_ref[0, k:k + 1, :] * shift_w(be_h, kw)
                       + wm2_ref[1, k:k + 1, :] * shift_w(bo_h, kw))

        out_ref[...] = acc.reshape(1, TH, L)         # lane-dense (.., W*C = 128) store

    def full(shape):
        zeros = (0,) * len(shape)
        return pl.BlockSpec(shape, lambda n: zeros)

    return pl.pallas_call(
        kernel,
        out_shape=jax.ShapeDtypeStruct((N, TH, L), jnp.float32),
        grid=(N,),
        in_specs=[
            pl.BlockSpec((1, TH, L), lambda n: (n, 0, 0)),   # x, one sample per grid step
            full((2, L)), full((L, Lx)),                     # BN_i1 (scale/offset), Conv_i1
            full((2, Lx)), full((Lx, L)),                    # BN_i2, Conv_i2
            full((2, L)),                                    # BN_m1
            full((2, 27, L)),                                # Conv_m1 taps (even/odd parity)
            full((4, L)),                                    # BN_m2 (even s,o | odd s,o)
            full((2, 9, L)),                                 # Conv_m2 taps (even/odd input)
        ],
        out_specs=pl.BlockSpec((1, TH, L), lambda n: (n, 0, 0)),
        scratch_shapes=[pltpu.VMEM((T + 2, H, L), jnp.float32)],   # T-padded conv_m1 input
        compiler_params=pltpu.CompilerParams(dimension_semantics=("parallel",)),
    )


def multi_fiber_unit(x_ncdhw, fp):
    """MultiFiberUnit forward (is_first=False, stride 1): [N,C,T,H,W] -> [N,C,T,H,W]."""
    x = jnp.transpose(x_ncdhw, (0, 2, 3, 4, 1)).astype(jnp.float32)    # NCDHW -> NDHWC
    N, T, H, W, cin = x.shape
    ix = fp["w1"].shape[1] // W
    call = _make_fused_call(N, T, H, W, cin, ix)
    out_f = call(x.reshape(N, T * H, W * cin),
                 fp["bn1"], fp["w1"], fp["bn2"], fp["w2"], fp["bnm1"],
                 fp["wm1"], fp["bnm2"], fp["wm2"])
    return jnp.transpose(out_f.reshape(N, T, H, W, cin), (0, 4, 1, 2, 3))


# -------------------------- parameter construction --------------------------------
def _bn_params(key, c):
    k1, k2, k3, k4 = jax.random.split(key, 4)
    gamma = 1.0 + 0.1 * jax.random.normal(k1, (c,), jnp.float32)
    beta = 0.1 * jax.random.normal(k2, (c,), jnp.float32)
    mean = 0.1 * jax.random.normal(k3, (c,), jnp.float32)
    var = 0.5 + jax.random.uniform(k4, (c,), jnp.float32)
    return gamma, beta, mean, var


def _conv_weight(key, cout, cin_g, ks):
    fan = cin_g * ks[0] * ks[1] * ks[2]
    return (jax.random.normal(key, (cout, cin_g) + ks, jnp.float32)
            / np.sqrt(float(fan)))


def build_fused_params(raw, W, groups):
    """Host prep: fold BN (inference), fuse W into the lane dim, split grouped conv weights
    into even/odd per-channel depthwise tap vectors (conv_m1: output parity, conv_m2: input)."""
    w_i1 = np.asarray(raw["w_i1"], np.float32)       # (ix, in, 1,1,1)
    w_i2 = np.asarray(raw["w_i2"], np.float32)       # (in, ix, 1,1,1)
    w_m1 = np.asarray(raw["w_m1"], np.float32)       # (mux, in/g, 3,3,3)
    w_m2 = np.asarray(raw["w_m2"], np.float32)       # (out, mux/g, 1,3,3)
    ix_ch, in_ch = w_i1.shape[:2]
    mux_ch, out_ch = w_m1.shape[0], w_m2.shape[0]

    # configuration supported by the fused kernel (MF-Net defaults)
    assert w_m1.shape[1] == 1 and mux_ch == 2 * groups   # conv_m1: depthwise, multiplier 2
    assert w_m2.shape[1] == 2 and out_ch == groups       # conv_m2: 2 inputs -> 1 output/group
    assert in_ch == groups and out_ch == in_ch           # residual path

    def fold(bn):                                        # BN (inference) -> scale, offset
        g, b, m, v = (np.asarray(t, np.float32) for t in bn)
        s = g / np.sqrt(v + EPS)
        return s, b - m * s

    def lane_tile(v):                                    # (C,) -> (W*C,), lane = w*C + c
        return np.tile(np.asarray(v, np.float32), W)

    def tap_tile(w_ck):                                  # (C, K) -> (K, W*C)
        return np.tile(np.ascontiguousarray(w_ck.T), (1, W))

    s1, o1 = fold(raw["bn_i1"])
    s2, o2 = fold(raw["bn_i2"])
    sm1, om1 = fold(raw["bn_m1"])
    sm2, om2 = fold(raw["bn_m2"])

    eye_w = np.eye(W, dtype=np.float32)
    p = {
        "bn1": np.stack([lane_tile(s1), lane_tile(o1)]),
        "w1": np.kron(eye_w, w_i1[:, :, 0, 0, 0].T),               # (W*in, W*ix) block-diag
        "bn2": np.stack([lane_tile(s2), lane_tile(o2)]),
        "w2": np.kron(eye_w, w_i2[:, :, 0, 0, 0].T),               # (W*ix, W*in) block-diag
        "bnm1": np.stack([lane_tile(sm1), lane_tile(om1)]),
        "wm1": np.stack([tap_tile(w_m1[0::2, 0].reshape(groups, 27)),
                         tap_tile(w_m1[1::2, 0].reshape(groups, 27))]),
        "bnm2": np.stack([lane_tile(sm2[0::2]), lane_tile(om2[0::2]),
                          lane_tile(sm2[1::2]), lane_tile(om2[1::2])]),
        "wm2": np.stack([tap_tile(w_m2[:, 0, 0].reshape(groups, 9)),
                         tap_tile(w_m2[:, 1, 0].reshape(groups, 9))]),
    }
    return {k: jnp.asarray(v, jnp.float32) for k, v in p.items()}


# ------------------------------- pure-JAX reference --------------------------------
def torch_ref(x_ncdhw, raw, groups):
    def bn_relu(x, bn):
        g, b, m, v = bn
        return jnp.maximum((x - m) * (g / jnp.sqrt(v + EPS)) + b, 0.0)

    def conv(x, w_t, stride, pad, grp):
        w = jnp.transpose(w_t, (2, 3, 4, 1, 0))   # torch OIDHW -> DHWIO
        return lax.conv_general_dilated(
            x, w, window_strides=stride, padding=[(p, p) for p in pad],
            dimension_numbers=("NDHWC", "DHWIO", "NDHWC"),
            feature_group_count=grp, precision=REF_PREC)

    x = jnp.transpose(x_ncdhw, (0, 2, 3, 4, 1)).astype(jnp.float32)
    h = conv(bn_relu(x, raw["bn_i1"]), raw["w_i1"], (1, 1, 1), (0, 0, 0), 1)
    x_in = x + conv(bn_relu(h, raw["bn_i2"]), raw["w_i2"], (1, 1, 1), (0, 0, 0), 1)
    h = conv(bn_relu(x_in, raw["bn_m1"]), raw["w_m1"], (1, 1, 1), (1, 1, 1), groups)
    h = conv(bn_relu(h, raw["bn_m2"]), raw["w_m2"], (1, 1, 1), (0, 1, 1), groups)
    return jnp.transpose(h + x, (0, 4, 1, 2, 3))


if __name__ == "__main__":
    # MultiFiberUnit(in_ch=16, mux_ch=32, out_ch=16, main_stride=(1,1,1), is_first=False)
    N, in_ch, mux_ch, out_ch, groups = 2, 16, 32, 16, 16
    ix_ch = mux_ch // 4
    T, H, W = 4, 8, 8

    key = jax.random.PRNGKey(0)
    ks = jax.random.split(key, 10)

    raw = {
        "bn_i1": _bn_params(ks[0], in_ch),
        "w_i1": _conv_weight(ks[1], ix_ch, in_ch, (1, 1, 1)),
        "bn_i2": _bn_params(ks[2], ix_ch),
        "w_i2": _conv_weight(ks[3], in_ch, ix_ch, (1, 1, 1)),
        "bn_m1": _bn_params(ks[4], in_ch),
        "w_m1": _conv_weight(ks[5], mux_ch, in_ch // groups, (3, 3, 3)),
        "bn_m2": _bn_params(ks[6], mux_ch),
        "w_m2": _conv_weight(ks[7], out_ch, mux_ch // groups, (1, 3, 3)),
    }

    fused = build_fused_params(raw, W, groups)
    x = jax.random.normal(ks[8], (N, in_ch, T, H, W), jnp.float32)

    out = jax.block_until_ready(jax.jit(multi_fiber_unit)(x, fused))
    ref = jax.block_until_ready(torch_ref(x, raw, groups))

    assert out.shape == (N, out_ch, T, H, W), out.shape
    err = float(jnp.max(jnp.abs(out - ref)))
    # Kernel matmuls run at default (single-pass bf16) MXU precision per the perf review, while
    # the reference is f32/HIGHEST -> allow 5e-2 max-abs (typical observed error is ~1e-3).
    assert err < 5e-2, f"max abs err {err}"
    print("KERNEL_OK")
</pallas_src>

<mosaic_0001>
module attributes {stable_mosaic.version = 11 : i64} {
  func.func @kernel(%arg0: i32, %arg1: memref<1x32x128xf32, #tpu.memory_space<vmem>>, %arg2: memref<2x128xf32, #tpu.memory_space<vmem>>, %arg3: memref<128x64xf32, #tpu.memory_space<vmem>>, %arg4: memref<2x64xf32, #tpu.memory_space<vmem>>, %arg5: memref<64x128xf32, #tpu.memory_space<vmem>>, %arg6: memref<2x128xf32, #tpu.memory_space<vmem>>, %arg7: memref<2x27x128xf32, #tpu.memory_space<vmem>>, %arg8: memref<4x128xf32, #tpu.memory_space<vmem>>, %arg9: memref<2x9x128xf32, #tpu.memory_space<vmem>>, %arg10: memref<1x32x128xf32, #tpu.memory_space<vmem>>, %arg11: memref<6x8x128xf32, #tpu.memory_space<vmem>>) attributes {dimension_semantics = [#tpu.dimension_semantics<parallel>], iteration_bounds = array<i64: 2>, scalar_prefetch = 0 : i64, scratch_operands = 1 : i64, tpu.core_type = #tpu.core_type<tc>, window_params = [{transform_indices = @transform_0, window_bounds = array<i64: 1, 32, 128>}, {pipeline_mode = #tpu.pipeline_mode<synchronous>, transform_indices = @transform_1, window_bounds = array<i64: 2, 128>}, {pipeline_mode = #tpu.pipeline_mode<synchronous>, transform_indices = @transform_2, window_bounds = array<i64: 128, 64>}, {pipeline_mode = #tpu.pipeline_mode<synchronous>, transform_indices = @transform_3, window_bounds = array<i64: 2, 64>}, {pipeline_mode = #tpu.pipeline_mode<synchronous>, transform_indices = @transform_4, window_bounds = array<i64: 64, 128>}, {pipeline_mode = #tpu.pipeline_mode<synchronous>, transform_indices = @transform_5, window_bounds = array<i64: 2, 128>}, {pipeline_mode = #tpu.pipeline_mode<synchronous>, transform_indices = @transform_6, window_bounds = array<i64: 2, 27, 128>}, {pipeline_mode = #tpu.pipeline_mode<synchronous>, transform_indices = @transform_7, window_bounds = array<i64: 4, 128>}, {pipeline_mode = #tpu.pipeline_mode<synchronous>, transform_indices = @transform_8, window_bounds = array<i64: 2, 9, 128>}, {transform_indices = @transform_9, window_bounds = array<i64: 1, 32, 128>}]} {
    %c0 = arith.constant 0 : index
    %c0_0 = arith.constant 0 : index
    %c0_1 = arith.constant 0 : index
    %0 = vector.load %arg1[%c0, %c0_0, %c0_1] : memref<1x32x128xf32, #tpu.memory_space<vmem>>, vector<1x32x128xf32>
    %1 = vector.shape_cast %0 : vector<1x32x128xf32> to vector<32x128xf32>
    %c0_2 = arith.constant 0 : index
    %c0_3 = arith.constant 0 : index
    %2 = vector.load %arg2[%c0_2, %c0_3] : memref<2x128xf32, #tpu.memory_space<vmem>>, vector<1x128xf32>
    %3 = vector.broadcast %2 : vector<1x128xf32> to vector<32x128xf32>
    %4 = arith.mulf %1, %3 : vector<32x128xf32>
    %c1 = arith.constant 1 : index
    %c0_4 = arith.constant 0 : index
    %5 = vector.load %arg2[%c1, %c0_4] : memref<2x128xf32, #tpu.memory_space<vmem>>, vector<1x128xf32>
    %6 = vector.broadcast %5 : vector<1x128xf32> to vector<32x128xf32>
    %7 = arith.addf %4, %6 : vector<32x128xf32>
    %cst = arith.constant 0.000000e+00 : f32
    %8 = vector.broadcast %cst : f32 to vector<32x128xf32>
    %9 = arith.maximumf %7, %8 : vector<32x128xf32>
    %c0_5 = arith.constant 0 : index
    %c0_6 = arith.constant 0 : index
    %10 = vector.load %arg3[%c0_5, %c0_6] : memref<128x64xf32, #tpu.memory_space<vmem>>, vector<128x64xf32>
    %cst_7 = arith.constant dense<0.000000e+00> : vector<32x64xf32>
    %11 = tpu.matmul %9, %10, %cst_7 {dimension_numbers = #tpu.dot_dimension_numbers<[1], [0], [0], [1], [0, 0, 1, 1], [], []>} : vector<32x128xf32>, vector<128x64xf32>, vector<32x64xf32> -> vector<32x64xf32>
    %c0_8 = arith.constant 0 : index
    %c0_9 = arith.constant 0 : index
    %12 = vector.load %arg4[%c0_8, %c0_9] : memref<2x64xf32, #tpu.memory_space<vmem>>, vector<1x64xf32>
    %13 = vector.broadcast %12 : vector<1x64xf32> to vector<32x64xf32>
    %14 = arith.mulf %11, %13 : vector<32x64xf32>
    %c1_10 = arith.constant 1 : index
    %c0_11 = arith.constant 0 : index
    %15 = vector.load %arg4[%c1_10, %c0_11] : memref<2x64xf32, #tpu.memory_space<vmem>>, vector<1x64xf32>
    %16 = vector.broadcast %15 : vector<1x64xf32> to vector<32x64xf32>
    %17 = arith.addf %14, %16 : vector<32x64xf32>
    %cst_12 = arith.constant 0.000000e+00 : f32
    %18 = vector.broadcast %cst_12 : f32 to vector<32x64xf32>
    %19 = arith.maximumf %17, %18 : vector<32x64xf32>
    %c0_13 = arith.constant 0 : index
    %c0_14 = arith.constant 0 : index
    %20 = vector.load %arg5[%c0_13, %c0_14] : memref<64x128xf32, #tpu.memory_space<vmem>>, vector<64x128xf32>
    %cst_15 = arith.constant dense<0.000000e+00> : vector<32x128xf32>
    %21 = tpu.matmul %19, %20, %cst_15 {dimension_numbers = #tpu.dot_dimension_numbers<[1], [0], [0], [1], [0, 0, 1, 1], [], []>} : vector<32x64xf32>, vector<64x128xf32>, vector<32x128xf32> -> vector<32x128xf32>
    %22 = arith.addf %1, %21 : vector<32x128xf32>
    %c0_16 = arith.constant 0 : index
    %c0_17 = arith.constant 0 : index
    %23 = vector.load %arg6[%c0_16, %c0_17] : memref<2x128xf32, #tpu.memory_space<vmem>>, vector<1x128xf32>
    %24 = vector.broadcast %23 : vector<1x128xf32> to vector<32x128xf32>
    %25 = arith.mulf %22, %24 : vector<32x128xf32>
    %c1_18 = arith.constant 1 : index
    %c0_19 = arith.constant 0 : index
    %26 = vector.load %arg6[%c1_18, %c0_19] : memref<2x128xf32, #tpu.memory_space<vmem>>, vector<1x128xf32>
    %27 = vector.broadcast %26 : vector<1x128xf32> to vector<32x128xf32>
    %28 = arith.addf %25, %27 : vector<32x128xf32>
    %cst_20 = arith.constant 0.000000e+00 : f32
    %29 = vector.broadcast %cst_20 : f32 to vector<32x128xf32>
    %30 = arith.maximumf %28, %29 : vector<32x128xf32>
    %31 = tpu.iota {dimensions = array<i32: 1>} : vector<4x8x128xi32>
    %32 = tpu.iota {dimensions = array<i32: 2>} : vector<4x8x128xi32>
    %c1_i32 = arith.constant 1 : i32
    %33 = vector.broadcast %c1_i32 : i32 to vector<4x8x128xi32>
    %34 = arith.cmpi slt, %31, %33 : vector<4x8x128xi32>
    %c7_i32 = arith.constant 7 : i32
    %35 = vector.broadcast %c7_i32 : i32 to vector<4x8x128xi32>
    %36 = arith.cmpi sge, %31, %35 : vector<4x8x128xi32>
    %c16_i32 = arith.constant 16 : i32
    %37 = vector.broadcast %c16_i32 : i32 to vector<4x8x128xi32>
    %38 = arith.cmpi slt, %32, %37 : vector<4x8x128xi32>
    %c112_i32 = arith.constant 112 : i32
    %39 = vector.broadcast %c112_i32 : i32 to vector<4x8x128xi32>
    %40 = arith.cmpi sge, %32, %39 : vector<4x8x128xi32>
    %cst_21 = arith.constant 0.000000e+00 : f32
    %41 = vector.broadcast %cst_21 : f32 to vector<6x8x128xf32>
    %c0_22 = arith.constant 0 : index
    %c0_23 = arith.constant 0 : index
    %c0_24 = arith.constant 0 : index
    %42 = vector.load %arg11[%c0_22, %c0_23, %c0_24] : memref<6x8x128xf32, #tpu.memory_space<vmem>>, vector<6x8x128xf32>
    tpu.vector_store %arg11[%c0_22, %c0_23, %c0_24], %41 {strides = array<i32>} : memref<6x8x128xf32, #tpu.memory_space<vmem>>, vector<6x8x128xf32>,
    %43 = vector.shape_cast %30 : vector<32x128xf32> to vector<4x8x128xf32>
    %c1_25 = arith.constant 1 : index
    %c0_26 = arith.constant 0 : index
    %c0_27 = arith.constant 0 : index
    %44 = vector.load %arg11[%c1_25, %c0_26, %c0_27] : memref<6x8x128xf32, #tpu.memory_space<vmem>>, vector<4x8x128xf32>
    tpu.vector_store %arg11[%c1_25, %c0_26, %c0_27], %43 {strides = array<i32>} : memref<6x8x128xf32, #tpu.memory_space<vmem>>, vector<4x8x128xf32>,
    %cst_28 = arith.constant 0.000000e+00 : f32
    %45 = vector.broadcast %cst_28 : f32 to vector<4x8x128xf32>
    %cst_29 = arith.constant 0.000000e+00 : f32
    %46 = vector.broadcast %cst_29 : f32 to vector<4x8x128xf32>
    %c0_30 = arith.constant 0 : index
    %c0_31 = arith.constant 0 : index
    %c0_32 = arith.constant 0 : index
    %47 = vector.load %arg11[%c0_30, %c0_31, %c0_32] : memref<6x8x128xf32, #tpu.memory_space<vmem>>, vector<4x8x128xf32>
    %c1_i32_33 = arith.constant 1 : i32
    %48 = tpu.dynamic_rotate %47 by %c1_i32_33 dim 1 : vector<4x8x128xf32>, i32 -> vector<4x8x128xf32>
    %cst_34 = arith.constant 0.000000e+00 : f32
    %49 = vector.broadcast %cst_34 : f32 to vector<4x8x128xf32>
    %50 = arith.select %34, %49, %48 : vector<4x8x128xi1>, vector<4x8x128xf32>
    %c16_i32_35 = arith.constant 16 : i32
    %51 = tpu.dynamic_rotate %50 by %c16_i32_35 dim 2 : vector<4x8x128xf32>, i32 -> vector<4x8x128xf32>
    %cst_36 = arith.constant 0.000000e+00 : f32
    %52 = vector.broadcast %cst_36 : f32 to vector<4x8x128xf32>
    %53 = arith.select %38, %52, %51 : vector<4x8x128xi1>, vector<4x8x128xf32>
    %c0_37 = arith.constant 0 : index
    %c0_38 = arith.constant 0 : index
    %c0_39 = arith.constant 0 : index
    %54 = vector.load %arg7[%c0_37, %c0_38, %c0_39] : memref<2x27x128xf32, #tpu.memory_space<vmem>>, vector<1x1x128xf32>
    %55 = vector.shape_cast %54 : vector<1x1x128xf32> to vector<1x128xf32>
    %56 = vector.shape_cast %55 : vector<1x128xf32> to vector<1x1x128xf32>
    %57 = vector.broadcast %56 : vector<1x1x128xf32> to vector<4x8x128xf32>
    %58 = arith.mulf %57, %53 : vector<4x8x128xf32>
    %59 = arith.addf %45, %58 : vector<4x8x128xf32>
    %c1_40 = arith.constant 1 : index
    %c0_41 = arith.constant 0 : index
    %c0_42 = arith.constant 0 : index
    %60 = vector.load %arg7[%c1_40, %c0_41, %c0_42] : memref<2x27x128xf32, #tpu.memory_space<vmem>>, vector<1x1x128xf32>
    %61 = vector.shape_cast %60 : vector<1x1x128xf32> to vector<1x128xf32>
    %62 = vector.shape_cast %61 : vector<1x128xf32> to vector<1x1x128xf32>
    %63 = vector.broadcast %62 : vector<1x1x128xf32> to vector<4x8x128xf32>
    %64 = arith.mulf %63, %53 : vector<4x8x128xf32>
    %65 = arith.addf %46, %64 : vector<4x8x128xf32>
    %c0_43 = arith.constant 0 : index
    %c1_44 = arith.constant 1 : index
    %c0_45 = arith.constant 0 : index
    %66 = vector.load %arg7[%c0_43, %c1_44, %c0_45] : memref<2x27x128xf32, #tpu.memory_space<vmem>>, vector<1x1x128xf32>
    %67 = vector.shape_cast %66 : vector<1x1x128xf32> to vector<1x128xf32>
    %68 = vector.shape_cast %67 : vector<1x128xf32> to vector<1x1x128xf32>
    %69 = vector.broadcast %68 : vector<1x1x128xf32> to vector<4x8x128xf32>
    %70 = arith.mulf %69, %50 : vector<4x8x128xf32>
    %71 = arith.addf %59, %70 : vector<4x8x128xf32>
    %c1_46 = arith.constant 1 : index
    %c1_47 = arith.constant 1 : index
    %c0_48 = arith.constant 0 : index
    %72 = vector.load %arg7[%c1_46, %c1_47, %c0_48] : memref<2x27x128xf32, #tpu.memory_space<vmem>>, vector<1x1x128xf32>
    %73 = vector.shape_cast %72 : vector<1x1x128xf32> to vector<1x128xf32>
    %74 = vector.shape_cast %73 : vector<1x128xf32> to vector<1x1x128xf32>
    %75 = vector.broadcast %74 : vector<1x1x128xf32> to vector<4x8x128xf32>
    %76 = arith.mulf %75, %50 : vector<4x8x128xf32>
    %77 = arith.addf %65, %76 : vector<4x8x128xf32>
    %c112_i32_49 = arith.constant 112 : i32
    %78 = tpu.dynamic_rotate %50 by %c112_i32_49 dim 2 : vector<4x8x128xf32>, i32 -> vector<4x8x128xf32>
    %cst_50 = arith.constant 0.000000e+00 : f32
    %79 = vector.broadcast %cst_50 : f32 to vector<4x8x128xf32>
    %80 = arith.select %40, %79, %78 : vector<4x8x128xi1>, vector<4x8x128xf32>
    %c0_51 = arith.constant 0 : index
    %c2 = arith.constant 2 : index
    %c0_52 = arith.constant 0 : index
    %81 = vector.load %arg7[%c0_51, %c2, %c0_52] : memref<2x27x128xf32, #tpu.memory_space<vmem>>, vector<1x1x128xf32>
    %82 = vector.shape_cast %81 : vector<1x1x128xf32> to vector<1x128xf32>
    %83 = vector.shape_cast %82 : vector<1x128xf32> to vector<1x1x128xf32>
    %84 = vector.broadcast %83 : vector<1x1x128xf32> to vector<4x8x128xf32>
    %85 = arith.mulf %84, %80 : vector<4x8x128xf32>
    %86 = arith.addf %71, %85 : vector<4x8x128xf32>
    %c1_53 = arith.constant 1 : index
    %c2_54 = arith.constant 2 : index
    %c0_55 = arith.constant 0 : index
    %87 = vector.load %arg7[%c1_53, %c2_54, %c0_55] : memref<2x27x128xf32, #tpu.memory_space<vmem>>, vector<1x1x128xf32>
    %88 = vector.shape_cast %87 : vector<1x1x128xf32> to vector<1x128xf32>
    %89 = vector.shape_cast %88 : vector<1x128xf32> to vector<1x1x128xf32>
    %90 = vector.broadcast %89 : vector<1x1x128xf32> to vector<4x8x128xf32>
    %91 = arith.mulf %90, %80 : vector<4x8x128xf32>
    %92 = arith.addf %77, %91 : vector<4x8x128xf32>
    %c16_i32_56 = arith.constant 16 : i32
    %93 = tpu.dynamic_rotate %47 by %c16_i32_56 dim 2 : vector<4x8x128xf32>, i32 -> vector<4x8x128xf32>
    %cst_57 = arith.constant 0.000000e+00 : f32
    %94 = vector.broadcast %cst_57 : f32 to vector<4x8x128xf32>
    %95 = arith.select %38, %94, %93 : vector<4x8x128xi1>, vector<4x8x128xf32>
    %c0_58 = arith.constant 0 : index
    %c3 = arith.constant 3 : index
    %c0_59 = arith.constant 0 : index
    %96 = vector.load %arg7[%c0_58, %c3, %c0_59] : memref<2x27x128xf32, #tpu.memory_space<vmem>>, vector<1x1x128xf32>
    %97 = vector.shape_cast %96 : vector<1x1x128xf32> to vector<1x128xf32>
    %98 = vector.shape_cast %97 : vector<1x128xf32> to vector<1x1x128xf32>
    %99 = vector.broadcast %98 : vector<1x1x128xf32> to vector<4x8x128xf32>
    %100 = arith.mulf %99, %95 : vector<4x8x128xf32>
    %101 = arith.addf %86, %100 : vector<4x8x128xf32>
    %c1_60 = arith.constant 1 : index
    %c3_61 = arith.constant 3 : index
    %c0_62 = arith.constant 0 : index
    %102 = vector.load %arg7[%c1_60, %c3_61, %c0_62] : memref<2x27x128xf32, #tpu.memory_space<vmem>>, vector<1x1x128xf32>
    %103 = vector.shape_cast %102 : vector<1x1x128xf32> to vector<1x128xf32>
    %104 = vector.shape_cast %103 : vector<1x128xf32> to vector<1x1x128xf32>
    %105 = vector.broadcast %104 : vector<1x1x128xf32> to vector<4x8x128xf32>
    %106 = arith.mulf %105, %95 : vector<4x8x128xf32>
    %107 = arith.addf %92, %106 : vector<4x8x128xf32>
    %c0_63 = arith.constant 0 : index
    %c4 = arith.constant 4 : index
    %c0_64 = arith.constant 0 : index
    %108 = vector.load %arg7[%c0_63, %c4, %c0_64] : memref<2x27x128xf32, #tpu.memory_space<vmem>>, vector<1x1x128xf32>
    %109 = vector.shape_cast %108 : vector<1x1x128xf32> to vector<1x128xf32>
    %110 = vector.shape_cast %109 : vector<1x128xf32> to vector<1x1x128xf32>
    %111 = vector.broadcast %110 : vector<1x1x128xf32> to vector<4x8x128xf32>
    %112 = arith.mulf %111, %47 : vector<4x8x128xf32>
    %113 = arith.addf %101, %112 : vector<4x8x128xf32>
    %c1_65 = arith.constant 1 : index
    %c4_66 = arith.constant 4 : index
    %c0_67 = arith.constant 0 : index
    %114 = vector.load %arg7[%c1_65, %c4_66, %c0_67] : memref<2x27x128xf32, #tpu.memory_space<vmem>>, vector<1x1x128xf32>
    %115 = vector.shape_cast %114 : vector<1x1x128xf32> to vector<1x128xf32>
    %116 = vector.shape_cast %115 : vector<1x128xf32> to vector<1x1x128xf32>
    %117 = vector.broadcast %116 : vector<1x1x128xf32> to vector<4x8x128xf32>
    %118 = arith.mulf %117, %47 : vector<4x8x128xf32>
    %119 = arith.addf %107, %118 : vector<4x8x128xf32>
    %c112_i32_68 = arith.constant 112 : i32
    %120 = tpu.dynamic_rotate %47 by %c112_i32_68 dim 2 : vector<4x8x128xf32>, i32 -> vector<4x8x128xf32>
    %cst_69 = arith.constant 0.000000e+00 : f32
    %121 = vector.broadcast %cst_69 : f32 to vector<4x8x128xf32>
    %122 = arith.select %40, %121, %120 : vector<4x8x128xi1>, vector<4x8x128xf32>
    %c0_70 = arith.constant 0 : index
    %c5 = arith.constant 5 : index
    %c0_71 = arith.constant 0 : index
    %123 = vector.load %arg7[%c0_70, %c5, %c0_71] : memref<2x27x128xf32, #tpu.memory_space<vmem>>, vector<1x1x128xf32>
    %124 = vector.shape_cast %123 : vector<1x1x128xf32> to vector<1x128xf32>
    %125 = vector.shape_cast %124 : vector<1x128xf32> to vector<1x1x128xf32>
    %126 = vector.broadcast %125 : vector<1x1x128xf32> to vector<4x8x128xf32>
    %127 = arith.mulf %126, %122 : vector<4x8x128xf32>
    %128 = arith.addf %113, %127 : vector<4x8x128xf32>
    %c1_72 = arith.constant 1 : index
    %c5_73 = arith.constant 5 : index
    %c0_74 = arith.constant 0 : index
    %129 = vector.load %arg7[%c1_72, %c5_73, %c0_74] : memref<2x27x128xf32, #tpu.memory_space<vmem>>, vector<1x1x128xf32>
    %130 = vector.shape_cast %129 : vector<1x1x128xf32> to vector<1x128xf32>
    %131 = vector.shape_cast %130 : vector<1x128xf32> to vector<1x1x128xf32>
    %132 = vector.broadcast %131 : vector<1x1x128xf32> to vector<4x8x128xf32>
    %133 = arith.mulf %132, %122 : vector<4x8x128xf32>
    %134 = arith.addf %119, %133 : vector<4x8x128xf32>
    %c7_i32_75 = arith.constant 7 : i32
    %135 = tpu.dynamic_rotate %47 by %c7_i32_75 dim 1 : vector<4x8x128xf32>, i32 -> vector<4x8x128xf32>
    %cst_76 = arith.constant 0.000000e+00 : f32
    %136 = vector.broadcast %cst_76 : f32 to vector<4x8x128xf32>
    %137 = arith.select %36, %136, %135 : vector<4x8x128xi1>, vector<4x8x128xf32>
    %c16_i32_77 = arith.constant 16 : i32
    %138 = tpu.dynamic_rotate %137 by %c16_i32_77 dim 2 : vector<4x8x128xf32>, i32 -> vector<4x8x128xf32>
    %cst_78 = arith.constant 0.000000e+00 : f32
    %139 = vector.broadcast %cst_78 : f32 to vector<4x8x128xf32>
    %140 = arith.select %38, %139, %138 : vector<4x8x128xi1>, vector<4x8x128xf32>
    %c0_79 = arith.constant 0 : index
    %c6 = arith.constant 6 : index
    %c0_80 = arith.constant 0 : index
    %141 = vector.load %arg7[%c0_79, %c6, %c0_80] : memref<2x27x128xf32, #tpu.memory_space<vmem>>, vector<1x1x128xf32>
    %142 = vector.shape_cast %141 : vector<1x1x128xf32> to vector<1x128xf32>
    %143 = vector.shape_cast %142 : vector<1x128xf32> to vector<1x1x128xf32>
    %144 = vector.broadcast %143 : vector<1x1x128xf32> to vector<4x8x128xf32>
    %145 = arith.mulf %144, %140 : vector<4x8x128xf32>
    %146 = arith.addf %128, %145 : vector<4x8x128xf32>
    %c1_81 = arith.constant 1 : index
    %c6_82 = arith.constant 6 : index
    %c0_83 = arith.constant 0 : index
    %147 = vector.load %arg7[%c1_81, %c6_82, %c0_83] : memref<2x27x128xf32, #tpu.memory_space<vmem>>, vector<1x1x128xf32>
    %148 = vector.shape_cast %147 : vector<1x1x128xf32> to vector<1x128xf32>
    %149 = vector.shape_cast %148 : vector<1x128xf32> to vector<1x1x128xf32>
    %150 = vector.broadcast %149 : vector<1x1x128xf32> to vector<4x8x128xf32>
    %151 = arith.mulf %150, %140 : vector<4x8x128xf32>
    %152 = arith.addf %134, %151 : vector<4x8x128xf32>
    %c0_84 = arith.constant 0 : index
    %c7 = arith.constant 7 : index
    %c0_85 = arith.constant 0 : index
    %153 = vector.load %arg7[%c0_84, %c7, %c0_85] : memref<2x27x128xf32, #tpu.memory_space<vmem>>, vector<1x1x128xf32>
    %154 = vector.shape_cast %153 : vector<1x1x128xf32> to vector<1x128xf32>
    %155 = vector.shape_cast %154 : vector<1x128xf32> to vector<1x1x128xf32>
    %156 = vector.broadcast %155 : vector<1x1x128xf32> to vector<4x8x128xf32>
    %157 = arith.mulf %156, %137 : vector<4x8x128xf32>
    %158 = arith.addf %146, %157 : vector<4x8x128xf32>
    %c1_86 = arith.constant 1 : index
    %c7_87 = arith.constant 7 : index
    %c0_88 = arith.constant 0 : index
    %159 = vector.load %arg7[%c1_86, %c7_87, %c0_88] : memref<2x27x128xf32, #tpu.memory_space<vmem>>, vector<1x1x128xf32>
    %160 = vector.shape_cast %159 : vector<1x1x128xf32> to vector<1x128xf32>
    %161 = vector.shape_cast %160 : vector<1x128xf32> to vector<1x1x128xf32>
    %162 = vector.broadcast %161 : vector<1x1x128xf32> to vector<4x8x128xf32>
    %163 = arith.mulf %162, %137 : vector<4x8x128xf32>
    %164 = arith.addf %152, %163 : vector<4x8x128xf32>
    %c112_i32_89 = arith.constant 112 : i32
    %165 = tpu.dynamic_rotate %137 by %c112_i32_89 dim 2 : vector<4x8x128xf32>, i32 -> vector<4x8x128xf32>
    %cst_90 = arith.constant 0.000000e+00 : f32
    %166 = vector.broadcast %cst_90 : f32 to vector<4x8x128xf32>
    %167 = arith.select %40, %166, %165 : vector<4x8x128xi1>, vector<4x8x128xf32>
    %c0_91 = arith.constant 0 : index
    %c8 = arith.constant 8 : index
    %c0_92 = arith.constant 0 : index
    %168 = vector.load %arg7[%c0_91, %c8, %c0_92] : memref<2x27x128xf32, #tpu.memory_space<vmem>>, vector<1x1x128xf32>
    %169 = vector.shape_cast %168 : vector<1x1x128xf32> to vector<1x128xf32>
    %170 = vector.shape_cast %169 : vector<1x128xf32> to vector<1x1x128xf32>
    %171 = vector.broadcast %170 : vector<1x1x128xf32> to vector<4x8x128xf32>
    %172 = arith.mulf %171, %167 : vector<4x8x128xf32>
    %173 = arith.addf %158, %172 : vector<4x8x128xf32>
    %c1_93 = arith.constant 1 : index
    %c8_94 = arith.constant 8 : index
    %c0_95 = arith.constant 0 : index
    %174 = vector.load %arg7[%c1_93, %c8_94, %c0_95] : memref<2x27x128xf32, #tpu.memory_space<vmem>>, vector<1x1x128xf32>
    %175 = vector.shape_cast %174 : vector<1x1x128xf32> to vector<1x128xf32>
    %176 = vector.shape_cast %175 : vector<1x128xf32> to vector<1x1x128xf32>
    %177 = vector.broadcast %176 : vector<1x1x128xf32> to vector<4x8x128xf32>
    %178 = arith.mulf %177, %167 : vector<4x8x128xf32>
    %179 = arith.addf %164, %178 : vector<4x8x128xf32>
    %c1_96 = arith.constant 1 : index
    %c0_97 = arith.constant 0 : index
    %c0_98 = arith.constant 0 : index
    %180 = vector.load %arg11[%c1_96, %c0_97, %c0_98] : memref<6x8x128xf32, #tpu.memory_space<vmem>>, vector<4x8x128xf32>
    %c1_i32_99 = arith.constant 1 : i32
    %181 = tpu.dynamic_rotate %180 by %c1_i32_99 dim 1 : vector<4x8x128xf32>, i32 -> vector<4x8x128xf32>
    %cst_100 = arith.constant 0.000000e+00 : f32
    %182 = vector.broadcast %cst_100 : f32 to vector<4x8x128xf32>
    %183 = arith.select %34, %182, %181 : vector<4x8x128xi1>, vector<4x8x128xf32>
    %c16_i32_101 = arith.constant 16 : i32
    %184 = tpu.dynamic_rotate %183 by %c16_i32_101 dim 2 : vector<4x8x128xf32>, i32 -> vector<4x8x128xf32>
    %cst_102 = arith.constant 0.000000e+00 : f32
    %185 = vector.broadcast %cst_102 : f32 to vector<4x8x128xf32>
    %186 = arith.select %38, %185, %184 : vector<4x8x128xi1>, vector<4x8x128xf32>
    %c0_103 = arith.constant 0 : index
    %c9 = arith.constant 9 : index
    %c0_104 = arith.constant 0 : index
    %187 = vector.load %arg7[%c0_103, %c9, %c0_104] : memref<2x27x128xf32, #tpu.memory_space<vmem>>, vector<1x1x128xf32>
    %188 = vector.shape_cast %187 : vector<1x1x128xf32> to vector<1x128xf32>
    %189 = vector.shape_cast %188 : vector<1x128xf32> to vector<1x1x128xf32>
    %190 = vector.broadcast %189 : vector<1x1x128xf32> to vector<4x8x128xf32>
    %191 = arith.mulf %190, %186 : vector<4x8x128xf32>
    %192 = arith.addf %173, %191 : vector<4x8x128xf32>
    %c1_105 = arith.constant 1 : index
    %c9_106 = arith.constant 9 : index
    %c0_107 = arith.constant 0 : index
    %193 = vector.load %arg7[%c1_105, %c9_106, %c0_107] : memref<2x27x128xf32, #tpu.memory_space<vmem>>, vector<1x1x128xf32>
    %194 = vector.shape_cast %193 : vector<1x1x128xf32> to vector<1x128xf32>
    %195 = vector.shape_cast %194 : vector<1x128xf32> to vector<1x1x128xf32>
    %196 = vector.broadcast %195 : vector<1x1x128xf32> to vector<4x8x128xf32>
    %197 = arith.mulf %196, %186 : vector<4x8x128xf32>
    %198 = arith.addf %179, %197 : vector<4x8x128xf32>
    %c0_108 = arith.constant 0 : index
    %c10 = arith.constant 10 : index
    %c0_109 = arith.constant 0 : index
    %199 = vector.load %arg7[%c0_108, %c10, %c0_109] : memref<2x27x128xf32, #tpu.memory_space<vmem>>, vector<1x1x128xf32>
    %200 = vector.shape_cast %199 : vector<1x1x128xf32> to vector<1x128xf32>
    %201 = vector.shape_cast %200 : vector<1x128xf32> to vector<1x1x128xf32>
    %202 = vector.broadcast %201 : vector<1x1x128xf32> to vector<4x8x128xf32>
    %203 = arith.mulf %202, %183 : vector<4x8x128xf32>
    %204 = arith.addf %192, %203 : vector<4x8x128xf32>
    %c1_110 = arith.constant 1 : index
    %c10_111 = arith.constant 10 : index
    %c0_112 = arith.constant 0 : index
    %205 = vector.load %arg7[%c1_110, %c10_111, %c0_112] : memref<2x27x128xf32, #tpu.memory_space<vmem>>, vector<1x1x128xf32>
    %206 = vector.shape_cast %205 : vector<1x1x128xf32> to vector<1x128xf32>
    %207 = vector.shape_cast %206 : vector<1x128xf32> to vector<1x1x128xf32>
    %208 = vector.broadcast %207 : vector<1x1x128xf32> to vector<4x8x128xf32>
    %209 = arith.mulf %208, %183 : vector<4x8x128xf32>
    %210 = arith.addf %198, %209 : vector<4x8x128xf32>
    %c112_i32_113 = arith.constant 112 : i32
    %211 = tpu.dynamic_rotate %183 by %c112_i32_113 dim 2 : vector<4x8x128xf32>, i32 -> vector<4x8x128xf32>
    %cst_114 = arith.constant 0.000000e+00 : f32
    %212 = vector.broadcast %cst_114 : f32 to vector<4x8x128xf32>
    %213 = arith.select %40, %212, %211 : vector<4x8x128xi1>, vector<4x8x128xf32>
    %c0_115 = arith.constant 0 : index
    %c11 = arith.constant 11 : index
    %c0_116 = arith.constant 0 : index
    %214 = vector.load %arg7[%c0_115, %c11, %c0_116] : memref<2x27x128xf32, #tpu.memory_space<vmem>>, vector<1x1x128xf32>
    %215 = vector.shape_cast %214 : vector<1x1x128xf32> to vector<1x128xf32>
    %216 = vector.shape_cast %215 : vector<1x128xf32> to vector<1x1x128xf32>
    %217 = vector.broadcast %216 : vector<1x1x128xf32> to vector<4x8x128xf32>
    %218 = arith.mulf %217, %213 : vector<4x8x128xf32>
    %219 = arith.addf %204, %218 : vector<4x8x128xf32>
    %c1_117 = arith.constant 1 : index
    %c11_118 = arith.constant 11 : index
    %c0_119 = arith.constant 0 : index
    %220 = vector.load %arg7[%c1_117, %c11_118, %c0_119] : memref<2x27x128xf32, #tpu.memory_space<vmem>>, vector<1x1x128xf32>
    %221 = vector.shape_cast %220 : vector<1x1x128xf32> to vector<1x128xf32>
    %222 = vector.shape_cast %221 : vector<1x128xf32> to vector<1x1x128xf32>
    %223 = vector.broadcast %222 : vector<1x1x128xf32> to vector<4x8x128xf32>
    %224 = arith.mulf %223, %213 : vector<4x8x128xf32>
    %225 = arith.addf %210, %224 : vector<4x8x128xf32>
    %c16_i32_120 = arith.constant 16 : i32
    %226 = tpu.dynamic_rotate %180 by %c16_i32_120 dim 2 : vector<4x8x128xf32>, i32 -> vector<4x8x128xf32>
    %cst_121 = arith.constant 0.000000e+00 : f32
    %227 = vector.broadcast %cst_121 : f32 to vector<4x8x128xf32>
    %228 = arith.select %38, %227, %226 : vector<4x8x128xi1>, vector<4x8x128xf32>
    %c0_122 = arith.constant 0 : index
    %c12 = arith.constant 12 : index
    %c0_123 = arith.constant 0 : index
    %229 = vector.load %arg7[%c0_122, %c12, %c0_123] : memref<2x27x128xf32, #tpu.memory_space<vmem>>, vector<1x1x128xf32>
    %230 = vector.shape_cast %229 : vector<1x1x128xf32> to vector<1x128xf32>
    %231 = vector.shape_cast %230 : vector<1x128xf32> to vector<1x1x128xf32>
    %232 = vector.broadcast %231 : vector<1x1x128xf32> to vector<4x8x128xf32>
    %233 = arith.mulf %232, %228 : vector<4x8x128xf32>
    %234 = arith.addf %219, %233 : vector<4x8x128xf32>
    %c1_124 = arith.constant 1 : index
    %c12_125 = arith.constant 12 : index
    %c0_126 = arith.constant 0 : index
    %235 = vector.load %arg7[%c1_124, %c12_125, %c0_126] : memref<2x27x128xf32, #tpu.memory_space<vmem>>, vector<1x1x128xf32>
    %236 = vector.shape_cast %235 : vector<1x1x128xf32> to vector<1x128xf32>
    %237 = vector.shape_cast %236 : vector<1x128xf32> to vector<1x1x128xf32>
    %238 = vector.broadcast %237 : vector<1x1x128xf32> to vector<4x8x128xf32>
    %239 = arith.mulf %238, %228 : vector<4x8x128xf32>
    %240 = arith.addf %225, %239 : vector<4x8x128xf32>
    %c0_127 = arith.constant 0 : index
    %c13 = arith.constant 13 : index
    %c0_128 = arith.constant 0 : index
    %241 = vector.load %arg7[%c0_127, %c13, %c0_128] : memref<2x27x128xf32, #tpu.memory_space<vmem>>, vector<1x1x128xf32>
    %242 = vector.shape_cast %241 : vector<1x1x128xf32> to vector<1x128xf32>
    %243 = vector.shape_cast %242 : vector<1x128xf32> to vector<1x1x128xf32>
    %244 = vector.broadcast %243 : vector<1x1x128xf32> to vector<4x8x128xf32>
    %245 = arith.mulf %244, %180 : vector<4x8x128xf32>
    %246 = arith.addf %234, %245 : vector<4x8x128xf32>
    %c1_129 = arith.constant 1 : index
    %c13_130 = arith.constant 13 : index
    %c0_131 = arith.constant 0 : index
    %247 = vector.load %arg7[%c1_129, %c13_130, %c0_131] : memref<2x27x128xf32, #tpu.memory_space<vmem>>, vector<1x1x128xf32>
    %248 = vector.shape_cast %247 : vector<1x1x128xf32> to vector<1x128xf32>
    %249 = vector.shape_cast %248 : vector<1x128xf32> to vector<1x1x128xf32>
    %250 = vector.broadcast %249 : vector<1x1x128xf32> to vector<4x8x128xf32>
    %251 = arith.mulf %250, %180 : vector<4x8x128xf32>
    %252 = arith.addf %240, %251 : vector<4x8x128xf32>
    %c112_i32_132 = arith.constant 112 : i32
    %253 = tpu.dynamic_rotate %180 by %c112_i32_132 dim 2 : vector<4x8x128xf32>, i32 -> vector<4x8x128xf32>
    %cst_133 = arith.constant 0.000000e+00 : f32
    %254 = vector.broadcast %cst_133 : f32 to vector<4x8x128xf32>
    %255 = arith.select %40, %254, %253 : vector<4x8x128xi1>, vector<4x8x128xf32>
    %c0_134 = arith.constant 0 : index
    %c14 = arith.constant 14 : index
    %c0_135 = arith.constant 0 : index
    %256 = vector.load %arg7[%c0_134, %c14, %c0_135] : memref<2x27x128xf32, #tpu.memory_space<vmem>>, vector<1x1x128xf32>
    %257 = vector.shape_cast %256 : vector<1x1x128xf32> to vector<1x128xf32>
    %258 = vector.shape_cast %257 : vector<1x128xf32> to vector<1x1x128xf32>
    %259 = vector.broadcast %258 : vector<1x1x128xf32> to vector<4x8x128xf32>
    %260 = arith.mulf %259, %255 : vector<4x8x128xf32>
    %261 = arith.addf %246, %260 : vector<4x8x128xf32>
    %c1_136 = arith.constant 1 : index
    %c14_137 = arith.constant 14 : index
    %c0_138 = arith.constant 0 : index
    %262 = vector.load %arg7[%c1_136, %c14_137, %c0_138] : memref<2x27x128xf32, #tpu.memory_space<vmem>>, vector<1x1x128xf32>
    %263 = vector.shape_cast %262 : vector<1x1x128xf32> to vector<1x128xf32>
    %264 = vector.shape_cast %263 : vector<1x128xf32> to vector<1x1x128xf32>
    %265 = vector.broadcast %264 : vector<1x1x128xf32> to vector<4x8x128xf32>
    %266 = arith.mulf %265, %255 : vector<4x8x128xf32>
    %267 = arith.addf %252, %266 : vector<4x8x128xf32>
    %c7_i32_139 = arith.constant 7 : i32
    %268 = tpu.dynamic_rotate %180 by %c7_i32_139 dim 1 : vector<4x8x128xf32>, i32 -> vector<4x8x128xf32>
    %cst_140 = arith.constant 0.000000e+00 : f32
    %269 = vector.broadcast %cst_140 : f32 to vector<4x8x128xf32>
    %270 = arith.select %36, %269, %268 : vector<4x8x128xi1>, vector<4x8x128xf32>
    %c16_i32_141 = arith.constant 16 : i32
    %271 = tpu.dynamic_rotate %270 by %c16_i32_141 dim 2 : vector<4x8x128xf32>, i32 -> vector<4x8x128xf32>
    %cst_142 = arith.constant 0.000000e+00 : f32
    %272 = vector.broadcast %cst_142 : f32 to vector<4x8x128xf32>
    %273 = arith.select %38, %272, %271 : vector<4x8x128xi1>, vector<4x8x128xf32>
    %c0_143 = arith.constant 0 : index
    %c15 = arith.constant 15 : index
    %c0_144 = arith.constant 0 : index
    %274 = vector.load %arg7[%c0_143, %c15, %c0_144] : memref<2x27x128xf32, #tpu.memory_space<vmem>>, vector<1x1x128xf32>
    %275 = vector.shape_cast %274 : vector<1x1x128xf32> to vector<1x128xf32>
    %276 = vector.shape_cast %275 : vector<1x128xf32> to vector<1x1x128xf32>
    %277 = vector.broadcast %276 : vector<1x1x128xf32> to vector<4x8x128xf32>
    %278 = arith.mulf %277, %273 : vector<4x8x128xf32>
    %279 = arith.addf %261, %278 : vector<4x8x128xf32>
    %c1_145 = arith.constant 1 : index
    %c15_146 = arith.constant 15 : index
    %c0_147 = arith.constant 0 : index
    %280 = vector.load %arg7[%c1_145, %c15_146, %c0_147] : memref<2x27x128xf32, #tpu.memory_space<vmem>>, vector<1x1x128xf32>
    %281 = vector.shape_cast %280 : vector<1x1x128xf32> to vector<1x128xf32>
    %282 = vector.shape_cast %281 : vector<1x128xf32> to vector<1x1x128xf32>
    %283 = vector.broadcast %282 : vector<1x1x128xf32> to vector<4x8x128xf32>
    %284 = arith.mulf %283, %273 : vector<4x8x128xf32>
    %285 = arith.addf %267, %284 : vector<4x8x128xf32>
    %c0_148 = arith.constant 0 : index
    %c16 = arith.constant 16 : index
    %c0_149 = arith.constant 0 : index
    %286 = vector.load %arg7[%c0_148, %c16, %c0_149] : memref<2x27x128xf32, #tpu.memory_space<vmem>>, vector<1x1x128xf32>
    %287 = vector.shape_cast %286 : vector<1x1x128xf32> to vector<1x128xf32>
    %288 = vector.shape_cast %287 : vector<1x128xf32> to vector<1x1x128xf32>
    %289 = vector.broadcast %288 : vector<1x1x128xf32> to vector<4x8x128xf32>
    %290 = arith.mulf %289, %270 : vector<4x8x128xf32>
    %291 = arith.addf %279, %290 : vector<4x8x128xf32>
    %c1_150 = arith.constant 1 : index
    %c16_151 = arith.constant 16 : index
    %c0_152 = arith.constant 0 : index
    %292 = vector.load %arg7[%c1_150, %c16_151, %c0_152] : memref<2x27x128xf32, #tpu.memory_space<vmem>>, vector<1x1x128xf32>
    %293 = vector.shape_cast %292 : vector<1x1x128xf32> to vector<1x128xf32>
    %294 = vector.shape_cast %293 : vector<1x128xf32> to vector<1x1x128xf32>
    %295 = vector.broadcast %294 : vector<1x1x128xf32> to vector<4x8x128xf32>
    %296 = arith.mulf %295, %270 : vector<4x8x128xf32>
    %297 = arith.addf %285, %296 : vector<4x8x128xf32>
    %c112_i32_153 = arith.constant 112 : i32
    %298 = tpu.dynamic_rotate %270 by %c112_i32_153 dim 2 : vector<4x8x128xf32>, i32 -> vector<4x8x128xf32>
    %cst_154 = arith.constant 0.000000e+00 : f32
    %299 = vector.broadcast %cst_154 : f32 to vector<4x8x128xf32>
    %300 = arith.select %40, %299, %298 : vector<4x8x128xi1>, vector<4x8x128xf32>
    %c0_155 = arith.constant 0 : index
    %c17 = arith.constant 17 : index
    %c0_156 = arith.constant 0 : index
    %301 = vector.load %arg7[%c0_155, %c17, %c0_156] : memref<2x27x128xf32, #tpu.memory_space<vmem>>, vector<1x1x128xf32>
    %302 = vector.shape_cast %301 : vector<1x1x128xf32> to vector<1x128xf32>
    %303 = vector.shape_cast %302 : vector<1x128xf32> to vector<1x1x128xf32>
    %304 = vector.broadcast %303 : vector<1x1x128xf32> to vector<4x8x128xf32>
    %305 = arith.mulf %304, %300 : vector<4x8x128xf32>
    %306 = arith.addf %291, %305 : vector<4x8x128xf32>
    %c1_157 = arith.constant 1 : index
    %c17_158 = arith.constant 17 : index
    %c0_159 = arith.constant 0 : index
    %307 = vector.load %arg7[%c1_157, %c17_158, %c0_159] : memref<2x27x128xf32, #tpu.memory_space<vmem>>, vector<1x1x128xf32>
    %308 = vector.shape_cast %307 : vector<1x1x128xf32> to vector<1x128xf32>
    %309 = vector.shape_cast %308 : vector<1x128xf32> to vector<1x1x128xf32>
    %310 = vector.broadcast %309 : vector<1x1x128xf32> to vector<4x8x128xf32>
    %311 = arith.mulf %310, %300 : vector<4x8x128xf32>
    %312 = arith.addf %297, %311 : vector<4x8x128xf32>
    %c2_160 = arith.constant 2 : index
    %c0_161 = arith.constant 0 : index
    %c0_162 = arith.constant 0 : index
    %313 = vector.load %arg11[%c2_160, %c0_161, %c0_162] : memref<6x8x128xf32, #tpu.memory_space<vmem>>, vector<4x8x128xf32>
    %c1_i32_163 = arith.constant 1 : i32
    %314 = tpu.dynamic_rotate %313 by %c1_i32_163 dim 1 : vector<4x8x128xf32>, i32 -> vector<4x8x128xf32>
    %cst_164 = arith.constant 0.000000e+00 : f32
    %315 = vector.broadcast %cst_164 : f32 to vector<4x8x128xf32>
    %316 = arith.select %34, %315, %314 : vector<4x8x128xi1>, vector<4x8x128xf32>
    %c16_i32_165 = arith.constant 16 : i32
    %317 = tpu.dynamic_rotate %316 by %c16_i32_165 dim 2 : vector<4x8x128xf32>, i32 -> vector<4x8x128xf32>
    %cst_166 = arith.constant 0.000000e+00 : f32
    %318 = vector.broadcast %cst_166 : f32 to vector<4x8x128xf32>
    %319 = arith.select %38, %318, %317 : vector<4x8x128xi1>, vector<4x8x128xf32>
    %c0_167 = arith.constant 0 : index
    %c18 = arith.constant 18 : index
    %c0_168 = arith.constant 0 : index
    %320 = vector.load %arg7[%c0_167, %c18, %c0_168] : memref<2x27x128xf32, #tpu.memory_space<vmem>>, vector<1x1x128xf32>
    %321 = vector.shape_cast %320 : vector<1x1x128xf32> to vector<1x128xf32>
    %322 = vector.shape_cast %321 : vector<1x128xf32> to vector<1x1x128xf32>
    %323 = vector.broadcast %322 : vector<1x1x128xf32> to vector<4x8x128xf32>
    %324 = arith.mulf %323, %319 : vector<4x8x128xf32>
    %325 = arith.addf %306, %324 : vector<4x8x128xf32>
    %c1_169 = arith.constant 1 : index
    %c18_170 = arith.constant 18 : index
    %c0_171 = arith.constant 0 : index
    %326 = vector.load %arg7[%c1_169, %c18_170, %c0_171] : memref<2x27x128xf32, #tpu.memory_space<vmem>>, vector<1x1x128xf32>
    %327 = vector.shape_cast %326 : vector<1x1x128xf32> to vector<1x128xf32>
    %328 = vector.shape_cast %327 : vector<1x128xf32> to vector<1x1x128xf32>
    %329 = vector.broadcast %328 : vector<1x1x128xf32> to vector<4x8x128xf32>
    %330 = arith.mulf %329, %319 : vector<4x8x128xf32>
    %331 = arith.addf %312, %330 : vector<4x8x128xf32>
    %c0_172 = arith.constant 0 : index
    %c19 = arith.constant 19 : index
    %c0_173 = arith.constant 0 : index
    %332 = vector.load %arg7[%c0_172, %c19, %c0_173] : memref<2x27x128xf32, #tpu.memory_space<vmem>>, vector<1x1x128xf32>
    %333 = vector.shape_cast %332 : vector<1x1x128xf32> to vector<1x128xf32>
    %334 = vector.shape_cast %333 : vector<1x128xf32> to vector<1x1x128xf32>
    %335 = vector.broadcast %334 : vector<1x1x128xf32> to vector<4x8x128xf32>
    %336 = arith.mulf %335, %316 : vector<4x8x128xf32>
    %337 = arith.addf %325, %336 : vector<4x8x128xf32>
    %c1_174 = arith.constant 1 : index
    %c19_175 = arith.constant 19 : index
    %c0_176 = arith.constant 0 : index
    %338 = vector.load %arg7[%c1_174, %c19_175, %c0_176] : memref<2x27x128xf32, #tpu.memory_space<vmem>>, vector<1x1x128xf32>
    %339 = vector.shape_cast %338 : vector<1x1x128xf32> to vector<1x128xf32>
    %340 = vector.shape_cast %339 : vector<1x128xf32> to vector<1x1x128xf32>
    %341 = vector.broadcast %340 : vector<1x1x128xf32> to vector<4x8x128xf32>
    %342 = arith.mulf %341, %316 : vector<4x8x128xf32>
    %343 = arith.addf %331, %342 : vector<4x8x128xf32>
    %c112_i32_177 = arith.constant 112 : i32
    %344 = tpu.dynamic_rotate %316 by %c112_i32_177 dim 2 : vector<4x8x128xf32>, i32 -> vector<4x8x128xf32>
    %cst_178 = arith.constant 0.000000e+00 : f32
    %345 = vector.broadcast %cst_178 : f32 to vector<4x8x128xf32>
    %346 = arith.select %40, %345, %344 : vector<4x8x128xi1>, vector<4x8x128xf32>
    %c0_179 = arith.constant 0 : index
    %c20 = arith.constant 20 : index
    %c0_180 = arith.constant 0 : index
    %347 = vector.load %arg7[%c0_179, %c20, %c0_180] : memref<2x27x128xf32, #tpu.memory_space<vmem>>, vector<1x1x128xf32>
    %348 = vector.shape_cast %347 : vector<1x1x128xf32> to vector<1x128xf32>
    %349 = vector.shape_cast %348 : vector<1x128xf32> to vector<1x1x128xf32>
    %350 = vector.broadcast %349 : vector<1x1x128xf32> to vector<4x8x128xf32>
    %351 = arith.mulf %350, %346 : vector<4x8x128xf32>
    %352 = arith.addf %337, %351 : vector<4x8x128xf32>
    %c1_181 = arith.constant 1 : index
    %c20_182 = arith.constant 20 : index
    %c0_183 = arith.constant 0 : index
    %353 = vector.load %arg7[%c1_181, %c20_182, %c0_183] : memref<2x27x128xf32, #tpu.memory_space<vmem>>, vector<1x1x128xf32>
    %354 = vector.shape_cast %353 : vector<1x1x128xf32> to vector<1x128xf32>
    %355 = vector.shape_cast %354 : vector<1x128xf32> to vector<1x1x128xf32>
    %356 = vector.broadcast %355 : vector<1x1x128xf32> to vector<4x8x128xf32>
    %357 = arith.mulf %356, %346 : vector<4x8x128xf32>
    %358 = arith.addf %343, %357 : vector<4x8x128xf32>
    %c16_i32_184 = arith.constant 16 : i32
    %359 = tpu.dynamic_rotate %313 by %c16_i32_184 dim 2 : vector<4x8x128xf32>, i32 -> vector<4x8x128xf32>
    %cst_185 = arith.constant 0.000000e+00 : f32
    %360 = vector.broadcast %cst_185 : f32 to vector<4x8x128xf32>
    %361 = arith.select %38, %360, %359 : vector<4x8x128xi1>, vector<4x8x128xf32>
    %c0_186 = arith.constant 0 : index
    %c21 = arith.constant 21 : index
    %c0_187 = arith.constant 0 : index
    %362 = vector.load %arg7[%c0_186, %c21, %c0_187] : memref<2x27x128xf32, #tpu.memory_space<vmem>>, vector<1x1x128xf32>
    %363 = vector.shape_cast %362 : vector<1x1x128xf32> to vector<1x128xf32>
    %364 = vector.shape_cast %363 : vector<1x128xf32> to vector<1x1x128xf32>
    %365 = vector.broadcast %364 : vector<1x1x128xf32> to vector<4x8x128xf32>
    %366 = arith.mulf %365, %361 : vector<4x8x128xf32>
    %367 = arith.addf %352, %366 : vector<4x8x128xf32>
    %c1_188 = arith.constant 1 : index
    %c21_189 = arith.constant 21 : index
    %c0_190 = arith.constant 0 : index
    %368 = vector.load %arg7[%c1_188, %c21_189, %c0_190] : memref<2x27x128xf32, #tpu.memory_space<vmem>>, vector<1x1x128xf32>
    %369 = vector.shape_cast %368 : vector<1x1x128xf32> to vector<1x128xf32>
    %370 = vector.shape_cast %369 : vector<1x128xf32> to vector<1x1x128xf32>
    %371 = vector.broadcast %370 : vector<1x1x128xf32> to vector<4x8x128xf32>
    %372 = arith.mulf %371, %361 : vector<4x8x128xf32>
    %373 = arith.addf %358, %372 : vector<4x8x128xf32>
    %c0_191 = arith.constant 0 : index
    %c22 = arith.constant 22 : index
    %c0_192 = arith.constant 0 : index
    %374 = vector.load %arg7[%c0_191, %c22, %c0_192] : memref<2x27x128xf32, #tpu.memory_space<vmem>>, vector<1x1x128xf32>
    %375 = vector.shape_cast %374 : vector<1x1x128xf32> to vector<1x128xf32>
    %376 = vector.shape_cast %375 : vector<1x128xf32> to vector<1x1x128xf32>
    %377 = vector.broadcast %376 : vector<1x1x128xf32> to vector<4x8x128xf32>
    %378 = arith.mulf %377, %313 : vector<4x8x128xf32>
    %379 = arith.addf %367, %378 : vector<4x8x128xf32>
    %c1_193 = arith.constant 1 : index
    %c22_194 = arith.constant 22 : index
    %c0_195 = arith.constant 0 : index
    %380 = vector.load %arg7[%c1_193, %c22_194, %c0_195] : memref<2x27x128xf32, #tpu.memory_space<vmem>>, vector<1x1x128xf32>
    %381 = vector.shape_cast %380 : vector<1x1x128xf32> to vector<1x128xf32>
    %382 = vector.shape_cast %381 : vector<1x128xf32> to vector<1x1x128xf32>
    %383 = vector.broadcast %382 : vector<1x1x128xf32> to vector<4x8x128xf32>
    %384 = arith.mulf %383, %313 : vector<4x8x128xf32>
    %385 = arith.addf %373, %384 : vector<4x8x128xf32>
    %c112_i32_196 = arith.constant 112 : i32
    %386 = tpu.dynamic_rotate %313 by %c112_i32_196 dim 2 : vector<4x8x128xf32>, i32 -> vector<4x8x128xf32>
    %cst_197 = arith.constant 0.000000e+00 : f32
    %387 = vector.broadcast %cst_197 : f32 to vector<4x8x128xf32>
    %388 = arith.select %40, %387, %386 : vector<4x8x128xi1>, vector<4x8x128xf32>
    %c0_198 = arith.constant 0 : index
    %c23 = arith.constant 23 : index
    %c0_199 = arith.constant 0 : index
    %389 = vector.load %arg7[%c0_198, %c23, %c0_199] : memref<2x27x128xf32, #tpu.memory_space<vmem>>, vector<1x1x128xf32>
    %390 = vector.shape_cast %389 : vector<1x1x128xf32> to vector<1x128xf32>
    %391 = vector.shape_cast %390 : vector<1x128xf32> to vector<1x1x128xf32>
    %392 = vector.broadcast %391 : vector<1x1x128xf32> to vector<4x8x128xf32>
    %393 = arith.mulf %392, %388 : vector<4x8x128xf32>
    %394 = arith.addf %379, %393 : vector<4x8x128xf32>
    %c1_200 = arith.constant 1 : index
    %c23_201 = arith.constant 23 : index
    %c0_202 = arith.constant 0 : index
    %395 = vector.load %arg7[%c1_200, %c23_201, %c0_202] : memref<2x27x128xf32, #tpu.memory_space<vmem>>, vector<1x1x128xf32>
    %396 = vector.shape_cast %395 : vector<1x1x128xf32> to vector<1x128xf32>
    %397 = vector.shape_cast %396 : vector<1x128xf32> to vector<1x1x128xf32>
    %398 = vector.broadcast %397 : vector<1x1x128xf32> to vector<4x8x128xf32>
    %399 = arith.mulf %398, %388 : vector<4x8x128xf32>
    %400 = arith.addf %385, %399 : vector<4x8x128xf32>
    %c7_i32_203 = arith.constant 7 : i32
    %401 = tpu.dynamic_rotate %313 by %c7_i32_203 dim 1 : vector<4x8x128xf32>, i32 -> vector<4x8x128xf32>
    %cst_204 = arith.constant 0.000000e+00 : f32
    %402 = vector.broadcast %cst_204 : f32 to vector<4x8x128xf32>
    %403 = arith.select %36, %402, %401 : vector<4x8x128xi1>, vector<4x8x128xf32>
    %c16_i32_205 = arith.constant 16 : i32
    %404 = tpu.dynamic_rotate %403 by %c16_i32_205 dim 2 : vector<4x8x128xf32>, i32 -> vector<4x8x128xf32>
    %cst_206 = arith.constant 0.000000e+00 : f32
    %405 = vector.broadcast %cst_206 : f32 to vector<4x8x128xf32>
    %406 = arith.select %38, %405, %404 : vector<4x8x128xi1>, vector<4x8x128xf32>
    %c0_207 = arith.constant 0 : index
    %c24 = arith.constant 24 : index
    %c0_208 = arith.constant 0 : index
    %407 = vector.load %arg7[%c0_207, %c24, %c0_208] : memref<2x27x128xf32, #tpu.memory_space<vmem>>, vector<1x1x128xf32>
    %408 = vector.shape_cast %407 : vector<1x1x128xf32> to vector<1x128xf32>
    %409 = vector.shape_cast %408 : vector<1x128xf32> to vector<1x1x128xf32>
    %410 = vector.broadcast %409 : vector<1x1x128xf32> to vector<4x8x128xf32>
    %411 = arith.mulf %410, %406 : vector<4x8x128xf32>
    %412 = arith.addf %394, %411 : vector<4x8x128xf32>
    %c1_209 = arith.constant 1 : index
    %c24_210 = arith.constant 24 : index
    %c0_211 = arith.constant 0 : index
    %413 = vector.load %arg7[%c1_209, %c24_210, %c0_211] : memref<2x27x128xf32, #tpu.memory_space<vmem>>, vector<1x1x128xf32>
    %414 = vector.shape_cast %413 : vector<1x1x128xf32> to vector<1x128xf32>
    %415 = vector.shape_cast %414 : vector<1x128xf32> to vector<1x1x128xf32>
    %416 = vector.broadcast %415 : vector<1x1x128xf32> to vector<4x8x128xf32>
    %417 = arith.mulf %416, %406 : vector<4x8x128xf32>
    %418 = arith.addf %400, %417 : vector<4x8x128xf32>
    %c0_212 = arith.constant 0 : index
    %c25 = arith.constant 25 : index
    %c0_213 = arith.constant 0 : index
    %419 = vector.load %arg7[%c0_212, %c25, %c0_213] : memref<2x27x128xf32, #tpu.memory_space<vmem>>, vector<1x1x128xf32>
    %420 = vector.shape_cast %419 : vector<1x1x128xf32> to vector<1x128xf32>
    %421 = vector.shape_cast %420 : vector<1x128xf32> to vector<1x1x128xf32>
    %422 = vector.broadcast %421 : vector<1x1x128xf32> to vector<4x8x128xf32>
    %423 = arith.mulf %422, %403 : vector<4x8x128xf32>
    %424 = arith.addf %412, %423 : vector<4x8x128xf32>
    %c1_214 = arith.constant 1 : index
    %c25_215 = arith.constant 25 : index
    %c0_216 = arith.constant 0 : index
    %425 = vector.load %arg7[%c1_214, %c25_215, %c0_216] : memref<2x27x128xf32, #tpu.memory_space<vmem>>, vector<1x1x128xf32>
    %426 = vector.shape_cast %425 : vector<1x1x128xf32> to vector<1x128xf32>
    %427 = vector.shape_cast %426 : vector<1x128xf32> to vector<1x1x128xf32>
    %428 = vector.broadcast %427 : vector<1x1x128xf32> to vector<4x8x128xf32>
    %429 = arith.mulf %428, %403 : vector<4x8x128xf32>
    %430 = arith.addf %418, %429 : vector<4x8x128xf32>
    %c112_i32_217 = arith.constant 112 : i32
    %431 = tpu.dynamic_rotate %403 by %c112_i32_217 dim 2 : vector<4x8x128xf32>, i32 -> vector<4x8x128xf32>
    %cst_218 = arith.constant 0.000000e+00 : f32
    %432 = vector.broadcast %cst_218 : f32 to vector<4x8x128xf32>
    %433 = arith.select %40, %432, %431 : vector<4x8x128xi1>, vector<4x8x128xf32>
    %c0_219 = arith.constant 0 : index
    %c26 = arith.constant 26 : index
    %c0_220 = arith.constant 0 : index
    %434 = vector.load %arg7[%c0_219, %c26, %c0_220] : memref<2x27x128xf32, #tpu.memory_space<vmem>>, vector<1x1x128xf32>
    %435 = vector.shape_cast %434 : vector<1x1x128xf32> to vector<1x128xf32>
    %436 = vector.shape_cast %435 : vector<1x128xf32> to vector<1x1x128xf32>
    %437 = vector.broadcast %436 : vector<1x1x128xf32> to vector<4x8x128xf32>
    %438 = arith.mulf %437, %433 : vector<4x8x128xf32>
    %439 = arith.addf %424, %438 : vector<4x8x128xf32>
    %c1_221 = arith.constant 1 : index
    %c26_222 = arith.constant 26 : index
    %c0_223 = arith.constant 0 : index
    %440 = vector.load %arg7[%c1_221, %c26_222, %c0_223] : memref<2x27x128xf32, #tpu.memory_space<vmem>>, vector<1x1x128xf32>
    %441 = vector.shape_cast %440 : vector<1x1x128xf32> to vector<1x128xf32>
    %442 = vector.shape_cast %441 : vector<1x128xf32> to vector<1x1x128xf32>
    %443 = vector.broadcast %442 : vector<1x1x128xf32> to vector<4x8x128xf32>
    %444 = arith.mulf %443, %433 : vector<4x8x128xf32>
    %445 = arith.addf %430, %444 : vector<4x8x128xf32>
    %c0_224 = arith.constant 0 : index
    %c0_225 = arith.constant 0 : index
    %446 = vector.load %arg8[%c0_224, %c0_225] : memref<4x128xf32, #tpu.memory_space<vmem>>, vector<1x128xf32>
    %447 = vector.shape_cast %446 : vector<1x128xf32> to vector<1x1x128xf32>
    %448 = vector.broadcast %447 : vector<1x1x128xf32> to vector<4x8x128xf32>
    %449 = arith.mulf %439, %448 : vector<4x8x128xf32>
    %c1_226 = arith.constant 1 : index
    %c0_227 = arith.constant 0 : index
    %450 = vector.load %arg8[%c1_226, %c0_227] : memref<4x128xf32, #tpu.memory_space<vmem>>, vector<1x128xf32>
    %451 = vector.shape_cast %450 : vector<1x128xf32> to vector<1x1x128xf32>
    %452 = vector.broadcast %451 : vector<1x1x128xf32> to vector<4x8x128xf32>
    %453 = arith.addf %449, %452 : vector<4x8x128xf32>
    %cst_228 = arith.constant 0.000000e+00 : f32
    %454 = vector.broadcast %cst_228 : f32 to vector<4x8x128xf32>
    %455 = arith.maximumf %453, %454 : vector<4x8x128xf32>
    %c2_229 = arith.constant 2 : index
    %c0_230 = arith.constant 0 : index
    %456 = vector.load %arg8[%c2_229, %c0_230] : memref<4x128xf32, #tpu.memory_space<vmem>>, vector<1x128xf32>
    %457 = vector.shape_cast %456 : vector<1x128xf32> to vector<1x1x128xf32>
    %458 = vector.broadcast %457 : vector<1x1x128xf32> to vector<4x8x128xf32>
    %459 = arith.mulf %445, %458 : vector<4x8x128xf32>
    %c3_231 = arith.constant 3 : index
    %c0_232 = arith.constant 0 : index
    %460 = vector.load %arg8[%c3_231, %c0_232] : memref<4x128xf32, #tpu.memory_space<vmem>>, vector<1x128xf32>
    %461 = vector.shape_cast %460 : vector<1x128xf32> to vector<1x1x128xf32>
    %462 = vector.broadcast %461 : vector<1x1x128xf32> to vector<4x8x128xf32>
    %463 = arith.addf %459, %462 : vector<4x8x128xf32>
    %cst_233 = arith.constant 0.000000e+00 : f32
    %464 = vector.broadcast %cst_233 : f32 to vector<4x8x128xf32>
    %465 = arith.maximumf %463, %464 : vector<4x8x128xf32>
    %466 = vector.shape_cast %1 : vector<32x128xf32> to vector<4x8x128xf32>
    %c1_i32_234 = arith.constant 1 : i32
    %467 = tpu.dynamic_rotate %455 by %c1_i32_234 dim 1 : vector<4x8x128xf32>, i32 -> vector<4x8x128xf32>
    %cst_235 = arith.constant 0.000000e+00 : f32
    %468 = vector.broadcast %cst_235 : f32 to vector<4x8x128xf32>
    %469 = arith.select %34, %468, %467 : vector<4x8x128xi1>, vector<4x8x128xf32>
    %c1_i32_236 = arith.constant 1 : i32
    %470 = tpu.dynamic_rotate %465 by %c1_i32_236 dim 1 : vector<4x8x128xf32>, i32 -> vector<4x8x128xf32>
    %cst_237 = arith.constant 0.000000e+00 : f32
    %471 = vector.broadcast %cst_237 : f32 to vector<4x8x128xf32>
    %472 = arith.select %34, %471, %470 : vector<4x8x128xi1>, vector<4x8x128xf32>
    %c0_238 = arith.constant 0 : index
    %c0_239 = arith.constant 0 : index
    %c0_240 = arith.constant 0 : index
    %473 = vector.load %arg9[%c0_238, %c0_239, %c0_240] : memref<2x9x128xf32, #tpu.memory_space<vmem>>, vector<1x1x128xf32>
    %474 = vector.shape_cast %473 : vector<1x1x128xf32> to vector<1x128xf32>
    %c16_i32_241 = arith.constant 16 : i32
    %475 = tpu.dynamic_rotate %469 by %c16_i32_241 dim 2 : vector<4x8x128xf32>, i32 -> vector<4x8x128xf32>
    %cst_242 = arith.constant 0.000000e+00 : f32
    %476 = vector.broadcast %cst_242 : f32 to vector<4x8x128xf32>
    %477 = arith.select %38, %476, %475 : vector<4x8x128xi1>, vector<4x8x128xf32>
    %478 = vector.shape_cast %474 : vector<1x128xf32> to vector<1x1x128xf32>
    %479 = vector.broadcast %478 : vector<1x1x128xf32> to vector<4x8x128xf32>
    %480 = arith.mulf %479, %477 : vector<4x8x128xf32>
    %481 = arith.addf %466, %480 : vector<4x8x128xf32>
    %c1_243 = arith.constant 1 : index
    %c0_244 = arith.constant 0 : index
    %c0_245 = arith.constant 0 : index
    %482 = vector.load %arg9[%c1_243, %c0_244, %c0_245] : memref<2x9x128xf32, #tpu.memory_space<vmem>>, vector<1x1x128xf32>
    %483 = vector.shape_cast %482 : vector<1x1x128xf32> to vector<1x128xf32>
    %c16_i32_246 = arith.constant 16 : i32
    %484 = tpu.dynamic_rotate %472 by %c16_i32_246 dim 2 : vector<4x8x128xf32>, i32 -> vector<4x8x128xf32>
    %cst_247 = arith.constant 0.000000e+00 : f32
    %485 = vector.broadcast %cst_247 : f32 to vector<4x8x128xf32>
    %486 = arith.select %38, %485, %484 : vector<4x8x128xi1>, vector<4x8x128xf32>
    %487 = vector.shape_cast %483 : vector<1x128xf32> to vector<1x1x128xf32>
    %488 = vector.broadcast %487 : vector<1x1x128xf32> to vector<4x8x128xf32>
    %489 = arith.mulf %488, %486 : vector<4x8x128xf32>
    %490 = arith.addf %481, %489 : vector<4x8x128xf32>
    %c0_248 = arith.constant 0 : index
    %c1_249 = arith.constant 1 : index
    %c0_250 = arith.constant 0 : index
    %491 = vector.load %arg9[%c0_248, %c1_249, %c0_250] : memref<2x9x128xf32, #tpu.memory_space<vmem>>, vector<1x1x128xf32>
    %492 = vector.shape_cast %491 : vector<1x1x128xf32> to vector<1x128xf32>
    %493 = vector.shape_cast %492 : vector<1x128xf32> to vector<1x1x128xf32>
    %494 = vector.broadcast %493 : vector<1x1x128xf32> to vector<4x8x128xf32>
    %495 = arith.mulf %494, %469 : vector<4x8x128xf32>
    %496 = arith.addf %490, %495 : vector<4x8x128xf32>
    %c1_251 = arith.constant 1 : index
    %c1_252 = arith.constant 1 : index
    %c0_253 = arith.constant 0 : index
    %497 = vector.load %arg9[%c1_251, %c1_252, %c0_253] : memref<2x9x128xf32, #tpu.memory_space<vmem>>, vector<1x1x128xf32>
    %498 = vector.shape_cast %497 : vector<1x1x128xf32> to vector<1x128xf32>
    %499 = vector.shape_cast %498 : vector<1x128xf32> to vector<1x1x128xf32>
    %500 = vector.broadcast %499 : vector<1x1x128xf32> to vector<4x8x128xf32>
    %501 = arith.mulf %500, %472 : vector<4x8x128xf32>
    %502 = arith.addf %496, %501 : vector<4x8x128xf32>
    %c0_254 = arith.constant 0 : index
    %c2_255 = arith.constant 2 : index
    %c0_256 = arith.constant 0 : index
    %503 = vector.load %arg9[%c0_254, %c2_255, %c0_256] : memref<2x9x128xf32, #tpu.memory_space<vmem>>, vector<1x1x128xf32>
    %504 = vector.shape_cast %503 : vector<1x1x128xf32> to vector<1x128xf32>
    %c112_i32_257 = arith.constant 112 : i32
    %505 = tpu.dynamic_rotate %469 by %c112_i32_257 dim 2 : vector<4x8x128xf32>, i32 -> vector<4x8x128xf32>
    %cst_258 = arith.constant 0.000000e+00 : f32
    %506 = vector.broadcast %cst_258 : f32 to vector<4x8x128xf32>
    %507 = arith.select %40, %506, %505 : vector<4x8x128xi1>, vector<4x8x128xf32>
    %508 = vector.shape_cast %504 : vector<1x128xf32> to vector<1x1x128xf32>
    %509 = vector.broadcast %508 : vector<1x1x128xf32> to vector<4x8x128xf32>
    %510 = arith.mulf %509, %507 : vector<4x8x128xf32>
    %511 = arith.addf %502, %510 : vector<4x8x128xf32>
    %c1_259 = arith.constant 1 : index
    %c2_260 = arith.constant 2 : index
    %c0_261 = arith.constant 0 : index
    %512 = vector.load %arg9[%c1_259, %c2_260, %c0_261] : memref<2x9x128xf32, #tpu.memory_space<vmem>>, vector<1x1x128xf32>
    %513 = vector.shape_cast %512 : vector<1x1x128xf32> to vector<1x128xf32>
    %c112_i32_262 = arith.constant 112 : i32
    %514 = tpu.dynamic_rotate %472 by %c112_i32_262 dim 2 : vector<4x8x128xf32>, i32 -> vector<4x8x128xf32>
    %cst_263 = arith.constant 0.000000e+00 : f32
    %515 = vector.broadcast %cst_263 : f32 to vector<4x8x128xf32>
    %516 = arith.select %40, %515, %514 : vector<4x8x128xi1>, vector<4x8x128xf32>
    %517 = vector.shape_cast %513 : vector<1x128xf32> to vector<1x1x128xf32>
    %518 = vector.broadcast %517 : vector<1x1x128xf32> to vector<4x8x128xf32>
    %519 = arith.mulf %518, %516 : vector<4x8x128xf32>
    %520 = arith.addf %511, %519 : vector<4x8x128xf32>
    %c0_264 = arith.constant 0 : index
    %c3_265 = arith.constant 3 : index
    %c0_266 = arith.constant 0 : index
    %521 = vector.load %arg9[%c0_264, %c3_265, %c0_266] : memref<2x9x128xf32, #tpu.memory_space<vmem>>, vector<1x1x128xf32>
    %522 = vector.shape_cast %521 : vector<1x1x128xf32> to vector<1x128xf32>
    %c16_i32_267 = arith.constant 16 : i32
    %523 = tpu.dynamic_rotate %455 by %c16_i32_267 dim 2 : vector<4x8x128xf32>, i32 -> vector<4x8x128xf32>
    %cst_268 = arith.constant 0.000000e+00 : f32
    %524 = vector.broadcast %cst_268 : f32 to vector<4x8x128xf32>
    %525 = arith.select %38, %524, %523 : vector<4x8x128xi1>, vector<4x8x128xf32>
    %526 = vector.shape_cast %522 : vector<1x128xf32> to vector<1x1x128xf32>
    %527 = vector.broadcast %526 : vector<1x1x128xf32> to vector<4x8x128xf32>
    %528 = arith.mulf %527, %525 : vector<4x8x128xf32>
    %529 = arith.addf %520, %528 : vector<4x8x128xf32>
    %c1_269 = arith.constant 1 : index
    %c3_270 = arith.constant 3 : index
    %c0_271 = arith.constant 0 : index
    %530 = vector.load %arg9[%c1_269, %c3_270, %c0_271] : memref<2x9x128xf32, #tpu.memory_space<vmem>>, vector<1x1x128xf32>
    %531 = vector.shape_cast %530 : vector<1x1x128xf32> to vector<1x128xf32>
    %c16_i32_272 = arith.constant 16 : i32
    %532 = tpu.dynamic_rotate %465 by %c16_i32_272 dim 2 : vector<4x8x128xf32>, i32 -> vector<4x8x128xf32>
    %cst_273 = arith.constant 0.000000e+00 : f32
    %533 = vector.broadcast %cst_273 : f32 to vector<4x8x128xf32>
    %534 = arith.select %38, %533, %532 : vector<4x8x128xi1>, vector<4x8x128xf32>
    %535 = vector.shape_cast %531 : vector<1x128xf32> to vector<1x1x128xf32>
    %536 = vector.broadcast %535 : vector<1x1x128xf32> to vector<4x8x128xf32>
    %537 = arith.mulf %536, %534 : vector<4x8x128xf32>
    %538 = arith.addf %529, %537 : vector<4x8x128xf32>
    %c0_274 = arith.constant 0 : index
    %c4_275 = arith.constant 4 : index
    %c0_276 = arith.constant 0 : index
    %539 = vector.load %arg9[%c0_274, %c4_275, %c0_276] : memref<2x9x128xf32, #tpu.memory_space<vmem>>, vector<1x1x128xf32>
    %540 = vector.shape_cast %539 : vector<1x1x128xf32> to vector<1x128xf32>
    %541 = vector.shape_cast %540 : vector<1x128xf32> to vector<1x1x128xf32>
    %542 = vector.broadcast %541 : vector<1x1x128xf32> to vector<4x8x128xf32>
    %543 = arith.mulf %542, %455 : vector<4x8x128xf32>
    %544 = arith.addf %538, %543 : vector<4x8x128xf32>
    %c1_277 = arith.constant 1 : index
    %c4_278 = arith.constant 4 : index
    %c0_279 = arith.constant 0 : index
    %545 = vector.load %arg9[%c1_277, %c4_278, %c0_279] : memref<2x9x128xf32, #tpu.memory_space<vmem>>, vector<1x1x128xf32>
    %546 = vector.shape_cast %545 : vector<1x1x128xf32> to vector<1x128xf32>
    %547 = vector.shape_cast %546 : vector<1x128xf32> to vector<1x1x128xf32>
    %548 = vector.broadcast %547 : vector<1x1x128xf32> to vector<4x8x128xf32>
    %549 = arith.mulf %548, %465 : vector<4x8x128xf32>
    %550 = arith.addf %544, %549 : vector<4x8x128xf32>
    %c0_280 = arith.constant 0 : index
    %c5_281 = arith.constant 5 : index
    %c0_282 = arith.constant 0 : index
    %551 = vector.load %arg9[%c0_280, %c5_281, %c0_282] : memref<2x9x128xf32, #tpu.memory_space<vmem>>, vector<1x1x128xf32>
    %552 = vector.shape_cast %551 : vector<1x1x128xf32> to vector<1x128xf32>
    %c112_i32_283 = arith.constant 112 : i32
    %553 = tpu.dynamic_rotate %455 by %c112_i32_283 dim 2 : vector<4x8x128xf32>, i32 -> vector<4x8x128xf32>
    %cst_284 = arith.constant 0.000000e+00 : f32
    %554 = vector.broadcast %cst_284 : f32 to vector<4x8x128xf32>
    %555 = arith.select %40, %554, %553 : vector<4x8x128xi1>, vector<4x8x128xf32>
    %556 = vector.shape_cast %552 : vector<1x128xf32> to vector<1x1x128xf32>
    %557 = vector.broadcast %556 : vector<1x1x128xf32> to vector<4x8x128xf32>
    %558 = arith.mulf %557, %555 : vector<4x8x128xf32>
    %559 = arith.addf %550, %558 : vector<4x8x128xf32>
    %c1_285 = arith.constant 1 : index
    %c5_286 = arith.constant 5 : index
    %c0_287 = arith.constant 0 : index
    %560 = vector.load %arg9[%c1_285, %c5_286, %c0_287] : memref<2x9x128xf32, #tpu.memory_space<vmem>>, vector<1x1x128xf32>
    %561 = vector.shape_cast %560 : vector<1x1x128xf32> to vector<1x128xf32>
    %c112_i32_288 = arith.constant 112 : i32
    %562 = tpu.dynamic_rotate %465 by %c112_i32_288 dim 2 : vector<4x8x128xf32>, i32 -> vector<4x8x128xf32>
    %cst_289 = arith.constant 0.000000e+00 : f32
    %563 = vector.broadcast %cst_289 : f32 to vector<4x8x128xf32>
    %564 = arith.select %40, %563, %562 : vector<4x8x128xi1>, vector<4x8x128xf32>
    %565 = vector.shape_cast %561 : vector<1x128xf32> to vector<1x1x128xf32>
    %566 = vector.broadcast %565 : vector<1x1x128xf32> to vector<4x8x128xf32>
    %567 = arith.mulf %566, %564 : vector<4x8x128xf32>
    %568 = arith.addf %559, %567 : vector<4x8x128xf32>
    %c7_i32_290 = arith.constant 7 : i32
    %569 = tpu.dynamic_rotate %455 by %c7_i32_290 dim 1 : vector<4x8x128xf32>, i32 -> vector<4x8x128xf32>
    %cst_291 = arith.constant 0.000000e+00 : f32
    %570 = vector.broadcast %cst_291 : f32 to vector<4x8x128xf32>
    %571 = arith.select %36, %570, %569 : vector<4x8x128xi1>, vector<4x8x128xf32>
    %c7_i32_292 = arith.constant 7 : i32
    %572 = tpu.dynamic_rotate %465 by %c7_i32_292 dim 1 : vector<4x8x128xf32>, i32 -> vector<4x8x128xf32>
    %cst_293 = arith.constant 0.000000e+00 : f32
    %573 = vector.broadcast %cst_293 : f32 to vector<4x8x128xf32>
    %574 = arith.select %36, %573, %572 : vector<4x8x128xi1>, vector<4x8x128xf32>
    %c0_294 = arith.constant 0 : index
    %c6_295 = arith.constant 6 : index
    %c0_296 = arith.constant 0 : index
    %575 = vector.load %arg9[%c0_294, %c6_295, %c0_296] : memref<2x9x128xf32, #tpu.memory_space<vmem>>, vector<1x1x128xf32>
    %576 = vector.shape_cast %575 : vector<1x1x128xf32> to vector<1x128xf32>
    %c16_i32_297 = arith.constant 16 : i32
    %577 = tpu.dynamic_rotate %571 by %c16_i32_297 dim 2 : vector<4x8x128xf32>, i32 -> vector<4x8x128xf32>
    %cst_298 = arith.constant 0.000000e+00 : f32
    %578 = vector.broadcast %cst_298 : f32 to vector<4x8x128xf32>
    %579 = arith.select %38, %578, %577 : vector<4x8x128xi1>, vector<4x8x128xf32>
    %580 = vector.shape_cast %576 : vector<1x128xf32> to vector<1x1x128xf32>
    %581 = vector.broadcast %580 : vector<1x1x128xf32> to vector<4x8x128xf32>
    %582 = arith.mulf %581, %579 : vector<4x8x128xf32>
    %583 = arith.addf %568, %582 : vector<4x8x128xf32>
    %c1_299 = arith.constant 1 : index
    %c6_300 = arith.constant 6 : index
    %c0_301 = arith.constant 0 : index
    %584 = vector.load %arg9[%c1_299, %c6_300, %c0_301] : memref<2x9x128xf32, #tpu.memory_space<vmem>>, vector<1x1x128xf32>
    %585 = vector.shape_cast %584 : vector<1x1x128xf32> to vector<1x128xf32>
    %c16_i32_302 = arith.constant 16 : i32
    %586 = tpu.dynamic_rotate %574 by %c16_i32_302 dim 2 : vector<4x8x128xf32>, i32 -> vector<4x8x128xf32>
    %cst_303 = arith.constant 0.000000e+00 : f32
    %587 = vector.broadcast %cst_303 : f32 to vector<4x8x128xf32>
    %588 = arith.select %38, %587, %586 : vector<4x8x128xi1>, vector<4x8x128xf32>
    %589 = vector.shape_cast %585 : vector<1x128xf32> to vector<1x1x128xf32>
    %590 = vector.broadcast %589 : vector<1x1x128xf32> to vector<4x8x128xf32>
    %591 = arith.mulf %590, %588 : vector<4x8x128xf32>
    %592 = arith.addf %583, %591 : vector<4x8x128xf32>
    %c0_304 = arith.constant 0 : index
    %c7_305 = arith.constant 7 : index
    %c0_306 = arith.constant 0 : index
    %593 = vector.load %arg9[%c0_304, %c7_305, %c0_306] : memref<2x9x128xf32, #tpu.memory_space<vmem>>, vector<1x1x128xf32>
    %594 = vector.shape_cast %593 : vector<1x1x128xf32> to vector<1x128xf32>
    %595 = vector.shape_cast %594 : vector<1x128xf32> to vector<1x1x128xf32>
    %596 = vector.broadcast %595 : vector<1x1x128xf32> to vector<4x8x128xf32>
    %597 = arith.mulf %596, %571 : vector<4x8x128xf32>
    %598 = arith.addf %592, %597 : vector<4x8x128xf32>
    %c1_307 = arith.constant 1 : index
    %c7_308 = arith.constant 7 : index
    %c0_309 = arith.constant 0 : index
    %599 = vector.load %arg9[%c1_307, %c7_308, %c0_309] : memref<2x9x128xf32, #tpu.memory_space<vmem>>, vector<1x1x128xf32>
    %600 = vector.shape_cast %599 : vector<1x1x128xf32> to vector<1x128xf32>
    %601 = vector.shape_cast %600 : vector<1x128xf32> to vector<1x1x128xf32>
    %602 = vector.broadcast %601 : vector<1x1x128xf32> to vector<4x8x128xf32>
    %603 = arith.mulf %602, %574 : vector<4x8x128xf32>
    %604 = arith.addf %598, %603 : vector<4x8x128xf32>
    %c0_310 = arith.constant 0 : index
    %c8_311 = arith.constant 8 : index
    %c0_312 = arith.constant 0 : index
    %605 = vector.load %arg9[%c0_310, %c8_311, %c0_312] : memref<2x9x128xf32, #tpu.memory_space<vmem>>, vector<1x1x128xf32>
    %606 = vector.shape_cast %605 : vector<1x1x128xf32> to vector<1x128xf32>
    %c112_i32_313 = arith.constant 112 : i32
    %607 = tpu.dynamic_rotate %571 by %c112_i32_313 dim 2 : vector<4x8x128xf32>, i32 -> vector<4x8x128xf32>
    %cst_314 = arith.constant 0.000000e+00 : f32
    %608 = vector.broadcast %cst_314 : f32 to vector<4x8x128xf32>
    %609 = arith.select %40, %608, %607 : vector<4x8x128xi1>, vector<4x8x128xf32>
    %610 = vector.shape_cast %606 : vector<1x128xf32> to vector<1x1x128xf32>
    %611 = vector.broadcast %610 : vector<1x1x128xf32> to vector<4x8x128xf32>
    %612 = arith.mulf %611, %609 : vector<4x8x128xf32>
    %613 = arith.addf %604, %612 : vector<4x8x128xf32>
    %c1_315 = arith.constant 1 : index
    %c8_316 = arith.constant 8 : index
    %c0_317 = arith.constant 0 : index
    %614 = vector.load %arg9[%c1_315, %c8_316, %c0_317] : memref<2x9x128xf32, #tpu.memory_space<vmem>>, vector<1x1x128xf32>
    %615 = vector.shape_cast %614 : vector<1x1x128xf32> to vector<1x128xf32>
    %c112_i32_318 = arith.constant 112 : i32
    %616 = tpu.dynamic_rotate %574 by %c112_i32_318 dim 2 : vector<4x8x128xf32>, i32 -> vector<4x8x128xf32>
    %cst_319 = arith.constant 0.000000e+00 : f32
    %617 = vector.broadcast %cst_319 : f32 to vector<4x8x128xf32>
    %618 = arith.select %40, %617, %616 : vector<4x8x128xi1>, vector<4x8x128xf32>
    %619 = vector.shape_cast %615 : vector<1x128xf32> to vector<1x1x128xf32>
    %620 = vector.broadcast %619 : vector<1x1x128xf32> to vector<4x8x128xf32>
    %621 = arith.mulf %620, %618 : vector<4x8x128xf32>
    %622 = arith.addf %613, %621 : vector<4x8x128xf32>
    %623 = vector.shape_cast %622 : vector<4x8x128xf32> to vector<1x32x128xf32>
    %c0_320 = arith.constant 0 : index
    %c0_321 = arith.constant 0 : index
    %c0_322 = arith.constant 0 : index
    %624 = vector.load %arg10[%c0_320, %c0_321, %c0_322] : memref<1x32x128xf32, #tpu.memory_space<vmem>>, vector<1x32x128xf32>
    tpu.vector_store %arg10[%c0_320, %c0_321, %c0_322], %623 {strides = array<i32>} : memref<1x32x128xf32, #tpu.memory_space<vmem>>, vector<1x32x128xf32>,
    return
  }
  func.func @transform_0(%arg0: i32) -> (i32, i32, i32) {
    %c0_i32 = arith.constant 0 : i32
    %c0_i32_0 = arith.constant 0 : i32
    %c0_i32_1 = arith.constant 0 : i32
    return %arg0, %c0_i32, %c0_i32_0 : i32, i32, i32
  }
  func.func @transform_1(%arg0: i32) -> (i32, i32) {
    %c0_i32 = arith.constant 0 : i32
    %c0_i32_0 = arith.constant 0 : i32
    %c0_i32_1 = arith.constant 0 : i32
    return %c0_i32, %c0_i32_0 : i32, i32
  }
  func.func @transform_2(%arg0: i32) -> (i32, i32) {
    %c0_i32 = arith.constant 0 : i32
    %c0_i32_0 = arith.constant 0 : i32
    %c0_i32_1 = arith.constant 0 : i32
    return %c0_i32, %c0_i32_0 : i32, i32
  }
  func.func @transform_3(%arg0: i32) -> (i32, i32) {
    %c0_i32 = arith.constant 0 : i32
    %c0_i32_0 = arith.constant 0 : i32
    %c0_i32_1 = arith.constant 0 : i32
    return %c0_i32, %c0_i32_0 : i32, i32
  }
  func.func @transform_4(%arg0: i32) -> (i32, i32) {
    %c0_i32 = arith.constant 0 : i32
    %c0_i32_0 = arith.constant 0 : i32
    %c0_i32_1 = arith.constant 0 : i32
    return %c0_i32, %c0_i32_0 : i32, i32
  }
  func.func @transform_5(%arg0: i32) -> (i32, i32) {
    %c0_i32 = arith.constant 0 : i32
    %c0_i32_0 = arith.constant 0 : i32
    %c0_i32_1 = arith.constant 0 : i32
    return %c0_i32, %c0_i32_0 : i32, i32
  }
  func.func @transform_6(%arg0: i32) -> (i32, i32, i32) {
    %c0_i32 = arith.constant 0 : i32
    %c0_i32_0 = arith.constant 0 : i32
    %c0_i32_1 = arith.constant 0 : i32
    %c0_i32_2 = arith.constant 0 : i32
    return %c0_i32, %c0_i32_0, %c0_i32_1 : i32, i32, i32
  }
  func.func @transform_7(%arg0: i32) -> (i32, i32) {
    %c0_i32 = arith.constant 0 : i32
    %c0_i32_0 = arith.constant 0 : i32
    %c0_i32_1 = arith.constant 0 : i32
    return %c0_i32, %c0_i32_0 : i32, i32
  }
  func.func @transform_8(%arg0: i32) -> (i32, i32, i32) {
    %c0_i32 = arith.constant 0 : i32
    %c0_i32_0 = arith.constant 0 : i32
    %c0_i32_1 = arith.constant 0 : i32
    %c0_i32_2 = arith.constant 0 : i32
    return %c0_i32, %c0_i32_0, %c0_i32_1 : i32, i32, i32
  }
  func.func @transform_9(%arg0: i32) -> (i32, i32, i32) {
    %c0_i32 = arith.constant 0 : i32
    %c0_i32_0 = arith.constant 0 : i32
    %c0_i32_1 = arith.constant 0 : i32
    return %arg0, %c0_i32, %c0_i32_0 : i32, i32, i32
  }
}

</mosaic_0001>

<llo_original>
// kernel: multi_fiber_unit.1
$region0: #{multi_fiber_unit.1}
  #allocation0 [shape = 'u32[]', space=smem, size = 0x4, offset = 0x4, fixed_abs, tag = 'smem constant byte address 0x4 - core index']
  #allocation1 [shape = 'u32[144,128]{1,0:T(1,128)}', space=vmem, size = 0x12000, scoped, tag = 'internal scratch']
  #allocation2 [shape = 'f32[6,8,128]{2,1,0:T(8,128)}', space=vmem, size = 0x6000, scoped, tag = 'scratch operand']
  %s0 = inlined_call_operand.vmem [shape: f32[2,32,128], index: 0, kind: input, shape index: {}]
  %s1 = inlined_call_operand.vmem [shape: f32[2,128], index: 1, kind: input, shape index: {}]
  %s2 = inlined_call_operand.vmem [shape: f32[128,64], index: 2, kind: input, shape index: {}]
  %s3 = inlined_call_operand.vmem [shape: f32[2,64], index: 3, kind: input, shape index: {}]
  %s4 = inlined_call_operand.vmem [shape: f32[64,128], index: 4, kind: input, shape index: {}]
  %s5 = inlined_call_operand.vmem [shape: f32[2,128], index: 5, kind: input, shape index: {}]
  %s6 = inlined_call_operand.vmem [shape: f32[2,27,128], index: 6, kind: input, shape index: {}]
  %s7 = inlined_call_operand.vmem [shape: f32[4,128], index: 7, kind: input, shape index: {}]
  %s8 = inlined_call_operand.vmem [shape: f32[2,9,128], index: 8, kind: input, shape index: {}]
  %s9 = inlined_call_operand.vmem [shape: f32[2,32,128], index: 9, kind: output, shape index: {}]
  %s10 = sld [smem:[#allocation0]]
  $region69: #{multi_fiber_unit.1} parent=0
    _
  %s12 = ssub.s32 1, %s10
  %s13 = scalar_select 0, %s12, %s10
  loop: start=0, step=1, limit=4
  $region2: #{multi_fiber_unit.1} parent=0 // loop_pre_header
    _
  $region3: #{multi_fiber_unit.1} parent=0 // loop_header
    %s15 = sphi 0, %s19
    %p16 = scmp.ge.s32.totalorder %s15, 4
    %s25 = sphi 0, %s27
    %s28 = sphi 0, %s25
    %s29 = sphi 0, %s28
    %s45 = sphi 0, %s29
    %s49 = sphi 0, %s49
    %s51 = sphi 0, %s49
    %s52 = sphi 0, %s51
    %s66 = sphi 0, %s52
    %s70 = sphi 0, %s70
    %s72 = sphi 0, %s70
    %s73 = sphi 0, %s72
    %s87 = sphi 0, %s73
    %s91 = sphi 0, %s91
    %s93 = sphi 0, %s91
    %s94 = sphi 0, %s93
    %s108 = sphi 0, %s94
    %s112 = sphi 0, %s112
    %s114 = sphi 0, %s112
    %s115 = sphi 0, %s114
    %s129 = sphi 0, %s115
    %s133 = sphi 0, %s133
    %s135 = sphi 0, %s133
    %s136 = sphi 0, %s135
    %s150 = sphi 0, %s136
    %s154 = sphi 0, %s154
    %s156 = sphi 0, %s154
    %s157 = sphi 0, %s156
    %s171 = sphi 0, %s157
    %s175 = sphi 0, %s175
    %s177 = sphi 0, %s175
    %s178 = sphi 0, %s177
    %s192 = sphi 0, %s178
    %s196 = sphi 0, %s196
    %s198 = sphi 0, %s196
    %s199 = sphi 0, %s198
    %s213 = sphi 0, %s199
    %s219 = sphi 0, %s221
    %s222 = sphi 0, %s219
    %s223 = sphi 0, %s222
    %s239 = sphi 0, %s223
  $region4: #{multi_fiber_unit.1} parent=0 // loop_header_branch
    %18 = sbr.rel (%p16) target = $region8
  $region5: #{multi_fiber_unit.1} parent=0 // loop_body
    %s20 = ssub.s32 %s15, 1
    %s21 = ssub.s32 %s15, 2
    %s22 = sadd.s32 %s15, 1
    %s23 = ssub.s32 %s15, %s22
    %p24 = scmp.eq.s32.totalorder %s23, 0
    %s26 = sadd.s32 %s25, 1
    %s27 = scalar_select %p24, %s25, %s26
    %p30 = pneg %p24
    %p31 = scmp.eq.s32.totalorder %s15, 1
    %p32 = por %p30, %p31
    %p33 = scmp.ne.s32.totalorder %s25, %s28
    %p34 = scmp.eq.s32.totalorder %s15, 0
    %p35 = por %p33, %p34
    %p36 = scmp.ne.s32.totalorder %s25, %s28
    %p37 = scmp.eq.s32.totalorder %s20, 1
    %p38 = por %p36, %p37
    %p39 = scmp.ne.s32.totalorder %s28, %s29
    %p40 = scmp.eq.s32.totalorder %s20, 0
    %p41 = por %p39, %p40
    %p42 = scmp.ne.s32.totalorder %s28, %s29
    %p43 = scmp.eq.s32.totalorder %s21, 1
    %p44 = por %p42, %p43
    %p46 = scmp.ne.s32.totalorder %s29, %s45
    %p47 = scmp.eq.s32.totalorder %s21, 0
    %p48 = por %p46, %p47
    %s50 = sadd.s32 %s49, 1
    %p53 = scmp.eq.s32.totalorder %s15, 1
    %p54 = scmp.ne.s32.totalorder %s49, %s51
    %p55 = scmp.eq.s32.totalorder %s15, 0
    %p56 = por %p54, %p55
    %p57 = scmp.ne.s32.totalorder %s49, %s51
    %p58 = scmp.eq.s32.totalorder %s20, 1
    %p59 = por %p57, %p58
    %p60 = scmp.ne.s32.totalorder %s51, %s52
    %p61 = scmp.eq.s32.totalorder %s20, 0
    %p62 = por %p60, %p61
    %p63 = scmp.ne.s32.totalorder %s51, %s52
    %p64 = scmp.eq.s32.totalorder %s21, 1
    %p65 = por %p63, %p64
    %p67 = scmp.ne.s32.totalorder %s52, %s66
    %p68 = scmp.eq.s32.totalorder %s21, 0
    %p69 = por %p67, %p68
    %s71 = sadd.s32 %s70, 1
    %p74 = scmp.eq.s32.totalorder %s15, 1
    %p75 = scmp.ne.s32.totalorder %s70, %s72
    %p76 = scmp.eq.s32.totalorder %s15, 0
    %p77 = por %p75, %p76
    %p78 = scmp.ne.s32.totalorder %s70, %s72
    %p79 = scmp.eq.s32.totalorder %s20, 1
    %p80 = por %p78, %p79
    %p81 = scmp.ne.s32.totalorder %s72, %s73
    %p82 = scmp.eq.s32.totalorder %s20, 0
    %p83 = por %p81, %p82
    %p84 = scmp.ne.s32.totalorder %s72, %s73
    %p85 = scmp.eq.s32.totalorder %s21, 1
    %p86 = por %p84, %p85
    %p88 = scmp.ne.s32.totalorder %s73, %s87
    %p89 = scmp.eq.s32.totalorder %s21, 0
    %p90 = por %p88, %p89
    %s92 = sadd.s32 %s91, 1
    %p95 = scmp.eq.s32.totalorder %s15, 1
    %p96 = scmp.ne.s32.totalorder %s91, %s93
    %p97 = scmp.eq.s32.totalorder %s15, 0
    %p98 = por %p96, %p97
    %p99 = scmp.ne.s32.totalorder %s91, %s93
    %p100 = scmp.eq.s32.totalorder %s20, 1
    %p101 = por %p99, %p100
    %p102 = scmp.ne.s32.totalorder %s93, %s94
    %p103 = scmp.eq.s32.totalorder %s20, 0
    %p104 = por %p102, %p103
    %p105 = scmp.ne.s32.totalorder %s93, %s94
    %p106 = scmp.eq.s32.totalorder %s21, 1
    %p107 = por %p105, %p106
    %p109 = scmp.ne.s32.totalorder %s94, %s108
    %p110 = scmp.eq.s32.totalorder %s21, 0
    %p111 = por %p109, %p110
    %s113 = sadd.s32 %s112, 1
    %p116 = scmp.eq.s32.totalorder %s15, 1
    %p117 = scmp.ne.s32.totalorder %s112, %s114
    %p118 = scmp.eq.s32.totalorder %s15, 0
    %p119 = por %p117, %p118
    %p120 = scmp.ne.s32.totalorder %s112, %s114
    %p121 = scmp.eq.s32.totalorder %s20, 1
    %p122 = por %p120, %p121
    %p123 = scmp.ne.s32.totalorder %s114, %s115
    %p124 = scmp.eq.s32.totalorder %s20, 0
    %p125 = por %p123, %p124
    %p126 = scmp.ne.s32.totalorder %s114, %s115
    %p127 = scmp.eq.s32.totalorder %s21, 1
    %p128 = por %p126, %p127
    %p130 = scmp.ne.s32.totalorder %s115, %s129
    %p131 = scmp.eq.s32.totalorder %s21, 0
    %p132 = por %p130, %p131
    %s134 = sadd.s32 %s133, 1
    %p137 = scmp.eq.s32.totalorder %s15, 1
    %p138 = scmp.ne.s32.totalorder %s133, %s135
    %p139 = scmp.eq.s32.totalorder %s15, 0
    %p140 = por %p138, %p139
    %p141 = scmp.ne.s32.totalorder %s133, %s135
    %p142 = scmp.eq.s32.totalorder %s20, 1
    %p143 = por %p141, %p142
    %p144 = scmp.ne.s32.totalorder %s135, %s136
    %p145 = scmp.eq.s32.totalorder %s20, 0
    %p146 = por %p144, %p145
    %p147 = scmp.ne.s32.totalorder %s135, %s136
    %p148 = scmp.eq.s32.totalorder %s21, 1
    %p149 = por %p147, %p148
    %p151 = scmp.ne.s32.totalorder %s136, %s150
    %p152 = scmp.eq.s32.totalorder %s21, 0
    %p153 = por %p151, %p152
    %s155 = sadd.s32 %s154, 1
    %p158 = scmp.eq.s32.totalorder %s15, 1
    %p159 = scmp.ne.s32.totalorder %s154, %s156
    %p160 = scmp.eq.s32.totalorder %s15, 0
    %p161 = por %p159, %p160
    %p162 = scmp.ne.s32.totalorder %s154, %s156
    %p163 = scmp.eq.s32.totalorder %s20, 1
    %p164 = por %p162, %p163
    %p165 = scmp.ne.s32.totalorder %s156, %s157
    %p166 = scmp.eq.s32.totalorder %s20, 0
    %p167 = por %p165, %p166
    %p168 = scmp.ne.s32.totalorder %s156, %s157
    %p169 = scmp.eq.s32.totalorder %s21, 1
    %p170 = por %p168, %p169
    %p172 = scmp.ne.s32.totalorder %s157, %s171
    %p173 = scmp.eq.s32.totalorder %s21, 0
    %p174 = por %p172, %p173
    %s176 = sadd.s32 %s175, 1
    %p179 = scmp.eq.s32.totalorder %s15, 1
    %p180 = scmp.ne.s32.totalorder %s175, %s177
    %p181 = scmp.eq.s32.totalorder %s15, 0
    %p182 = por %p180, %p181
    %p183 = scmp.ne.s32.totalorder %s175, %s177
    %p184 = scmp.eq.s32.totalorder %s20, 1
    %p185 = por %p183, %p184
    %p186 = scmp.ne.s32.totalorder %s177, %s178
    %p187 = scmp.eq.s32.totalorder %s20, 0
    %p188 = por %p186, %p187
    %p189 = scmp.ne.s32.totalorder %s177, %s178
    %p190 = scmp.eq.s32.totalorder %s21, 1
    %p191 = por %p189, %p190
    %p193 = scmp.ne.s32.totalorder %s178, %s192
    %p194 = scmp.eq.s32.totalorder %s21, 0
    %p195 = por %p193, %p194
    %s197 = sadd.s32 %s196, 1
    %p200 = scmp.eq.s32.totalorder %s15, 1
    %p201 = scmp.ne.s32.totalorder %s196, %s198
    %p202 = scmp.eq.s32.totalorder %s15, 0
    %p203 = por %p201, %p202
    %p204 = scmp.ne.s32.totalorder %s196, %s198
    %p205 = scmp.eq.s32.totalorder %s20, 1
    %p206 = por %p204, %p205
    %p207 = scmp.ne.s32.totalorder %s198, %s199
    %p208 = scmp.eq.s32.totalorder %s20, 0
    %p209 = por %p207, %p208
    %p210 = scmp.ne.s32.totalorder %s198, %s199
    %p211 = scmp.eq.s32.totalorder %s21, 1
    %p212 = por %p210, %p211
    %p214 = scmp.ne.s32.totalorder %s199, %s213
    %p215 = scmp.eq.s32.totalorder %s21, 0
    %p216 = por %p214, %p215
    %s217 = ssub.s32 %s15, %s22
    %p218 = scmp.eq.s32.totalorder %s217, 0
    %s220 = sadd.s32 %s219, 1
    %s221 = scalar_select %p218, %s219, %s220
    %p224 = pneg %p218
    %p225 = scmp.eq.s32.totalorder %s15, 1
    %p226 = por %p224, %p225
    %p227 = scmp.ne.s32.totalorder %s219, %s222
    %p228 = scmp.eq.s32.totalorder %s15, 0
    %p229 = por %p227, %p228
    %p230 = scmp.ne.s32.totalorder %s219, %s222
    %p231 = scmp.eq.s32.totalorder %s20, 1
    %p232 = por %p230, %p231
    %p233 = scmp.ne.s32.totalorder %s222, %s223
    %p234 = scmp.eq.s32.totalorder %s20, 0
    %p235 = por %p233, %p234
    %p236 = scmp.ne.s32.totalorder %s222, %s223
    %p237 = scmp.eq.s32.totalorder %s21, 1
    %p238 = por %p236, %p237
    %p240 = scmp.ne.s32.totalorder %s223, %s239
    %p241 = scmp.eq.s32.totalorder %s21, 0
    %p242 = por %p240, %p241
    %p243 = scmp.le.s32.totalorder 1, %s15
    %p244 = scmp.lt.s32.totalorder %s15, 3
    %p245 = pnand %p243, %p244
    %p246 = pneg %p245
    // Predicated region
    $region9: #{multi_fiber_unit.1} parent=5 // pred_check
      _
    $region10: #{multi_fiber_unit.1} parent=5 // pred_check_branch
      %248 = sbr.rel (%p245) target = $region12
    $region11: #{multi_fiber_unit.1} parent=5 // pred_region
      %s249 = ssub.s32 %s15, 1
      // Predicated region
      $region13: #{multi_fiber_unit.1} parent=11 // pred_check
        %p250 = pneg %p62
      $region14: #{multi_fiber_unit.1} parent=11 // pred_check_branch
        %252 = sbr.rel (%p250) target = $region16
      $region15: #{multi_fiber_unit.1} parent=11 // pred_region
        _
      $region16: #{multi_fiber_unit.1} parent=11 // pred_fallthru
        _
      // Predicated region
      $region17: #{multi_fiber_unit.1} parent=11 // pred_check
        %p253 = pneg %p83
      $region18: #{multi_fiber_unit.1} parent=11 // pred_check_branch
        %255 = sbr.rel (%p253) target = $region20
      $region19: #{multi_fiber_unit.1} parent=11 // pred_region
        _
      $region20: #{multi_fiber_unit.1} parent=11 // pred_fallthru
        _
      // Predicated region
      $region21: #{multi_fiber_unit.1} parent=11 // pred_check
        %p256 = pneg %p104
      $region22: #{multi_fiber_unit.1} parent=11 // pred_check_branch
        %258 = sbr.rel (%p256) target = $region24
      $region23: #{multi_fiber_unit.1} parent=11 // pred_region
        _
      $region24: #{multi_fiber_unit.1} parent=11 // pred_fallthru
        _
      // Predicated region
      $region25: #{multi_fiber_unit.1} parent=11 // pred_check
        %p259 = pneg %p125
      $region26: #{multi_fiber_unit.1} parent=11 // pred_check_branch
        %261 = sbr.rel (%p259) target = $region28
      $region27: #{multi_fiber_unit.1} parent=11 // pred_region
        _
      $region28: #{multi_fiber_unit.1} parent=11 // pred_fallthru
        _
      // Predicated region
      $region29: #{multi_fiber_unit.1} parent=11 // pred_check
        %p262 = pneg %p146
      $region30: #{multi_fiber_unit.1} parent=11 // pred_check_branch
        %264 = sbr.rel (%p262) target = $region32
      $region31: #{multi_fiber_unit.1} parent=11 // pred_region
        _
      $region32: #{multi_fiber_unit.1} parent=11 // pred_fallthru
        _
      // Predicated region
      $region33: #{multi_fiber_unit.1} parent=11 // pred_check
        %p265 = pneg %p167
      $region34: #{multi_fiber_unit.1} parent=11 // pred_check_branch
        %267 = sbr.rel (%p265) target = $region36
      $region35: #{multi_fiber_unit.1} parent=11 // pred_region
        _
      $region36: #{multi_fiber_unit.1} parent=11 // pred_fallthru
        _
      // Predicated region
      $region37: #{multi_fiber_unit.1} parent=11 // pred_check
        %p268 = pneg %p188
      $region38: #{multi_fiber_unit.1} parent=11 // pred_check_branch
        %270 = sbr.rel (%p268) target = $region40
      $region39: #{multi_fiber_unit.1} parent=11 // pred_region
        _
      $region40: #{multi_fiber_unit.1} parent=11 // pred_fallthru
        _
      // Predicated region
      $region41: #{multi_fiber_unit.1} parent=11 // pred_check
        %p271 = pneg %p209
      $region42: #{multi_fiber_unit.1} parent=11 // pred_check_branch
        %273 = sbr.rel (%p271) target = $region44
      $region43: #{multi_fiber_unit.1} parent=11 // pred_region
        _
      $region44: #{multi_fiber_unit.1} parent=11 // pred_fallthru
        _
    $region12: #{multi_fiber_unit.1} parent=5 // pred_fallthru
      _
    %p274 = scmp.lt.s32.totalorder %s15, 2
    // Predicated region
    $region45: #{multi_fiber_unit.1} parent=5 // pred_check
      %p275 = pneg %p274
    $region46: #{multi_fiber_unit.1} parent=5 // pred_check_branch
      %277 = sbr.rel (%p275) target = $region48
    $region47: #{multi_fiber_unit.1} parent=5 // pred_region
      // Predicated region
      $region49: #{multi_fiber_unit.1} parent=47 // pred_check
        %p278 = pneg %p35
      $region50: #{multi_fiber_unit.1} parent=47 // pred_check_branch
        %280 = sbr.rel (%p278) target = $region52
      $region51: #{multi_fiber_unit.1} parent=47 // pred_region
        %p281 = scmp.lt.s32.totalorder %s15, 1
        %s282 = scalar_select %p281, %s15, 1
        %s283 = smul.addr %s282, 4
        %s284 = smul.addr %s283, 8
        %s285 = scalar_lea.vmem %s0, %s284
      $region52: #{multi_fiber_unit.1} parent=47 // pred_fallthru
        _
    $region48: #{multi_fiber_unit.1} parent=5 // pred_fallthru
      _
    %p286 = scmp.le.s32.totalorder 1, %s15
    %p287 = scmp.lt.s32.totalorder %s15, 3
    %p288 = pnand %p286, %p287
    %p289 = pneg %p288
    // Predicated region
    $region53: #{multi_fiber_unit.1} parent=5 // pred_check
      _
    $region54: #{multi_fiber_unit.1} parent=5 // pred_check_branch
      %291 = sbr.rel (%p288) target = $region56
    $region55: #{multi_fiber_unit.1} parent=5 // pred_region
      %s292 = ssub.s32 %s15, 1
      %p293 = scmp.lt.s32.totalorder %s20, 1
      %s294 = scalar_select %p293, %s20, 1
      %s295 = smul.addr %s294, 4
      %s296 = smul.addr %s295, 8
      %s297 = scalar_lea.vmem %s0, %s296
      %p298 = pneg %p41
      %p299 = pneg %p38
      %p300 = pneg %p62
      %p301 = pneg %p59
      %p302 = pneg %p83
      %p303 = pneg %p80
      %p304 = pneg %p104
      %p305 = pneg %p101
      %p306 = pneg %p125
      %p307 = pneg %p122
      %p308 = pneg %p146
      %p309 = pneg %p143
      %p310 = pneg %p167
      %p311 = pneg %p164
      %p312 = pneg %p188
      %p313 = pneg %p185
      %p314 = pneg %p209
      %p315 = pneg %p206
      %p316 = pneg %p235
      %p317 = pneg %p232
      %p318 = scmp.lt.s32.totalorder %s20, 1
      %s319 = scalar_select %p318, %s20, 1
      %s320 = smul.addr %s319, 4
      %s321 = smul.addr %s320, 8
      %s322 = scalar_lea.vmem %s9, %s321
      %p323 = scmp.lt.s32.totalorder %s20, 1
      %s324 = scalar_select %p323, %s20, 1
      %s325 = smul.addr %s324, 4
      %s326 = smul.addr %s325, 8
      %s327 = scalar_lea.vmem %s0, %s326
      %p328 = scmp.lt.s32.totalorder %s20, 1
      %s329 = scalar_select %p328, %s20, 1
      %s330 = smul.addr %s329, 4
      %s331 = smul.addr %s330, 8
      %s332 = scalar_lea.vmem %s9, %s331
      %v333 = vld [vmem:[%s327] sm:$0xff]
      %v334 = vld [vmem:[%s327 + $0x8] sm:$0xff]
      %v335 = vld [vmem:[%s327 + $0x10] sm:$0xff]
      %v336 = vld [vmem:[%s327 + $0x18] sm:$0xff]
      %v337 = vld [vmem:[%s1] sm:$0x1]
      %v338 = vlaneseq
      %v339 = vshrl.u32 %v338, 7
      %v340 = vsub.s32 0, %v339
      %v341 = vrot.slane %v337, %v340
      %v342 = vmul.f32 %v333, %v341
      %v343 = vmul.f32 %v334, %v341
      %v344 = vmul.f32 %v335, %v341
      %v345 = vmul.f32 %v336, %v341
      %v346 = vld [vmem:[%s1 + $0x1] sm:$0x1]
      %v347 = vlaneseq
      %v348 = vshrl.u32 %v347, 7
      %v349 = vsub.s32 0, %v348
      %v350 = vrot.slane %v346, %v349
      %v351 = vadd.f32 %v342, %v350
      %v352 = vadd.f32 %v343, %v350
      %v353 = vadd.f32 %v344, %v350
      %v354 = vadd.f32 %v345, %v350
      %v355 = vmax.f32 %v351, 0.0
      %v356 = vmax.f32 %v352, 0.0
      %v357 = vmax.f32 %v353, 0.0
      %v358 = vmax.f32 %v354, 0.0
      %v359 = vld [vmem:[%s2] sm:$0xff]
      %v360 = vld [vmem:[%s2 + $0x8] sm:$0xff]
      %v361 = vld [vmem:[%s2 + $0x10] sm:$0xff]
      %v362 = vld [vmem:[%s2 + $0x18] sm:$0xff]
      %v363 = vld [vmem:[%s2 + $0x20] sm:$0xff]
      %v364 = vld [vmem:[%s2 + $0x28] sm:$0xff]
      %v365 = vld [vmem:[%s2 + $0x30] sm:$0xff]
      %v366 = vld [vmem:[%s2 + $0x38] sm:$0xff]
      %v367 = vld [vmem:[%s2 + $0x40] sm:$0xff]
      %v368 = vld [vmem:[%s2 + $0x48] sm:$0xff]
      %v369 = vld [vmem:[%s2 + $0x50] sm:$0xff]
      %v370 = vld [vmem:[%s2 + $0x58] sm:$0xff]
      %v371 = vld [vmem:[%s2 + $0x60] sm:$0xff]
      %v372 = vld [vmem:[%s2 + $0x68] sm:$0xff]
      %v373 = vld [vmem:[%s2 + $0x70] sm:$0xff]
      %v374 = vld [vmem:[%s2 + $0x78] sm:$0xff]
      %375 = vmatprep.subr.mxu0 0.0
      %376 = vmatpush1.msra.mxu0 %v359
      %377 = vmatprep.subr.mxu0 0.0
      %378 = vmatpush1.msra.mxu0 %v360
      %379 = vmatprep.subr.mxu0 0.0
      %380 = vmatpush1.msra.mxu0 %v361
      %381 = vmatprep.subr.mxu0 0.0
      %382 = vmatpush1.msra.mxu0 %v362
      %383 = vmatprep.subr.mxu0 0.0
      %384 = vmatpush1.msra.mxu0 %v363
      %385 = vmatprep.subr.mxu0 0.0
      %386 = vmatpush1.msra.mxu0 %v364
      %387 = vmatprep.subr.mxu0 0.0
      %388 = vmatpush1.msra.mxu0 %v365
      %389 = vmatprep.subr.mxu0 0.0
      %390 = vmatpush1.msra.mxu0 %v366
      %391 = vmatprep.subr.mxu0 0.0
      %392 = vmatpush1.msra.mxu0 %v367
      %393 = vmatprep.subr.mxu0 0.0
      %394 = vmatpush1.msra.mxu0 %v368
      %395 = vmatprep.subr.mxu0 0.0
      %396 = vmatpush1.msra.mxu0 %v369
      %397 = vmatprep.subr.mxu0 0.0
      %398 = vmatpush1.msra.mxu0 %v370
      %399 = vmatprep.subr.mxu0 0.0
      %400 = vmatpush1.msra.mxu0 %v371
      %401 = vmatprep.subr.mxu0 0.0
      %402 = vmatpush1.msra.mxu0 %v372
      %403 = vmatprep.subr.mxu0 0.0
      %404 = vmatpush1.msra.mxu0 %v373
      %405 = vmatprep.subr.mxu0 0.0
      %406 = vmatpush1.msra.mxu0 %v374
      %407 = vmatprep.subr.mxu0 0.0
      %408 = vmatpush1.msra.mxu0 0.0
      %409 = vmatprep.subr.mxu0 0.0
      %410 = vmatpush1.msra.mxu0 0.0
      %411 = vmatprep.subr.mxu0 0.0
      %412 = vmatpush1.msra.mxu0 0.0
      %413 = vmatprep.subr.mxu0 0.0
      %414 = vmatpush1.msra.mxu0 0.0
      %415 = vmatprep.subr.mxu0 0.0
      %416 = vmatpush1.msra.mxu0 0.0
      %417 = vmatprep.subr.mxu0 0.0
      %418 = vmatpush1.msra.mxu0 0.0
      %419 = vmatprep.subr.mxu0 0.0
      %420 = vmatpush1.msra.mxu0 0.0
      %421 = vmatprep.subr.mxu0 0.0
      %422 = vmatpush1.msra.mxu0 0.0
      %423 = vmatprep.subr.mxu0 0.0
      %424 = vmatpush1.msra.mxu0 0.0
      %425 = vmatprep.subr.mxu0 0.0
      %426 = vmatpush1.msra.mxu0 0.0
      %427 = vmatprep.subr.mxu0 0.0
      %428 = vmatpush1.msra.mxu0 0.0
      %429 = vmatprep.subr.mxu0 0.0
      %430 = vmatpush1.msra.mxu0 0.0
      %431 = vmatprep.subr.mxu0 0.0
      %432 = vmatpush1.msra.mxu0 0.0
      %433 = vmatprep.subr.mxu0 0.0
      %434 = vmatpush1.msra.mxu0 0.0
      %435 = vmatprep.subr.mxu0 0.0
      %436 = vmatpush1.msra.mxu0 0.0
      %437 = vmatprep.subr.mxu0 0.0
      %438 = vmatpush1.msra.mxu0 0.0
      %439 = vmatprep.mubr.f32.mxu0 0.0
      %440 = vmatmul.mubr.f32.gmra.mrb[0].mxu0 %v355
      %v441 = vpop.f32.mrb[0].mxu0
      %v442 = vadd.f32 0.0, %v441
      %v443 = vpop.f32.mrb[0].mxu0
      %444 = vmatprep.mubr.f32.mxu0 0.0
      %445 = vmatmul.mubr.f32.gmra.mrb[0].mxu0 %v356
      %v446 = vpop.f32.mrb[0].mxu0
      %v447 = vadd.f32 0.0, %v446
      %v448 = vpop.f32.mrb[0].mxu0
      %449 = vmatprep.mubr.f32.mxu0 0.0
      %450 = vmatmul.mubr.f32.gmra.mrb[0].mxu0 %v357
      %v451 = vpop.f32.mrb[0].mxu0
      %v452 = vadd.f32 0.0, %v451
      %v453 = vpop.f32.mrb[0].mxu0
      %454 = vmatprep.mubr.f32.mxu0 0.0
      %455 = vmatmul.mubr.f32.gmra.mrb[0].mxu0 %v358
      %v456 = vpop.f32.mrb[0].mxu0
      %v457 = vadd.f32 0.0, %v456
      %v458 = vpop.f32.mrb[0].mxu0
      %459 = vdwg.mxu0
      %v460 = vld [vmem:[%s3] sm:$0x1]
      %v461 = vlaneseq
      %v462 = vshrl.u32 %v461, 7
      %v463 = vsub.s32 0, %v462
      %v464 = vrot.slane %v460, %v463
      %v465 = vmul.f32 %v442, %v464
      %v466 = vmul.f32 %v447, %v464
      %v467 = vmul.f32 %v452, %v464
      %v468 = vmul.f32 %v457, %v464
      %v469 = vld [vmem:[%s3 + $0x1] sm:$0x1]
      %v470 = vlaneseq
      %v471 = vshrl.u32 %v470, 7
      %v472 = vsub.s32 0, %v471
      %v473 = vrot.slane %v469, %v472
      %v474 = vadd.f32 %v465, %v473
      %v475 = vadd.f32 %v466, %v473
      %v476 = vadd.f32 %v467, %v473
      %v477 = vadd.f32 %v468, %v473
      %v478 = vmax.f32 %v474, 0.0
      %v479 = vmax.f32 %v475, 0.0
      %v480 = vmax.f32 %v476, 0.0
      %v481 = vmax.f32 %v477, 0.0
      %v482 = vld [vmem:[%s4] sm:$0xff]
      %v483 = vld [vmem:[%s4 + $0x8] sm:$0xff]
      %v484 = vld [vmem:[%s4 + $0x10] sm:$0xff]
      %v485 = vld [vmem:[%s4 + $0x18] sm:$0xff]
      %v486 = vld [vmem:[%s4 + $0x20] sm:$0xff]
      %v487 = vld [vmem:[%s4 + $0x28] sm:$0xff]
      %v488 = vld [vmem:[%s4 + $0x30] sm:$0xff]
      %v489 = vld [vmem:[%s4 + $0x38] sm:$0xff]
      %vm490 = vcmask 523264
      %v492 = vsel %vm490, %v478, 0
      %v495 = vsel %vm490, %v479, 0
      %v498 = vsel %vm490, %v480, 0
      %v501 = vsel %vm490, %v481, 0
      %503 = vmatprep.subr.mxu0 0.0
      %504 = vmatpush1.msra.mxu0 %v482
      %505 = vmatprep.subr.mxu0 0.0
      %506 = vmatpush1.msra.mxu0 %v483
      %507 = vmatprep.subr.mxu0 0.0
      %508 = vmatpush1.msra.mxu0 %v484
      %509 = vmatprep.subr.mxu0 0.0
      %510 = vmatpush1.msra.mxu0 %v485
      %511 = vmatprep.subr.mxu0 0.0
      %512 = vmatpush1.msra.mxu0 %v486
      %513 = vmatprep.subr.mxu0 0.0
      %514 = vmatpush1.msra.mxu0 %v487
      %515 = vmatprep.subr.mxu0 0.0
      %516 = vmatpush1.msra.mxu0 %v488
      %517 = vmatprep.subr.mxu0 0.0
      %518 = vmatpush1.msra.mxu0 %v489
      %519 = vmatprep.subr.mxu0 0.0
      %520 = vmatpush1.msra.mxu0 0.0
      %521 = vmatprep.subr.mxu0 0.0
      %522 = vmatpush1.msra.mxu0 0.0
      %523 = vmatprep.subr.mxu0 0.0
      %524 = vmatpush1.msra.mxu0 0.0
      %525 = vmatprep.subr.mxu0 0.0
      %526 = vmatpush1.msra.mxu0 0.0
      %527 = vmatprep.subr.mxu0 0.0
      %528 = vmatpush1.msra.mxu0 0.0
      %529 = vmatprep.subr.mxu0 0.0
      %530 = vmatpush1.msra.mxu0 0.0
      %531 = vmatprep.subr.mxu0 0.0
      %532 = vmatpush1.msra.mxu0 0.0
      %533 = vmatprep.subr.mxu0 0.0
      %534 = vmatpush1.msra.mxu0 0.0
      %535 = vmatprep.subr.mxu0 0.0
      %536 = vmatpush1.msra.mxu0 0.0
      %537 = vmatprep.subr.mxu0 0.0
      %538 = vmatpush1.msra.mxu0 0.0
      %539 = vmatprep.subr.mxu0 0.0
      %540 = vmatpush1.msra.mxu0 0.0
      %541 = vmatprep.subr.mxu0 0.0
      %542 = vmatpush1.msra.mxu0 0.0
      %543 = vmatprep.subr.mxu0 0.0
      %544 = vmatpush1.msra.mxu0 0.0
      %545 = vmatprep.subr.mxu0 0.0
      %546 = vmatpush1.msra.mxu0 0.0
      %547 = vmatprep.subr.mxu0 0.0
      %548 = vmatpush1.msra.mxu0 0.0
      %549 = vmatprep.subr.mxu0 0.0
      %550 = vmatpush1.msra.mxu0 0.0
      %551 = vmatprep.subr.mxu0 0.0
      %552 = vmatpush1.msra.mxu0 0.0
      %553 = vmatprep.subr.mxu0 0.0
      %554 = vmatpush1.msra.mxu0 0.0
      %555 = vmatprep.subr.mxu0 0.0
      %556 = vmatpush1.msra.mxu0 0.0
      %557 = vmatprep.subr.mxu0 0.0
      %558 = vmatpush1.msra.mxu0 0.0
      %559 = vmatprep.subr.mxu0 0.0
      %560 = vmatpush1.msra.mxu0 0.0
      %561 = vmatprep.subr.mxu0 0.0
      %562 = vmatpush1.msra.mxu0 0.0
      %563 = vmatprep.subr.mxu0 0.0
      %564 = vmatpush1.msra.mxu0 0.0
      %565 = vmatprep.subr.mxu0 0.0
      %566 = vmatpush1.msra.mxu0 0.0
      %567 = vmatprep.mubr.f32.mxu0 0.0
      %568 = vmatmul.mubr.f32.gmra.mrb[0].mxu0 %v492
      %v569 = vpop.f32.mrb[0].mxu0
      %v570 = vadd.f32 0.0, %v569
      %v571 = vpop.f32.mrb[0].mxu0
      %572 = vmatprep.mubr.f32.mxu0 0.0
      %573 = vmatmul.mubr.f32.gmra.mrb[0].mxu0 %v495
      %v574 = vpop.f32.mrb[0].mxu0
      %v575 = vadd.f32 0.0, %v574
      %v576 = vpop.f32.mrb[0].mxu0
      %577 = vmatprep.mubr.f32.mxu0 0.0
      %578 = vmatmul.mubr.f32.gmra.mrb[0].mxu0 %v498
      %v579 = vpop.f32.mrb[0].mxu0
      %v580 = vadd.f32 0.0, %v579
      %v581 = vpop.f32.mrb[0].mxu0
      %582 = vmatprep.mubr.f32.mxu0 0.0
      %583 = vmatmul.mubr.f32.gmra.mrb[0].mxu0 %v501
      %v584 = vpop.f32.mrb[0].mxu0
      %v585 = vadd.f32 0.0, %v584
      %v586 = vpop.f32.mrb[0].mxu0
      %587 = vdwg.mxu0
      %v588 = vadd.f32 %v333, %v570
      %v589 = vadd.f32 %v334, %v575
      %v590 = vadd.f32 %v335, %v580
      %v591 = vadd.f32 %v336, %v585
      %v592 = vld [vmem:[%s5] sm:$0x1]
      %v593 = vlaneseq
      %v594 = vshrl.u32 %v593, 7
      %v595 = vsub.s32 0, %v594
      %v596 = vrot.slane %v592, %v595
      %v597 = vmul.f32 %v588, %v596
      %v598 = vmul.f32 %v589, %v596
      %v599 = vmul.f32 %v590, %v596
      %v600 = vmul.f32 %v591, %v596
      %v601 = vld [vmem:[%s5 + $0x1] sm:$0x1]
      %v602 = vlaneseq
      %v603 = vshrl.u32 %v602, 7
      %v604 = vsub.s32 0, %v603
      %v605 = vrot.slane %v601, %v604
      %v606 = vadd.f32 %v597, %v605
      %v607 = vadd.f32 %v598, %v605
      %v608 = vadd.f32 %v599, %v605
      %v609 = vadd.f32 %v600, %v605
      %v610 = vmax.f32 %v606, 0.0
      %v611 = vmax.f32 %v607, 0.0
      %v612 = vmax.f32 %v608, 0.0
      %v613 = vmax.f32 %v609, 0.0
      %v614 = vlaneseq
      %v615 = vshrl.u32 %v614, 7
      %v616 = vlaneseq
      %v617 = vand.u32 %v616, 127
      %vm618 = vcmp.lt.s32.totalorder %v615, 1
      %vm619 = vcmp.ge.s32.totalorder %v615, 7
      %vm620 = vcmp.lt.s32.totalorder %v617, 16
      %vm621 = vcmp.ge.s32.totalorder %v617, 112
      %622 = vst [vmem:[#allocation2] sm:$0xff] 0.0
      %623 = vst [vmem:[#allocation2 + $0x8] sm:$0xff] 0.0
      %624 = vst [vmem:[#allocation2 + $0x10] sm:$0xff] 0.0
      %625 = vst [vmem:[#allocation2 + $0x18] sm:$0xff] 0.0
      %626 = vst [vmem:[#allocation2 + $0x20] sm:$0xff] 0.0
      %627 = vst [vmem:[#allocation2 + $0x28] sm:$0xff] 0.0
      %s628 = scalar_lea.vmem [#allocation2], 8
      %629 = vst [vmem:[%s628] sm:$0xff] %v610
      %630 = vst [vmem:[%s628 + $0x8] sm:$0xff] %v611
      %631 = vst [vmem:[%s628 + $0x10] sm:$0xff] %v612
      %632 = vst [vmem:[%s628 + $0x18] sm:$0xff] %v613
      %v633 = vld [vmem:[#allocation2] sm:$0xff]
      %v634 = vld [vmem:[#allocation2 + $0x8] sm:$0xff]
      %v635 = vld [vmem:[#allocation2 + $0x10] sm:$0xff]
      %v636 = vld [vmem:[#allocation2 + $0x18] sm:$0xff]
      %v637 = vrot.slane %v633, 7
      %v638 = vrot.slane %v634, 7
      %v639 = vrot.slane %v635, 7
      %v640 = vrot.slane %v636, 7
      %v641 = vsel %vm618, 0.0, %v637
      %v642 = vsel %vm618, 0.0, %v638
      %v643 = vsel %vm618, 0.0, %v639
      %v644 = vsel %vm618, 0.0, %v640
      %645 = vrot.lane.b32.xlu0 %v641, 16
      %v646 = vpop.permute.xlu0 %645
      %647 = vrot.lane.b32.xlu0 %v642, 16
      %v648 = vpop.permute.xlu0 %647
      %649 = vrot.lane.b32.xlu0 %v643, 16
      %v650 = vpop.permute.xlu0 %649
      %651 = vrot.lane.b32.xlu0 %v644, 16
      %v652 = vpop.permute.xlu0 %651
      %v653 = vsel %vm620, 0.0, %v646
      %v654 = vsel %vm620, 0.0, %v648
      %v655 = vsel %vm620, 0.0, %v650
      %v656 = vsel %vm620, 0.0, %v652
      %v657 = vld [vmem:[%s6] sm:$0x1]
      %v658 = vlaneseq
      %v659 = vshrl.u32 %v658, 7
      %v660 = vsub.s32 0, %v659
      %v661 = vrot.slane %v657, %v660
      %v662 = vmul.f32 %v661, %v653
      %v663 = vmul.f32 %v661, %v654
      %v664 = vmul.f32 %v661, %v655
      %v665 = vmul.f32 %v661, %v656
      %v666 = vadd.f32 %v662, 0.0
      %v667 = vadd.f32 %v663, 0.0
      %v668 = vadd.f32 %v664, 0.0
      %v669 = vadd.f32 %v665, 0.0
      %s670 = scalar_lea.vmem %s6, 32
      %v671 = vld [vmem:[%s670] sm:$0x1]
      %v672 = vlaneseq
      %v673 = vshrl.u32 %v672, 7
      %v674 = vsub.s32 0, %v673
      %v675 = vrot.slane %v671, %v674
      %v676 = vmul.f32 %v675, %v653
      %v677 = vmul.f32 %v675, %v654
      %v678 = vmul.f32 %v675, %v655
      %v679 = vmul.f32 %v675, %v656
      %v680 = vadd.f32 %v676, 0.0
      %v681 = vadd.f32 %v677, 0.0
      %v682 = vadd.f32 %v678, 0.0
      %v683 = vadd.f32 %v679, 0.0
      %v684 = vld [vmem:[%s6 + $0x1] sm:$0x1]
      %v685 = vlaneseq
      %v686 = vshrl.u32 %v685, 7
      %v687 = vsub.s32 0, %v686
      %v688 = vrot.slane %v684, %v687
      %v689 = vmul.f32 %v688, %v641
      %v690 = vmul.f32 %v688, %v642
      %v691 = vmul.f32 %v688, %v643
      %v692 = vmul.f32 %v688, %v644
      %v693 = vadd.f32 %v666, %v689
      %v694 = vadd.f32 %v667, %v690
      %v695 = vadd.f32 %v668, %v691
      %v696 = vadd.f32 %v669, %v692
      %v697 = vld [vmem:[%s670 + $0x1] sm:$0x1]
      %v698 = vlaneseq
      %v699 = vshrl.u32 %v698, 7
      %v700 = vsub.s32 0, %v699
      %v701 = vrot.slane %v697, %v700
      %v702 = vmul.f32 %v701, %v641
      %v703 = vmul.f32 %v701, %v642
      %v704 = vmul.f32 %v701, %v643
      %v705 = vmul.f32 %v701, %v644
      %v706 = vadd.f32 %v680, %v702
      %v707 = vadd.f32 %v681, %v703
      %v708 = vadd.f32 %v682, %v704
      %v709 = vadd.f32 %v683, %v705
      %710 = vrot.lane.b32.xlu0 %v641, 112
      %v711 = vpop.permute.xlu0 %710
      %712 = vrot.lane.b32.xlu0 %v642, 112
      %v713 = vpop.permute.xlu0 %712
      %714 = vrot.lane.b32.xlu0 %v643, 112
      %v715 = vpop.permute.xlu0 %714
      %716 = vrot.lane.b32.xlu0 %v644, 112
      %v717 = vpop.permute.xlu0 %716
      %v718 = vsel %vm621, 0.0, %v711
      %v719 = vsel %vm621, 0.0, %v713
      %v720 = vsel %vm621, 0.0, %v715
      %v721 = vsel %vm621, 0.0, %v717
      %v722 = vld [vmem:[%s6 + $0x2] sm:$0x1]
      %v723 = vlaneseq
      %v724 = vshrl.u32 %v723, 7
      %v725 = vsub.s32 0, %v724
      %v726 = vrot.slane %v722, %v725
      %v727 = vmul.f32 %v726, %v718
      %v728 = vmul.f32 %v726, %v719
      %v729 = vmul.f32 %v726, %v720
      %v730 = vmul.f32 %v726, %v721
      %v731 = vadd.f32 %v693, %v727
      %v732 = vadd.f32 %v694, %v728
      %v733 = vadd.f32 %v695, %v729
      %v734 = vadd.f32 %v696, %v730
      %v735 = vld [vmem:[%s670 + $0x2] sm:$0x1]
      %v736 = vlaneseq
      %v737 = vshrl.u32 %v736, 7
      %v738 = vsub.s32 0, %v737
      %v739 = vrot.slane %v735, %v738
      %v740 = vmul.f32 %v739, %v718
      %v741 = vmul.f32 %v739, %v719
      %v742 = vmul.f32 %v739, %v720
      %v743 = vmul.f32 %v739, %v721
      %v744 = vadd.f32 %v706, %v740
      %v745 = vadd.f32 %v707, %v741
      %v746 = vadd.f32 %v708, %v742
      %v747 = vadd.f32 %v709, %v743
      %748 = vrot.lane.b32.xlu0 %v633, 16
      %v749 = vpop.permute.xlu0 %748
      %750 = vrot.lane.b32.xlu0 %v634, 16
      %v751 = vpop.permute.xlu0 %750
      %752 = vrot.lane.b32.xlu0 %v635, 16
      %v753 = vpop.permute.xlu0 %752
      %754 = vrot.lane.b32.xlu0 %v636, 16
      %v755 = vpop.permute.xlu0 %754
      %v756 = vsel %vm620, 0.0, %v749
      %v757 = vsel %vm620, 0.0, %v751
      %v758 = vsel %vm620, 0.0, %v753
      %v759 = vsel %vm620, 0.0, %v755
      %v760 = vld [vmem:[%s6 + $0x3] sm:$0x1]
      %v761 = vlaneseq
      %v762 = vshrl.u32 %v761, 7
      %v763 = vsub.s32 0, %v762
      %v764 = vrot.slane %v760, %v763
      %v765 = vmul.f32 %v764, %v756
      %v766 = vmul.f32 %v764, %v757
      %v767 = vmul.f32 %v764, %v758
      %v768 = vmul.f32 %v764, %v759
      %v769 = vadd.f32 %v731, %v765
      %v770 = vadd.f32 %v732, %v766
      %v771 = vadd.f32 %v733, %v767
      %v772 = vadd.f32 %v734, %v768
      %v773 = vld [vmem:[%s670 + $0x3] sm:$0x1]
      %v774 = vlaneseq
      %v775 = vshrl.u32 %v774, 7
      %v776 = vsub.s32 0, %v775
      %v777 = vrot.slane %v773, %v776
      %v778 = vmul.f32 %v777, %v756
      %v779 = vmul.f32 %v777, %v757
      %v780 = vmul.f32 %v777, %v758
      %v781 = vmul.f32 %v777, %v759
      %v782 = vadd.f32 %v744, %v778
      %v783 = vadd.f32 %v745, %v779
      %v784 = vadd.f32 %v746, %v780
      %v785 = vadd.f32 %v747, %v781
      %v786 = vld [vmem:[%s6 + $0x4] sm:$0x1]
      %v787 = vlaneseq
      %v788 = vshrl.u32 %v787, 7
      %v789 = vsub.s32 0, %v788
      %v790 = vrot.slane %v786, %v789
      %v791 = vmul.f32 %v790, %v633
      %v792 = vmul.f32 %v790, %v634
      %v793 = vmul.f32 %v790, %v635
      %v794 = vmul.f32 %v790, %v636
      %v795 = vadd.f32 %v769, %v791
      %v796 = vadd.f32 %v770, %v792
      %v797 = vadd.f32 %v771, %v793
      %v798 = vadd.f32 %v772, %v794
      %v799 = vld [vmem:[%s670 + $0x4] sm:$0x1]
      %v800 = vlaneseq
      %v801 = vshrl.u32 %v800, 7
      %v802 = vsub.s32 0, %v801
      %v803 = vrot.slane %v799, %v802
      %v804 = vmul.f32 %v803, %v633
      %v805 = vmul.f32 %v803, %v634
      %v806 = vmul.f32 %v803, %v635
      %v807 = vmul.f32 %v803, %v636
      %v808 = vadd.f32 %v782, %v804
      %v809 = vadd.f32 %v783, %v805
      %v810 = vadd.f32 %v784, %v806
      %v811 = vadd.f32 %v785, %v807
      %812 = vrot.lane.b32.xlu0 %v633, 112
      %v813 = vpop.permute.xlu0 %812
      %814 = vrot.lane.b32.xlu0 %v634, 112
      %v815 = vpop.permute.xlu0 %814
      %816 = vrot.lane.b32.xlu0 %v635, 112
      %v817 = vpop.permute.xlu0 %816
      %818 = vrot.lane.b32.xlu0 %v636, 112
      %v819 = vpop.permute.xlu0 %818
      %v820 = vsel %vm621, 0.0, %v813
      %v821 = vsel %vm621, 0.0, %v815
      %v822 = vsel %vm621, 0.0, %v817
      %v823 = vsel %vm621, 0.0, %v819
      %v824 = vld [vmem:[%s6 + $0x5] sm:$0x1]
      %v825 = vlaneseq
      %v826 = vshrl.u32 %v825, 7
      %v827 = vsub.s32 0, %v826
      %v828 = vrot.slane %v824, %v827
      %v829 = vmul.f32 %v828, %v820
      %v830 = vmul.f32 %v828, %v821
      %v831 = vmul.f32 %v828, %v822
      %v832 = vmul.f32 %v828, %v823
      %v833 = vadd.f32 %v795, %v829
      %v834 = vadd.f32 %v796, %v830
      %v835 = vadd.f32 %v797, %v831
      %v836 = vadd.f32 %v798, %v832
      %v837 = vld [vmem:[%s670 + $0x5] sm:$0x1]
      %v838 = vlaneseq
      %v839 = vshrl.u32 %v838, 7
      %v840 = vsub.s32 0, %v839
      %v841 = vrot.slane %v837, %v840
      %v842 = vmul.f32 %v841, %v820
      %v843 = vmul.f32 %v841, %v821
      %v844 = vmul.f32 %v841, %v822
      %v845 = vmul.f32 %v841, %v823
      %v846 = vadd.f32 %v808, %v842
      %v847 = vadd.f32 %v809, %v843
      %v848 = vadd.f32 %v810, %v844
      %v849 = vadd.f32 %v811, %v845
      %v850 = vrot.slane %v633, 1
      %v851 = vrot.slane %v634, 1
      %v852 = vrot.slane %v635, 1
      %v853 = vrot.slane %v636, 1
      %v854 = vsel %vm619, 0.0, %v850
      %v855 = vsel %vm619, 0.0, %v851
      %v856 = vsel %vm619, 0.0, %v852
      %v857 = vsel %vm619, 0.0, %v853
      %858 = vrot.lane.b32.xlu0 %v854, 16
      %v859 = vpop.permute.xlu0 %858
      %860 = vrot.lane.b32.xlu0 %v855, 16
      %v861 = vpop.permute.xlu0 %860
      %862 = vrot.lane.b32.xlu0 %v856, 16
      %v863 = vpop.permute.xlu0 %862
      %864 = vrot.lane.b32.xlu0 %v857, 16
      %v865 = vpop.permute.xlu0 %864
      %v866 = vsel %vm620, 0.0, %v859
      %v867 = vsel %vm620, 0.0, %v861
      %v868 = vsel %vm620, 0.0, %v863
      %v869 = vsel %vm620, 0.0, %v865
      %v870 = vld [vmem:[%s6 + $0x6] sm:$0x1]
      %v871 = vlaneseq
      %v872 = vshrl.u32 %v871, 7
      %v873 = vsub.s32 0, %v872
      %v874 = vrot.slane %v870, %v873
      %v875 = vmul.f32 %v874, %v866
      %v876 = vmul.f32 %v874, %v867
      %v877 = vmul.f32 %v874, %v868
      %v878 = vmul.f32 %v874, %v869
      %v879 = vadd.f32 %v833, %v875
      %v880 = vadd.f32 %v834, %v876
      %v881 = vadd.f32 %v835, %v877
      %v882 = vadd.f32 %v836, %v878
      %v883 = vld [vmem:[%s670 + $0x6] sm:$0x1]
      %v884 = vlaneseq
      %v885 = vshrl.u32 %v884, 7
      %v886 = vsub.s32 0, %v885
      %v887 = vrot.slane %v883, %v886
      %v888 = vmul.f32 %v887, %v866
      %v889 = vmul.f32 %v887, %v867
      %v890 = vmul.f32 %v887, %v868
      %v891 = vmul.f32 %v887, %v869
      %v892 = vadd.f32 %v846, %v888
      %v893 = vadd.f32 %v847, %v889
      %v894 = vadd.f32 %v848, %v890
      %v895 = vadd.f32 %v849, %v891
      %v896 = vld [vmem:[%s6 + $0x7] sm:$0x1]
      %v897 = vlaneseq
      %v898 = vshrl.u32 %v897, 7
      %v899 = vsub.s32 0, %v898
      %v900 = vrot.slane %v896, %v899
      %v901 = vmul.f32 %v900, %v854
      %v902 = vmul.f32 %v900, %v855
      %v903 = vmul.f32 %v900, %v856
      %v904 = vmul.f32 %v900, %v857
      %v905 = vadd.f32 %v879, %v901
      %v906 = vadd.f32 %v880, %v902
      %v907 = vadd.f32 %v881, %v903
      %v908 = vadd.f32 %v882, %v904
      %v909 = vld [vmem:[%s670 + $0x7] sm:$0x1]
      %v910 = vlaneseq
      %v911 = vshrl.u32 %v910, 7
      %v912 = vsub.s32 0, %v911
      %v913 = vrot.slane %v909, %v912
      %v914 = vmul.f32 %v913, %v854
      %v915 = vmul.f32 %v913, %v855
      %v916 = vmul.f32 %v913, %v856
      %v917 = vmul.f32 %v913, %v857
      %v918 = vadd.f32 %v892, %v914
      %v919 = vadd.f32 %v893, %v915
      %v920 = vadd.f32 %v894, %v916
      %v921 = vadd.f32 %v895, %v917
      %922 = vrot.lane.b32.xlu0 %v854, 112
      %v923 = vpop.permute.xlu0 %922
      %924 = vrot.lane.b32.xlu0 %v855, 112
      %v925 = vpop.permute.xlu0 %924
      %926 = vrot.lane.b32.xlu0 %v856, 112
      %v927 = vpop.permute.xlu0 %926
      %928 = vrot.lane.b32.xlu0 %v857, 112
      %v929 = vpop.permute.xlu0 %928
      %v930 = vsel %vm621, 0.0, %v923
      %v931 = vsel %vm621, 0.0, %v925
      %v932 = vsel %vm621, 0.0, %v927
      %v933 = vsel %vm621, 0.0, %v929
      %v934 = vld [vmem:[%s6 + $0x8] sm:$0x1]
      %v935 = vlaneseq
      %v936 = vshrl.u32 %v935, 7
      %v937 = vsub.s32 0, %v936
      %v938 = vrot.slane %v934, %v937
      %v939 = vmul.f32 %v938, %v930
      %v940 = vmul.f32 %v938, %v931
      %v941 = vmul.f32 %v938, %v932
      %v942 = vmul.f32 %v938, %v933
      %v943 = vadd.f32 %v905, %v939
      %v944 = vadd.f32 %v906, %v940
      %v945 = vadd.f32 %v907, %v941
      %v946 = vadd.f32 %v908, %v942
      %v947 = vld [vmem:[%s670 + $0x8] sm:$0x1]
      %v948 = vlaneseq
      %v949 = vshrl.u32 %v948, 7
      %v950 = vsub.s32 0, %v949
      %v951 = vrot.slane %v947, %v950
      %v952 = vmul.f32 %v951, %v930
      %v953 = vmul.f32 %v951, %v931
      %v954 = vmul.f32 %v951, %v932
      %v955 = vmul.f32 %v951, %v933
      %v956 = vadd.f32 %v918, %v952
      %v957 = vadd.f32 %v919, %v953
      %v958 = vadd.f32 %v920, %v954
      %v959 = vadd.f32 %v921, %v955
      %v960 = vld [vmem:[%s628] sm:$0xff]
      %v961 = vld [vmem:[%s628 + $0x8] sm:$0xff]
      %v962 = vld [vmem:[%s628 + $0x10] sm:$0xff]
      %v963 = vld [vmem:[%s628 + $0x18] sm:$0xff]
      %v964 = vrot.slane %v960, 7
      %v965 = vrot.slane %v961, 7
      %v966 = vrot.slane %v962, 7
      %v967 = vrot.slane %v963, 7
      %v968 = vsel %vm618, 0.0, %v964
      %v969 = vsel %vm618, 0.0, %v965
      %v970 = vsel %vm618, 0.0, %v966
      %v971 = vsel %vm618, 0.0, %v967
      %972 = vrot.lane.b32.xlu0 %v968, 16
      %v973 = vpop.permute.xlu0 %972
      %974 = vrot.lane.b32.xlu0 %v969, 16
      %v975 = vpop.permute.xlu0 %974
      %976 = vrot.lane.b32.xlu0 %v970, 16
      %v977 = vpop.permute.xlu0 %976
      %978 = vrot.lane.b32.xlu0 %v971, 16
      %v979 = vpop.permute.xlu0 %978
      %v980 = vsel %vm620, 0.0, %v973
      %v981 = vsel %vm620, 0.0, %v975
      %v982 = vsel %vm620, 0.0, %v977
      %v983 = vsel %vm620, 0.0, %v979
      %v984 = vld [vmem:[%s6 + $0x9] sm:$0x1]
      %v985 = vlaneseq
      %v986 = vshrl.u32 %v985, 7
      %v987 = vsub.s32 0, %v986
      %v988 = vrot.slane %v984, %v987
      %v989 = vmul.f32 %v988, %v980
      %v990 = vmul.f32 %v988, %v981
      %v991 = vmul.f32 %v988, %v982
      %v992 = vmul.f32 %v988, %v983
      %v993 = vadd.f32 %v943, %v989
      %v994 = vadd.f32 %v944, %v990
      %v995 = vadd.f32 %v945, %v991
      %v996 = vadd.f32 %v946, %v992
      %v997 = vld [vmem:[%s670 + $0x9] sm:$0x1]
      %v998 = vlaneseq
      %v999 = vshrl.u32 %v998, 7
      %v1000 = vsub.s32 0, %v999
      %v1001 = vrot.slane %v997, %v1000
      %v1002 = vmul.f32 %v1001, %v980
      %v1003 = vmul.f32 %v1001, %v981
      %v1004 = vmul.f32 %v1001, %v982
      %v1005 = vmul.f32 %v1001, %v983
      %v1006 = vadd.f32 %v956, %v1002
      %v1007 = vadd.f32 %v957, %v1003
      %v1008 = vadd.f32 %v958, %v1004
      %v1009 = vadd.f32 %v959, %v1005
      %v1010 = vld [vmem:[%s6 + $0xa] sm:$0x1]
      %v1011 = vlaneseq
      %v1012 = vshrl.u32 %v1011, 7
      %v1013 = vsub.s32 0, %v1012
      %v1014 = vrot.slane %v1010, %v1013
      %v1015 = vmul.f32 %v1014, %v968
      %v1016 = vmul.f32 %v1014, %v969
      %v1017 = vmul.f32 %v1014, %v970
      %v1018 = vmul.f32 %v1014, %v971
      %v1019 = vadd.f32 %v993, %v1015
      %v1020 = vadd.f32 %v994, %v1016
      %v1021 = vadd.f32 %v995, %v1017
      %v1022 = vadd.f32 %v996, %v1018
      %v1023 = vld [vmem:[%s670 + $0xa] sm:$0x1]
      %v1024 = vlaneseq
      %v1025 = vshrl.u32 %v1024, 7
      %v1026 = vsub.s32 0, %v1025
      %v1027 = vrot.slane %v1023, %v1026
      %v1028 = vmul.f32 %v1027, %v968
      %v1029 = vmul.f32 %v1027, %v969
      %v1030 = vmul.f32 %v1027, %v970
      %v1031 = vmul.f32 %v1027, %v971
      %v1032 = vadd.f32 %v1006, %v1028
      %v1033 = vadd.f32 %v1007, %v1029
      %v1034 = vadd.f32 %v1008, %v1030
      %v1035 = vadd.f32 %v1009, %v1031
      %1036 = vrot.lane.b32.xlu0 %v968, 112
      %v1037 = vpop.permute.xlu0 %1036
      %1038 = vrot.lane.b32.xlu0 %v969, 112
      %v1039 = vpop.permute.xlu0 %1038
      %1040 = vrot.lane.b32.xlu0 %v970, 112
      %v1041 = vpop.permute.xlu0 %1040
      %1042 = vrot.lane.b32.xlu0 %v971, 112
      %v1043 = vpop.permute.xlu0 %1042
      %v1044 = vsel %vm621, 0.0, %v1037
      %v1045 = vsel %vm621, 0.0, %v1039
      %v1046 = vsel %vm621, 0.0, %v1041
      %v1047 = vsel %vm621, 0.0, %v1043
      %v1048 = vld [vmem:[%s6 + $0xb] sm:$0x1]
      %v1049 = vlaneseq
      %v1050 = vshrl.u32 %v1049, 7
      %v1051 = vsub.s32 0, %v1050
      %v1052 = vrot.slane %v1048, %v1051
      %v1053 = vmul.f32 %v1052, %v1044
      %v1054 = vmul.f32 %v1052, %v1045
      %v1055 = vmul.f32 %v1052, %v1046
      %v1056 = vmul.f32 %v1052, %v1047
      %v1057 = vadd.f32 %v1019, %v1053
      %v1058 = vadd.f32 %v1020, %v1054
      %v1059 = vadd.f32 %v1021, %v1055
      %v1060 = vadd.f32 %v1022, %v1056
      %v1061 = vld [vmem:[%s670 + $0xb] sm:$0x1]
      %v1062 = vlaneseq
      %v1063 = vshrl.u32 %v1062, 7
      %v1064 = vsub.s32 0, %v1063
      %v1065 = vrot.slane %v1061, %v1064
      %v1066 = vmul.f32 %v1065, %v1044
      %v1067 = vmul.f32 %v1065, %v1045
      %v1068 = vmul.f32 %v1065, %v1046
      %v1069 = vmul.f32 %v1065, %v1047
      %v1070 = vadd.f32 %v1032, %v1066
      %v1071 = vadd.f32 %v1033, %v1067
      %v1072 = vadd.f32 %v1034, %v1068
      %v1073 = vadd.f32 %v1035, %v1069
      %1074 = vrot.lane.b32.xlu0 %v960, 16
      %v1075 = vpop.permute.xlu0 %1074
      %1076 = vrot.lane.b32.xlu0 %v961, 16
      %v1077 = vpop.permute.xlu0 %1076
      %1078 = vrot.lane.b32.xlu0 %v962, 16
      %v1079 = vpop.permute.xlu0 %1078
      %1080 = vrot.lane.b32.xlu0 %v963, 16
      %v1081 = vpop.permute.xlu0 %1080
      %v1082 = vsel %vm620, 0.0, %v1075
      %v1083 = vsel %vm620, 0.0, %v1077
      %v1084 = vsel %vm620, 0.0, %v1079
      %v1085 = vsel %vm620, 0.0, %v1081
      %v1086 = vld [vmem:[%s6 + $0xc] sm:$0x1]
      %v1087 = vlaneseq
      %v1088 = vshrl.u32 %v1087, 7
      %v1089 = vsub.s32 0, %v1088
      %v1090 = vrot.slane %v1086, %v1089
      %v1091 = vmul.f32 %v1090, %v1082
      %v1092 = vmul.f32 %v1090, %v1083
      %v1093 = vmul.f32 %v1090, %v1084
      %v1094 = vmul.f32 %v1090, %v1085
      %v1095 = vadd.f32 %v1057, %v1091
      %v1096 = vadd.f32 %v1058, %v1092
      %v1097 = vadd.f32 %v1059, %v1093
      %v1098 = vadd.f32 %v1060, %v1094
      %v1099 = vld [vmem:[%s670 + $0xc] sm:$0x1]
      %v1100 = vlaneseq
      %v1101 = vshrl.u32 %v1100, 7
      %v1102 = vsub.s32 0, %v1101
      %v1103 = vrot.slane %v1099, %v1102
      %v1104 = vmul.f32 %v1103, %v1082
      %v1105 = vmul.f32 %v1103, %v1083
      %v1106 = vmul.f32 %v1103, %v1084
      %v1107 = vmul.f32 %v1103, %v1085
      %v1108 = vadd.f32 %v1070, %v1104
      %v1109 = vadd.f32 %v1071, %v1105
      %v1110 = vadd.f32 %v1072, %v1106
      %v1111 = vadd.f32 %v1073, %v1107
      %v1112 = vld [vmem:[%s6 + $0xd] sm:$0x1]
      %v1113 = vlaneseq
      %v1114 = vshrl.u32 %v1113, 7
      %v1115 = vsub.s32 0, %v1114
      %v1116 = vrot.slane %v1112, %v1115
      %v1117 = vmul.f32 %v1116, %v960
      %v1118 = vmul.f32 %v1116, %v961
      %v1119 = vmul.f32 %v1116, %v962
      %v1120 = vmul.f32 %v1116, %v963
      %v1121 = vadd.f32 %v1095, %v1117
      %v1122 = vadd.f32 %v1096, %v1118
      %v1123 = vadd.f32 %v1097, %v1119
      %v1124 = vadd.f32 %v1098, %v1120
      %v1125 = vld [vmem:[%s670 + $0xd] sm:$0x1]
      %v1126 = vlaneseq
      %v1127 = vshrl.u32 %v1126, 7
      %v1128 = vsub.s32 0, %v1127
      %v1129 = vrot.slane %v1125, %v1128
      %v1130 = vmul.f32 %v1129, %v960
      %v1131 = vmul.f32 %v1129, %v961
      %v1132 = vmul.f32 %v1129, %v962
      %v1133 = vmul.f32 %v1129, %v963
      %v1134 = vadd.f32 %v1108, %v1130
      %v1135 = vadd.f32 %v1109, %v1131
      %v1136 = vadd.f32 %v1110, %v1132
      %v1137 = vadd.f32 %v1111, %v1133
      %1138 = vrot.lane.b32.xlu0 %v960, 112
      %v1139 = vpop.permute.xlu0 %1138
      %1140 = vrot.lane.b32.xlu0 %v961, 112
      %v1141 = vpop.permute.xlu0 %1140
      %1142 = vrot.lane.b32.xlu0 %v962, 112
      %v1143 = vpop.permute.xlu0 %1142
      %1144 = vrot.lane.b32.xlu0 %v963, 112
      %v1145 = vpop.permute.xlu0 %1144
      %v1146 = vsel %vm621, 0.0, %v1139
      %v1147 = vsel %vm621, 0.0, %v1141
      %v1148 = vsel %vm621, 0.0, %v1143
      %v1149 = vsel %vm621, 0.0, %v1145
      %v1150 = vld [vmem:[%s6 + $0xe] sm:$0x1]
      %v1151 = vlaneseq
      %v1152 = vshrl.u32 %v1151, 7
      %v1153 = vsub.s32 0, %v1152
      %v1154 = vrot.slane %v1150, %v1153
      %v1155 = vmul.f32 %v1154, %v1146
      %v1156 = vmul.f32 %v1154, %v1147
      %v1157 = vmul.f32 %v1154, %v1148
      %v1158 = vmul.f32 %v1154, %v1149
      %v1159 = vadd.f32 %v1121, %v1155
      %v1160 = vadd.f32 %v1122, %v1156
      %v1161 = vadd.f32 %v1123, %v1157
      %v1162 = vadd.f32 %v1124, %v1158
      %v1163 = vld [vmem:[%s670 + $0xe] sm:$0x1]
      %v1164 = vlaneseq
      %v1165 = vshrl.u32 %v1164, 7
      %v1166 = vsub.s32 0, %v1165
      %v1167 = vrot.slane %v1163, %v1166
      %v1168 = vmul.f32 %v1167, %v1146
      %v1169 = vmul.f32 %v1167, %v1147
      %v1170 = vmul.f32 %v1167, %v1148
      %v1171 = vmul.f32 %v1167, %v1149
      %v1172 = vadd.f32 %v1134, %v1168
      %v1173 = vadd.f32 %v1135, %v1169
      %v1174 = vadd.f32 %v1136, %v1170
      %v1175 = vadd.f32 %v1137, %v1171
      %v1176 = vrot.slane %v960, 1
      %v1177 = vrot.slane %v961, 1
      %v1178 = vrot.slane %v962, 1
      %v1179 = vrot.slane %v963, 1
      %v1180 = vsel %vm619, 0.0, %v1176
      %v1181 = vsel %vm619, 0.0, %v1177
      %v1182 = vsel %vm619, 0.0, %v1178
      %v1183 = vsel %vm619, 0.0, %v1179
      %1184 = vrot.lane.b32.xlu0 %v1180, 16
      %v1185 = vpop.permute.xlu0 %1184
      %1186 = vrot.lane.b32.xlu0 %v1181, 16
      %v1187 = vpop.permute.xlu0 %1186
      %1188 = vrot.lane.b32.xlu0 %v1182, 16
      %v1189 = vpop.permute.xlu0 %1188
      %1190 = vrot.lane.b32.xlu0 %v1183, 16
      %v1191 = vpop.permute.xlu0 %1190
      %v1192 = vsel %vm620, 0.0, %v1185
      %v1193 = vsel %vm620, 0.0, %v1187
      %v1194 = vsel %vm620, 0.0, %v1189
      %v1195 = vsel %vm620, 0.0, %v1191
      %v1196 = vld [vmem:[%s6 + $0xf] sm:$0x1]
      %v1197 = vlaneseq
      %v1198 = vshrl.u32 %v1197, 7
      %v1199 = vsub.s32 0, %v1198
      %v1200 = vrot.slane %v1196, %v1199
      %v1201 = vmul.f32 %v1200, %v1192
      %v1202 = vmul.f32 %v1200, %v1193
      %v1203 = vmul.f32 %v1200, %v1194
      %v1204 = vmul.f32 %v1200, %v1195
      %v1205 = vadd.f32 %v1159, %v1201
      %v1206 = vadd.f32 %v1160, %v1202
      %v1207 = vadd.f32 %v1161, %v1203
      %v1208 = vadd.f32 %v1162, %v1204
      %v1209 = vld [vmem:[%s670 + $0xf] sm:$0x1]
      %v1210 = vlaneseq
      %v1211 = vshrl.u32 %v1210, 7
      %v1212 = vsub.s32 0, %v1211
      %v1213 = vrot.slane %v1209, %v1212
      %v1214 = vmul.f32 %v1213, %v1192
      %v1215 = vmul.f32 %v1213, %v1193
      %v1216 = vmul.f32 %v1213, %v1194
      %v1217 = vmul.f32 %v1213, %v1195
      %v1218 = vadd.f32 %v1172, %v1214
      %v1219 = vadd.f32 %v1173, %v1215
      %v1220 = vadd.f32 %v1174, %v1216
      %v1221 = vadd.f32 %v1175, %v1217
      %v1222 = vld [vmem:[%s6 + $0x10] sm:$0x1]
      %v1223 = vlaneseq
      %v1224 = vshrl.u32 %v1223, 7
      %v1225 = vsub.s32 0, %v1224
      %v1226 = vrot.slane %v1222, %v1225
      %v1227 = vmul.f32 %v1226, %v1180
      %v1228 = vmul.f32 %v1226, %v1181
      %v1229 = vmul.f32 %v1226, %v1182
      %v1230 = vmul.f32 %v1226, %v1183
      %v1231 = vadd.f32 %v1205, %v1227
      %v1232 = vadd.f32 %v1206, %v1228
      %v1233 = vadd.f32 %v1207, %v1229
      %v1234 = vadd.f32 %v1208, %v1230
      %v1235 = vld [vmem:[%s670 + $0x10] sm:$0x1]
      %v1236 = vlaneseq
      %v1237 = vshrl.u32 %v1236, 7
      %v1238 = vsub.s32 0, %v1237
      %v1239 = vrot.slane %v1235, %v1238
      %v1240 = vmul.f32 %v1239, %v1180
      %v1241 = vmul.f32 %v1239, %v1181
      %v1242 = vmul.f32 %v1239, %v1182
      %v1243 = vmul.f32 %v1239, %v1183
      %v1244 = vadd.f32 %v1218, %v1240
      %v1245 = vadd.f32 %v1219, %v1241
      %v1246 = vadd.f32 %v1220, %v1242
      %v1247 = vadd.f32 %v1221, %v1243
      %1248 = vrot.lane.b32.xlu0 %v1180, 112
      %v1249 = vpop.permute.xlu0 %1248
      %1250 = vrot.lane.b32.xlu0 %v1181, 112
      %v1251 = vpop.permute.xlu0 %1250
      %1252 = vrot.lane.b32.xlu0 %v1182, 112
      %v1253 = vpop.permute.xlu0 %1252
      %1254 = vrot.lane.b32.xlu0 %v1183, 112
      %v1255 = vpop.permute.xlu0 %1254
      %v1256 = vsel %vm621, 0.0, %v1249
      %v1257 = vsel %vm621, 0.0, %v1251
      %v1258 = vsel %vm621, 0.0, %v1253
      %v1259 = vsel %vm621, 0.0, %v1255
      %v1260 = vld [vmem:[%s6 + $0x11] sm:$0x1]
      %v1261 = vlaneseq
      %v1262 = vshrl.u32 %v1261, 7
      %v1263 = vsub.s32 0, %v1262
      %v1264 = vrot.slane %v1260, %v1263
      %v1265 = vmul.f32 %v1264, %v1256
      %v1266 = vmul.f32 %v1264, %v1257
      %v1267 = vmul.f32 %v1264, %v1258
      %v1268 = vmul.f32 %v1264, %v1259
      %v1269 = vadd.f32 %v1231, %v1265
      %v1270 = vadd.f32 %v1232, %v1266
      %v1271 = vadd.f32 %v1233, %v1267
      %v1272 = vadd.f32 %v1234, %v1268
      %v1273 = vld [vmem:[%s670 + $0x11] sm:$0x1]
      %v1274 = vlaneseq
      %v1275 = vshrl.u32 %v1274, 7
      %v1276 = vsub.s32 0, %v1275
      %v1277 = vrot.slane %v1273, %v1276
      %v1278 = vmul.f32 %v1277, %v1256
      %v1279 = vmul.f32 %v1277, %v1257
      %v1280 = vmul.f32 %v1277, %v1258
      %v1281 = vmul.f32 %v1277, %v1259
      %v1282 = vadd.f32 %v1244, %v1278
      %v1283 = vadd.f32 %v1245, %v1279
      %v1284 = vadd.f32 %v1246, %v1280
      %v1285 = vadd.f32 %v1247, %v1281
      %s1286 = scalar_lea.vmem [#allocation2], 16
      %v1287 = vld [vmem:[%s1286] sm:$0xff]
      %v1288 = vld [vmem:[%s1286 + $0x8] sm:$0xff]
      %v1289 = vld [vmem:[%s1286 + $0x10] sm:$0xff]
      %v1290 = vld [vmem:[%s1286 + $0x18] sm:$0xff]
      %v1291 = vrot.slane %v1287, 7
      %v1292 = vrot.slane %v1288, 7
      %v1293 = vrot.slane %v1289, 7
      %v1294 = vrot.slane %v1290, 7
      %v1295 = vsel %vm618, 0.0, %v1291
      %v1296 = vsel %vm618, 0.0, %v1292
      %v1297 = vsel %vm618, 0.0, %v1293
      %v1298 = vsel %vm618, 0.0, %v1294
      %1299 = vrot.lane.b32.xlu0 %v1295, 16
      %v1300 = vpop.permute.xlu0 %1299
      %1301 = vrot.lane.b32.xlu0 %v1296, 16
      %v1302 = vpop.permute.xlu0 %1301
      %1303 = vrot.lane.b32.xlu0 %v1297, 16
      %v1304 = vpop.permute.xlu0 %1303
      %1305 = vrot.lane.b32.xlu0 %v1298, 16
      %v1306 = vpop.permute.xlu0 %1305
      %v1307 = vsel %vm620, 0.0, %v1300
      %v1308 = vsel %vm620, 0.0, %v1302
      %v1309 = vsel %vm620, 0.0, %v1304
      %v1310 = vsel %vm620, 0.0, %v1306
      %v1311 = vld [vmem:[%s6 + $0x12] sm:$0x1]
      %v1312 = vlaneseq
      %v1313 = vshrl.u32 %v1312, 7
      %v1314 = vsub.s32 0, %v1313
      %v1315 = vrot.slane %v1311, %v1314
      %v1316 = vmul.f32 %v1315, %v1307
      %v1317 = vmul.f32 %v1315, %v1308
      %v1318 = vmul.f32 %v1315, %v1309
      %v1319 = vmul.f32 %v1315, %v1310
      %v1320 = vadd.f32 %v1269, %v1316
      %v1321 = vadd.f32 %v1270, %v1317
      %v1322 = vadd.f32 %v1271, %v1318
      %v1323 = vadd.f32 %v1272, %v1319
      %v1324 = vld [vmem:[%s670 + $0x12] sm:$0x1]
      %v1325 = vlaneseq
      %v1326 = vshrl.u32 %v1325, 7
      %v1327 = vsub.s32 0, %v1326
      %v1328 = vrot.slane %v1324, %v1327
      %v1329 = vmul.f32 %v1328, %v1307
      %v1330 = vmul.f32 %v1328, %v1308
      %v1331 = vmul.f32 %v1328, %v1309
      %v1332 = vmul.f32 %v1328, %v1310
      %v1333 = vadd.f32 %v1282, %v1329
      %v1334 = vadd.f32 %v1283, %v1330
      %v1335 = vadd.f32 %v1284, %v1331
      %v1336 = vadd.f32 %v1285, %v1332
      %v1337 = vld [vmem:[%s6 + $0x13] sm:$0x1]
      %v1338 = vlaneseq
      %v1339 = vshrl.u32 %v1338, 7
      %v1340 = vsub.s32 0, %v1339
      %v1341 = vrot.slane %v1337, %v1340
      %v1342 = vmul.f32 %v1341, %v1295
      %v1343 = vmul.f32 %v1341, %v1296
      %v1344 = vmul.f32 %v1341, %v1297
      %v1345 = vmul.f32 %v1341, %v1298
      %v1346 = vadd.f32 %v1320, %v1342
      %v1347 = vadd.f32 %v1321, %v1343
      %v1348 = vadd.f32 %v1322, %v1344
      %v1349 = vadd.f32 %v1323, %v1345
      %v1350 = vld [vmem:[%s670 + $0x13] sm:$0x1]
      %v1351 = vlaneseq
      %v1352 = vshrl.u32 %v1351, 7
      %v1353 = vsub.s32 0, %v1352
      %v1354 = vrot.slane %v1350, %v1353
      %v1355 = vmul.f32 %v1354, %v1295
      %v1356 = vmul.f32 %v1354, %v1296
      %v1357 = vmul.f32 %v1354, %v1297
      %v1358 = vmul.f32 %v1354, %v1298
      %v1359 = vadd.f32 %v1333, %v1355
      %v1360 = vadd.f32 %v1334, %v1356
      %v1361 = vadd.f32 %v1335, %v1357
      %v1362 = vadd.f32 %v1336, %v1358
      %1363 = vrot.lane.b32.xlu0 %v1295, 112
      %v1364 = vpop.permute.xlu0 %1363
      %1365 = vrot.lane.b32.xlu0 %v1296, 112
      %v1366 = vpop.permute.xlu0 %1365
      %1367 = vrot.lane.b32.xlu0 %v1297, 112
      %v1368 = vpop.permute.xlu0 %1367
      %1369 = vrot.lane.b32.xlu0 %v1298, 112
      %v1370 = vpop.permute.xlu0 %1369
      %v1371 = vsel %vm621, 0.0, %v1364
      %v1372 = vsel %vm621, 0.0, %v1366
      %v1373 = vsel %vm621, 0.0, %v1368
      %v1374 = vsel %vm621, 0.0, %v1370
      %v1375 = vld [vmem:[%s6 + $0x14] sm:$0x1]
      %v1376 = vlaneseq
      %v1377 = vshrl.u32 %v1376, 7
      %v1378 = vsub.s32 0, %v1377
      %v1379 = vrot.slane %v1375, %v1378
      %v1380 = vmul.f32 %v1379, %v1371
      %v1381 = vmul.f32 %v1379, %v1372
      %v1382 = vmul.f32 %v1379, %v1373
      %v1383 = vmul.f32 %v1379, %v1374
      %v1384 = vadd.f32 %v1346, %v1380
      %v1385 = vadd.f32 %v1347, %v1381
      %v1386 = vadd.f32 %v1348, %v1382
      %v1387 = vadd.f32 %v1349, %v1383
      %v1388 = vld [vmem:[%s670 + $0x14] sm:$0x1]
      %v1389 = vlaneseq
      %v1390 = vshrl.u32 %v1389, 7
      %v1391 = vsub.s32 0, %v1390
      %v1392 = vrot.slane %v1388, %v1391
      %v1393 = vmul.f32 %v1392, %v1371
      %v1394 = vmul.f32 %v1392, %v1372
      %v1395 = vmul.f32 %v1392, %v1373
      %v1396 = vmul.f32 %v1392, %v1374
      %v1397 = vadd.f32 %v1359, %v1393
      %v1398 = vadd.f32 %v1360, %v1394
      %v1399 = vadd.f32 %v1361, %v1395
      %v1400 = vadd.f32 %v1362, %v1396
      %1401 = vrot.lane.b32.xlu0 %v1287, 16
      %v1402 = vpop.permute.xlu0 %1401
      %1403 = vrot.lane.b32.xlu0 %v1288, 16
      %v1404 = vpop.permute.xlu0 %1403
      %1405 = vrot.lane.b32.xlu0 %v1289, 16
      %v1406 = vpop.permute.xlu0 %1405
      %1407 = vrot.lane.b32.xlu0 %v1290, 16
      %v1408 = vpop.permute.xlu0 %1407
      %v1409 = vsel %vm620, 0.0, %v1402
      %v1410 = vsel %vm620, 0.0, %v1404
      %v1411 = vsel %vm620, 0.0, %v1406
      %v1412 = vsel %vm620, 0.0, %v1408
      %v1413 = vld [vmem:[%s6 + $0x15] sm:$0x1]
      %v1414 = vlaneseq
      %v1415 = vshrl.u32 %v1414, 7
      %v1416 = vsub.s32 0, %v1415
      %v1417 = vrot.slane %v1413, %v1416
      %v1418 = vmul.f32 %v1417, %v1409
      %v1419 = vmul.f32 %v1417, %v1410
      %v1420 = vmul.f32 %v1417, %v1411
      %v1421 = vmul.f32 %v1417, %v1412
      %v1422 = vadd.f32 %v1384, %v1418
      %v1423 = vadd.f32 %v1385, %v1419
      %v1424 = vadd.f32 %v1386, %v1420
      %v1425 = vadd.f32 %v1387, %v1421
      %v1426 = vld [vmem:[%s670 + $0x15] sm:$0x1]
      %v1427 = vlaneseq
      %v1428 = vshrl.u32 %v1427, 7
      %v1429 = vsub.s32 0, %v1428
      %v1430 = vrot.slane %v1426, %v1429
      %v1431 = vmul.f32 %v1430, %v1409
      %v1432 = vmul.f32 %v1430, %v1410
      %v1433 = vmul.f32 %v1430, %v1411
      %v1434 = vmul.f32 %v1430, %v1412
      %v1435 = vadd.f32 %v1397, %v1431
      %v1436 = vadd.f32 %v1398, %v1432
      %v1437 = vadd.f32 %v1399, %v1433
      %v1438 = vadd.f32 %v1400, %v1434
      %v1439 = vld [vmem:[%s6 + $0x16] sm:$0x1]
      %v1440 = vlaneseq
      %v1441 = vshrl.u32 %v1440, 7
      %v1442 = vsub.s32 0, %v1441
      %v1443 = vrot.slane %v1439, %v1442
      %v1444 = vmul.f32 %v1443, %v1287
      %v1445 = vmul.f32 %v1443, %v1288
      %v1446 = vmul.f32 %v1443, %v1289
      %v1447 = vmul.f32 %v1443, %v1290
      %v1448 = vadd.f32 %v1422, %v1444
      %v1449 = vadd.f32 %v1423, %v1445
      %v1450 = vadd.f32 %v1424, %v1446
      %v1451 = vadd.f32 %v1425, %v1447
      %v1452 = vld [vmem:[%s670 + $0x16] sm:$0x1]
      %v1453 = vlaneseq
      %v1454 = vshrl.u32 %v1453, 7
      %v1455 = vsub.s32 0, %v1454
      %v1456 = vrot.slane %v1452, %v1455
      %v1457 = vmul.f32 %v1456, %v1287
      %v1458 = vmul.f32 %v1456, %v1288
      %v1459 = vmul.f32 %v1456, %v1289
      %v1460 = vmul.f32 %v1456, %v1290
      %v1461 = vadd.f32 %v1435, %v1457
      %v1462 = vadd.f32 %v1436, %v1458
      %v1463 = vadd.f32 %v1437, %v1459
      %v1464 = vadd.f32 %v1438, %v1460
      %1465 = vrot.lane.b32.xlu0 %v1287, 112
      %v1466 = vpop.permute.xlu0 %1465
      %1467 = vrot.lane.b32.xlu0 %v1288, 112
      %v1468 = vpop.permute.xlu0 %1467
      %1469 = vrot.lane.b32.xlu0 %v1289, 112
      %v1470 = vpop.permute.xlu0 %1469
      %1471 = vrot.lane.b32.xlu0 %v1290, 112
      %v1472 = vpop.permute.xlu0 %1471
      %v1473 = vsel %vm621, 0.0, %v1466
      %v1474 = vsel %vm621, 0.0, %v1468
      %v1475 = vsel %vm621, 0.0, %v1470
      %v1476 = vsel %vm621, 0.0, %v1472
      %v1477 = vld [vmem:[%s6 + $0x17] sm:$0x1]
      %v1478 = vlaneseq
      %v1479 = vshrl.u32 %v1478, 7
      %v1480 = vsub.s32 0, %v1479
      %v1481 = vrot.slane %v1477, %v1480
      %v1482 = vmul.f32 %v1481, %v1473
      %v1483 = vmul.f32 %v1481, %v1474
      %v1484 = vmul.f32 %v1481, %v1475
      %v1485 = vmul.f32 %v1481, %v1476
      %v1486 = vadd.f32 %v1448, %v1482
      %v1487 = vadd.f32 %v1449, %v1483
      %v1488 = vadd.f32 %v1450, %v1484
      %v1489 = vadd.f32 %v1451, %v1485
      %v1490 = vld [vmem:[%s670 + $0x17] sm:$0x1]
      %v1491 = vlaneseq
      %v1492 = vshrl.u32 %v1491, 7
      %v1493 = vsub.s32 0, %v1492
      %v1494 = vrot.slane %v1490, %v1493
      %v1495 = vmul.f32 %v1494, %v1473
      %v1496 = vmul.f32 %v1494, %v1474
      %v1497 = vmul.f32 %v1494, %v1475
      %v1498 = vmul.f32 %v1494, %v1476
      %v1499 = vadd.f32 %v1461, %v1495
      %v1500 = vadd.f32 %v1462, %v1496
      %v1501 = vadd.f32 %v1463, %v1497
      %v1502 = vadd.f32 %v1464, %v1498
      %v1503 = vrot.slane %v1287, 1
      %v1504 = vrot.slane %v1288, 1
      %v1505 = vrot.slane %v1289, 1
      %v1506 = vrot.slane %v1290, 1
      %v1507 = vsel %vm619, 0.0, %v1503
      %v1508 = vsel %vm619, 0.0, %v1504
      %v1509 = vsel %vm619, 0.0, %v1505
      %v1510 = vsel %vm619, 0.0, %v1506
      %1511 = vrot.lane.b32.xlu0 %v1507, 16
      %v1512 = vpop.permute.xlu0 %1511
      %1513 = vrot.lane.b32.xlu0 %v1508, 16
      %v1514 = vpop.permute.xlu0 %1513
      %1515 = vrot.lane.b32.xlu0 %v1509, 16
      %v1516 = vpop.permute.xlu0 %1515
      %1517 = vrot.lane.b32.xlu0 %v1510, 16
      %v1518 = vpop.permute.xlu0 %1517
      %v1519 = vsel %vm620, 0.0, %v1512
      %v1520 = vsel %vm620, 0.0, %v1514
      %v1521 = vsel %vm620, 0.0, %v1516
      %v1522 = vsel %vm620, 0.0, %v1518
      %v1523 = vld [vmem:[%s6 + $0x18] sm:$0x1]
      %v1524 = vlaneseq
      %v1525 = vshrl.u32 %v1524, 7
      %v1526 = vsub.s32 0, %v1525
      %v1527 = vrot.slane %v1523, %v1526
      %v1528 = vmul.f32 %v1527, %v1519
      %v1529 = vmul.f32 %v1527, %v1520
      %v1530 = vmul.f32 %v1527, %v1521
      %v1531 = vmul.f32 %v1527, %v1522
      %v1532 = vadd.f32 %v1486, %v1528
      %v1533 = vadd.f32 %v1487, %v1529
      %v1534 = vadd.f32 %v1488, %v1530
      %v1535 = vadd.f32 %v1489, %v1531
      %v1536 = vld [vmem:[%s670 + $0x18] sm:$0x1]
      %v1537 = vlaneseq
      %v1538 = vshrl.u32 %v1537, 7
      %v1539 = vsub.s32 0, %v1538
      %v1540 = vrot.slane %v1536, %v1539
      %v1541 = vmul.f32 %v1540, %v1519
      %v1542 = vmul.f32 %v1540, %v1520
      %v1543 = vmul.f32 %v1540, %v1521
      %v1544 = vmul.f32 %v1540, %v1522
      %v1545 = vadd.f32 %v1499, %v1541
      %v1546 = vadd.f32 %v1500, %v1542
      %v1547 = vadd.f32 %v1501, %v1543
      %v1548 = vadd.f32 %v1502, %v1544
      %v1549 = vld [vmem:[%s6 + $0x19] sm:$0x1]
      %v1550 = vlaneseq
      %v1551 = vshrl.u32 %v1550, 7
      %v1552 = vsub.s32 0, %v1551
      %v1553 = vrot.slane %v1549, %v1552
      %v1554 = vmul.f32 %v1553, %v1507
      %v1555 = vmul.f32 %v1553, %v1508
      %v1556 = vmul.f32 %v1553, %v1509
      %v1557 = vmul.f32 %v1553, %v1510
      %v1558 = vadd.f32 %v1532, %v1554
      %v1559 = vadd.f32 %v1533, %v1555
      %v1560 = vadd.f32 %v1534, %v1556
      %v1561 = vadd.f32 %v1535, %v1557
      %v1562 = vld [vmem:[%s670 + $0x19] sm:$0x1]
      %v1563 = vlaneseq
      %v1564 = vshrl.u32 %v1563, 7
      %v1565 = vsub.s32 0, %v1564
      %v1566 = vrot.slane %v1562, %v1565
      %v1567 = vmul.f32 %v1566, %v1507
      %v1568 = vmul.f32 %v1566, %v1508
      %v1569 = vmul.f32 %v1566, %v1509
      %v1570 = vmul.f32 %v1566, %v1510
      %v1571 = vadd.f32 %v1545, %v1567
      %v1572 = vadd.f32 %v1546, %v1568
      %v1573 = vadd.f32 %v1547, %v1569
      %v1574 = vadd.f32 %v1548, %v1570
      %1575 = vrot.lane.b32.xlu0 %v1507, 112
      %v1576 = vpop.permute.xlu0 %1575
      %1577 = vrot.lane.b32.xlu0 %v1508, 112
      %v1578 = vpop.permute.xlu0 %1577
      %1579 = vrot.lane.b32.xlu0 %v1509, 112
      %v1580 = vpop.permute.xlu0 %1579
      %1581 = vrot.lane.b32.xlu0 %v1510, 112
      %v1582 = vpop.permute.xlu0 %1581
      %v1583 = vsel %vm621, 0.0, %v1576
      %v1584 = vsel %vm621, 0.0, %v1578
      %v1585 = vsel %vm621, 0.0, %v1580
      %v1586 = vsel %vm621, 0.0, %v1582
      %v1587 = vld [vmem:[%s6 + $0x1a] sm:$0x1]
      %v1588 = vlaneseq
      %v1589 = vshrl.u32 %v1588, 7
      %v1590 = vsub.s32 0, %v1589
      %v1591 = vrot.slane %v1587, %v1590
      %v1592 = vmul.f32 %v1591, %v1583
      %v1593 = vmul.f32 %v1591, %v1584
      %v1594 = vmul.f32 %v1591, %v1585
      %v1595 = vmul.f32 %v1591, %v1586
      %v1596 = vadd.f32 %v1558, %v1592
      %v1597 = vadd.f32 %v1559, %v1593
      %v1598 = vadd.f32 %v1560, %v1594
      %v1599 = vadd.f32 %v1561, %v1595
      %v1600 = vld [vmem:[%s670 + $0x1a] sm:$0x1]
      %v1601 = vlaneseq
      %v1602 = vshrl.u32 %v1601, 7
      %v1603 = vsub.s32 0, %v1602
      %v1604 = vrot.slane %v1600, %v1603
      %v1605 = vmul.f32 %v1604, %v1583
      %v1606 = vmul.f32 %v1604, %v1584
      %v1607 = vmul.f32 %v1604, %v1585
      %v1608 = vmul.f32 %v1604, %v1586
      %v1609 = vadd.f32 %v1571, %v1605
      %v1610 = vadd.f32 %v1572, %v1606
      %v1611 = vadd.f32 %v1573, %v1607
      %v1612 = vadd.f32 %v1574, %v1608
      %v1613 = vld [vmem:[%s7] sm:$0x1]
      %v1614 = vlaneseq
      %v1615 = vshrl.u32 %v1614, 7
      %v1616 = vsub.s32 0, %v1615
      %v1617 = vrot.slane %v1613, %v1616
      %v1618 = vmul.f32 %v1596, %v1617
      %v1619 = vmul.f32 %v1597, %v1617
      %v1620 = vmul.f32 %v1598, %v1617
      %v1621 = vmul.f32 %v1599, %v1617
      %v1622 = vld [vmem:[%s7 + $0x1] sm:$0x1]
      %v1623 = vlaneseq
      %v1624 = vshrl.u32 %v1623, 7
      %v1625 = vsub.s32 0, %v1624
      %v1626 = vrot.slane %v1622, %v1625
      %v1627 = vadd.f32 %v1618, %v1626
      %v1628 = vadd.f32 %v1619, %v1626
      %v1629 = vadd.f32 %v1620, %v1626
      %v1630 = vadd.f32 %v1621, %v1626
      %v1631 = vmax.f32 %v1627, 0.0
      %v1632 = vmax.f32 %v1628, 0.0
      %v1633 = vmax.f32 %v1629, 0.0
      %v1634 = vmax.f32 %v1630, 0.0
      %v1635 = vld [vmem:[%s7 + $0x2] sm:$0x1]
      %v1636 = vlaneseq
      %v1637 = vshrl.u32 %v1636, 7
      %v1638 = vsub.s32 0, %v1637
      %v1639 = vrot.slane %v1635, %v1638
      %v1640 = vmul.f32 %v1609, %v1639
      %v1641 = vmul.f32 %v1610, %v1639
      %v1642 = vmul.f32 %v1611, %v1639
      %v1643 = vmul.f32 %v1612, %v1639
      %v1644 = vld [vmem:[%s7 + $0x3] sm:$0x1]
      %v1645 = vlaneseq
      %v1646 = vshrl.u32 %v1645, 7
      %v1647 = vsub.s32 0, %v1646
      %v1648 = vrot.slane %v1644, %v1647
      %v1649 = vadd.f32 %v1640, %v1648
      %v1650 = vadd.f32 %v1641, %v1648
      %v1651 = vadd.f32 %v1642, %v1648
      %v1652 = vadd.f32 %v1643, %v1648
      %v1653 = vmax.f32 %v1649, 0.0
      %v1654 = vmax.f32 %v1650, 0.0
      %v1655 = vmax.f32 %v1651, 0.0
      %v1656 = vmax.f32 %v1652, 0.0
      %v1657 = vrot.slane %v1631, 7
      %v1658 = vrot.slane %v1632, 7
      %v1659 = vrot.slane %v1633, 7
      %v1660 = vrot.slane %v1634, 7
      %v1661 = vsel %vm618, 0.0, %v1657
      %v1662 = vsel %vm618, 0.0, %v1658
      %v1663 = vsel %vm618, 0.0, %v1659
      %v1664 = vsel %vm618, 0.0, %v1660
      %v1665 = vrot.slane %v1653, 7
      %v1666 = vrot.slane %v1654, 7
      %v1667 = vrot.slane %v1655, 7
      %v1668 = vrot.slane %v1656, 7
      %v1669 = vsel %vm618, 0.0, %v1665
      %v1670 = vsel %vm618, 0.0, %v1666
      %v1671 = vsel %vm618, 0.0, %v1667
      %v1672 = vsel %vm618, 0.0, %v1668
      %v1673 = vld [vmem:[%s8] sm:$0x1]
      %1674 = vrot.lane.b32.xlu0 %v1661, 16
      %v1675 = vpop.permute.xlu0 %1674
      %1676 = vrot.lane.b32.xlu0 %v1662, 16
      %v1677 = vpop.permute.xlu0 %1676
      %1678 = vrot.lane.b32.xlu0 %v1663, 16
      %v1679 = vpop.permute.xlu0 %1678
      %1680 = vrot.lane.b32.xlu0 %v1664, 16
      %v1681 = vpop.permute.xlu0 %1680
      %v1682 = vsel %vm620, 0.0, %v1675
      %v1683 = vsel %vm620, 0.0, %v1677
      %v1684 = vsel %vm620, 0.0, %v1679
      %v1685 = vsel %vm620, 0.0, %v1681
      %v1686 = vlaneseq
      %v1687 = vshrl.u32 %v1686, 7
      %v1688 = vsub.s32 0, %v1687
      %v1689 = vrot.slane %v1673, %v1688
      %v1690 = vmul.f32 %v1689, %v1682
      %v1691 = vmul.f32 %v1689, %v1683
      %v1692 = vmul.f32 %v1689, %v1684
      %v1693 = vmul.f32 %v1689, %v1685
      %v1694 = vadd.f32 %v333, %v1690
      %v1695 = vadd.f32 %v334, %v1691
      %v1696 = vadd.f32 %v335, %v1692
      %v1697 = vadd.f32 %v336, %v1693
      %s1698 = scalar_lea.vmem %s8, 16
      %v1699 = vld [vmem:[%s1698] sm:$0x1]
      %1700 = vrot.lane.b32.xlu0 %v1669, 16
      %v1701 = vpop.permute.xlu0 %1700
      %1702 = vrot.lane.b32.xlu0 %v1670, 16
      %v1703 = vpop.permute.xlu0 %1702
      %1704 = vrot.lane.b32.xlu0 %v1671, 16
      %v1705 = vpop.permute.xlu0 %1704
      %1706 = vrot.lane.b32.xlu0 %v1672, 16
      %v1707 = vpop.permute.xlu0 %1706
      %v1708 = vsel %vm620, 0.0, %v1701
      %v1709 = vsel %vm620, 0.0, %v1703
      %v1710 = vsel %vm620, 0.0, %v1705
      %v1711 = vsel %vm620, 0.0, %v1707
      %v1712 = vlaneseq
      %v1713 = vshrl.u32 %v1712, 7
      %v1714 = vsub.s32 0, %v1713
      %v1715 = vrot.slane %v1699, %v1714
      %v1716 = vmul.f32 %v1715, %v1708
      %v1717 = vmul.f32 %v1715, %v1709
      %v1718 = vmul.f32 %v1715, %v1710
      %v1719 = vmul.f32 %v1715, %v1711
      %v1720 = vadd.f32 %v1694, %v1716
      %v1721 = vadd.f32 %v1695, %v1717
      %v1722 = vadd.f32 %v1696, %v1718
      %v1723 = vadd.f32 %v1697, %v1719
      %v1724 = vld [vmem:[%s8 + $0x1] sm:$0x1]
      %v1725 = vlaneseq
      %v1726 = vshrl.u32 %v1725, 7
      %v1727 = vsub.s32 0, %v1726
      %v1728 = vrot.slane %v1724, %v1727
      %v1729 = vmul.f32 %v1728, %v1661
      %v1730 = vmul.f32 %v1728, %v1662
      %v1731 = vmul.f32 %v1728, %v1663
      %v1732 = vmul.f32 %v1728, %v1664
      %v1733 = vadd.f32 %v1720, %v1729
      %v1734 = vadd.f32 %v1721, %v1730
      %v1735 = vadd.f32 %v1722, %v1731
      %v1736 = vadd.f32 %v1723, %v1732
      %v1737 = vld [vmem:[%s1698 + $0x1] sm:$0x1]
      %v1738 = vlaneseq
      %v1739 = vshrl.u32 %v1738, 7
      %v1740 = vsub.s32 0, %v1739
      %v1741 = vrot.slane %v1737, %v1740
      %v1742 = vmul.f32 %v1741, %v1669
      %v1743 = vmul.f32 %v1741, %v1670
      %v1744 = vmul.f32 %v1741, %v1671
      %v1745 = vmul.f32 %v1741, %v1672
      %v1746 = vadd.f32 %v1733, %v1742
      %v1747 = vadd.f32 %v1734, %v1743
      %v1748 = vadd.f32 %v1735, %v1744
      %v1749 = vadd.f32 %v1736, %v1745
      %v1750 = vld [vmem:[%s8 + $0x2] sm:$0x1]
      %1751 = vrot.lane.b32.xlu0 %v1661, 112
      %v1752 = vpop.permute.xlu0 %1751
      %1753 = vrot.lane.b32.xlu0 %v1662, 112
      %v1754 = vpop.permute.xlu0 %1753
      %1755 = vrot.lane.b32.xlu0 %v1663, 112
      %v1756 = vpop.permute.xlu0 %1755
      %1757 = vrot.lane.b32.xlu0 %v1664, 112
      %v1758 = vpop.permute.xlu0 %1757
      %v1759 = vsel %vm621, 0.0, %v1752
      %v1760 = vsel %vm621, 0.0, %v1754
      %v1761 = vsel %vm621, 0.0, %v1756
      %v1762 = vsel %vm621, 0.0, %v1758
      %v1763 = vlaneseq
      %v1764 = vshrl.u32 %v1763, 7
      %v1765 = vsub.s32 0, %v1764
      %v1766 = vrot.slane %v1750, %v1765
      %v1767 = vmul.f32 %v1766, %v1759
      %v1768 = vmul.f32 %v1766, %v1760
      %v1769 = vmul.f32 %v1766, %v1761
      %v1770 = vmul.f32 %v1766, %v1762
      %v1771 = vadd.f32 %v1746, %v1767
      %v1772 = vadd.f32 %v1747, %v1768
      %v1773 = vadd.f32 %v1748, %v1769
      %v1774 = vadd.f32 %v1749, %v1770
      %v1775 = vld [vmem:[%s1698 + $0x2] sm:$0x1]
      %1776 = vrot.lane.b32.xlu0 %v1669, 112
      %v1777 = vpop.permute.xlu0 %1776
      %1778 = vrot.lane.b32.xlu0 %v1670, 112
      %v1779 = vpop.permute.xlu0 %1778
      %1780 = vrot.lane.b32.xlu0 %v1671, 112
      %v1781 = vpop.permute.xlu0 %1780
      %1782 = vrot.lane.b32.xlu0 %v1672, 112
      %v1783 = vpop.permute.xlu0 %1782
      %v1784 = vsel %vm621, 0.0, %v1777
      %v1785 = vsel %vm621, 0.0, %v1779
      %v1786 = vsel %vm621, 0.0, %v1781
      %v1787 = vsel %vm621, 0.0, %v1783
      %v1788 = vlaneseq
      %v1789 = vshrl.u32 %v1788, 7
      %v1790 = vsub.s32 0, %v1789
      %v1791 = vrot.slane %v1775, %v1790
      %v1792 = vmul.f32 %v1791, %v1784
      %v1793 = vmul.f32 %v1791, %v1785
      %v1794 = vmul.f32 %v1791, %v1786
      %v1795 = vmul.f32 %v1791, %v1787
      %v1796 = vadd.f32 %v1771, %v1792
      %v1797 = vadd.f32 %v1772, %v1793
      %v1798 = vadd.f32 %v1773, %v1794
      %v1799 = vadd.f32 %v1774, %v1795
      %v1800 = vld [vmem:[%s8 + $0x3] sm:$0x1]
      %1801 = vrot.lane.b32.xlu0 %v1631, 16
      %v1802 = vpop.permute.xlu0 %1801
      %1803 = vrot.lane.b32.xlu0 %v1632, 16
      %v1804 = vpop.permute.xlu0 %1803
      %1805 = vrot.lane.b32.xlu0 %v1633, 16
      %v1806 = vpop.permute.xlu0 %1805
      %1807 = vrot.lane.b32.xlu0 %v1634, 16
      %v1808 = vpop.permute.xlu0 %1807
      %v1809 = vsel %vm620, 0.0, %v1802
      %v1810 = vsel %vm620, 0.0, %v1804
      %v1811 = vsel %vm620, 0.0, %v1806
      %v1812 = vsel %vm620, 0.0, %v1808
      %v1813 = vlaneseq
      %v1814 = vshrl.u32 %v1813, 7
      %v1815 = vsub.s32 0, %v1814
      %v1816 = vrot.slane %v1800, %v1815
      %v1817 = vmul.f32 %v1816, %v1809
      %v1818 = vmul.f32 %v1816, %v1810
      %v1819 = vmul.f32 %v1816, %v1811
      %v1820 = vmul.f32 %v1816, %v1812
      %v1821 = vadd.f32 %v1796, %v1817
      %v1822 = vadd.f32 %v1797, %v1818
      %v1823 = vadd.f32 %v1798, %v1819
      %v1824 = vadd.f32 %v1799, %v1820
      %v1825 = vld [vmem:[%s1698 + $0x3] sm:$0x1]
      %1826 = vrot.lane.b32.xlu0 %v1653, 16
      %v1827 = vpop.permute.xlu0 %1826
      %1828 = vrot.lane.b32.xlu0 %v1654, 16
      %v1829 = vpop.permute.xlu0 %1828
      %1830 = vrot.lane.b32.xlu0 %v1655, 16
      %v1831 = vpop.permute.xlu0 %1830
      %1832 = vrot.lane.b32.xlu0 %v1656, 16
      %v1833 = vpop.permute.xlu0 %1832
      %v1834 = vsel %vm620, 0.0, %v1827
      %v1835 = vsel %vm620, 0.0, %v1829
      %v1836 = vsel %vm620, 0.0, %v1831
      %v1837 = vsel %vm620, 0.0, %v1833
      %v1838 = vlaneseq
      %v1839 = vshrl.u32 %v1838, 7
      %v1840 = vsub.s32 0, %v1839
      %v1841 = vrot.slane %v1825, %v1840
      %v1842 = vmul.f32 %v1841, %v1834
      %v1843 = vmul.f32 %v1841, %v1835
      %v1844 = vmul.f32 %v1841, %v1836
      %v1845 = vmul.f32 %v1841, %v1837
      %v1846 = vadd.f32 %v1821, %v1842
      %v1847 = vadd.f32 %v1822, %v1843
      %v1848 = vadd.f32 %v1823, %v1844
      %v1849 = vadd.f32 %v1824, %v1845
      %v1850 = vld [vmem:[%s8 + $0x4] sm:$0x1]
      %v1851 = vlaneseq
      %v1852 = vshrl.u32 %v1851, 7
      %v1853 = vsub.s32 0, %v1852
      %v1854 = vrot.slane %v1850, %v1853
      %v1855 = vmul.f32 %v1854, %v1631
      %v1856 = vmul.f32 %v1854, %v1632
      %v1857 = vmul.f32 %v1854, %v1633
      %v1858 = vmul.f32 %v1854, %v1634
      %v1859 = vadd.f32 %v1846, %v1855
      %v1860 = vadd.f32 %v1847, %v1856
      %v1861 = vadd.f32 %v1848, %v1857
      %v1862 = vadd.f32 %v1849, %v1858
      %v1863 = vld [vmem:[%s1698 + $0x4] sm:$0x1]
      %v1864 = vlaneseq
      %v1865 = vshrl.u32 %v1864, 7
      %v1866 = vsub.s32 0, %v1865
      %v1867 = vrot.slane %v1863, %v1866
      %v1868 = vmul.f32 %v1867, %v1653
      %v1869 = vmul.f32 %v1867, %v1654
      %v1870 = vmul.f32 %v1867, %v1655
      %v1871 = vmul.f32 %v1867, %v1656
      %v1872 = vadd.f32 %v1859, %v1868
      %v1873 = vadd.f32 %v1860, %v1869
      %v1874 = vadd.f32 %v1861, %v1870
      %v1875 = vadd.f32 %v1862, %v1871
      %v1876 = vld [vmem:[%s8 + $0x5] sm:$0x1]
      %1877 = vrot.lane.b32.xlu0 %v1631, 112
      %v1878 = vpop.permute.xlu0 %1877
      %1879 = vrot.lane.b32.xlu0 %v1632, 112
      %v1880 = vpop.permute.xlu0 %1879
      %1881 = vrot.lane.b32.xlu0 %v1633, 112
      %v1882 = vpop.permute.xlu0 %1881
      %1883 = vrot.lane.b32.xlu0 %v1634, 112
      %v1884 = vpop.permute.xlu0 %1883
      %v1885 = vsel %vm621, 0.0, %v1878
      %v1886 = vsel %vm621, 0.0, %v1880
      %v1887 = vsel %vm621, 0.0, %v1882
      %v1888 = vsel %vm621, 0.0, %v1884
      %v1889 = vlaneseq
      %v1890 = vshrl.u32 %v1889, 7
      %v1891 = vsub.s32 0, %v1890
      %v1892 = vrot.slane %v1876, %v1891
      %v1893 = vmul.f32 %v1892, %v1885
      %v1894 = vmul.f32 %v1892, %v1886
      %v1895 = vmul.f32 %v1892, %v1887
      %v1896 = vmul.f32 %v1892, %v1888
      %v1897 = vadd.f32 %v1872, %v1893
      %v1898 = vadd.f32 %v1873, %v1894
      %v1899 = vadd.f32 %v1874, %v1895
      %v1900 = vadd.f32 %v1875, %v1896
      %v1901 = vld [vmem:[%s1698 + $0x5] sm:$0x1]
      %1902 = vrot.lane.b32.xlu0 %v1653, 112
      %v1903 = vpop.permute.xlu0 %1902
      %1904 = vrot.lane.b32.xlu0 %v1654, 112
      %v1905 = vpop.permute.xlu0 %1904
      %1906 = vrot.lane.b32.xlu0 %v1655, 112
      %v1907 = vpop.permute.xlu0 %1906
      %1908 = vrot.lane.b32.xlu0 %v1656, 112
      %v1909 = vpop.permute.xlu0 %1908
      %v1910 = vsel %vm621, 0.0, %v1903
      %v1911 = vsel %vm621, 0.0, %v1905
      %v1912 = vsel %vm621, 0.0, %v1907
      %v1913 = vsel %vm621, 0.0, %v1909
      %v1914 = vlaneseq
      %v1915 = vshrl.u32 %v1914, 7
      %v1916 = vsub.s32 0, %v1915
      %v1917 = vrot.slane %v1901, %v1916
      %v1918 = vmul.f32 %v1917, %v1910
      %v1919 = vmul.f32 %v1917, %v1911
      %v1920 = vmul.f32 %v1917, %v1912
      %v1921 = vmul.f32 %v1917, %v1913
      %v1922 = vadd.f32 %v1897, %v1918
      %v1923 = vadd.f32 %v1898, %v1919
      %v1924 = vadd.f32 %v1899, %v1920
      %v1925 = vadd.f32 %v1900, %v1921
      %v1926 = vrot.slane %v1631, 1
      %v1927 = vrot.slane %v1632, 1
      %v1928 = vrot.slane %v1633, 1
      %v1929 = vrot.slane %v1634, 1
      %v1930 = vsel %vm619, 0.0, %v1926
      %v1931 = vsel %vm619, 0.0, %v1927
      %v1932 = vsel %vm619, 0.0, %v1928
      %v1933 = vsel %vm619, 0.0, %v1929
      %v1934 = vrot.slane %v1653, 1
      %v1935 = vrot.slane %v1654, 1
      %v1936 = vrot.slane %v1655, 1
      %v1937 = vrot.slane %v1656, 1
      %v1938 = vsel %vm619, 0.0, %v1934
      %v1939 = vsel %vm619, 0.0, %v1935
      %v1940 = vsel %vm619, 0.0, %v1936
      %v1941 = vsel %vm619, 0.0, %v1937
      %v1942 = vld [vmem:[%s8 + $0x6] sm:$0x1]
      %1943 = vrot.lane.b32.xlu0 %v1930, 16
      %v1944 = vpop.permute.xlu0 %1943
      %1945 = vrot.lane.b32.xlu0 %v1931, 16
      %v1946 = vpop.permute.xlu0 %1945
      %1947 = vrot.lane.b32.xlu0 %v1932, 16
      %v1948 = vpop.permute.xlu0 %1947
      %1949 = vrot.lane.b32.xlu0 %v1933, 16
      %v1950 = vpop.permute.xlu0 %1949
      %v1951 = vsel %vm620, 0.0, %v1944
      %v1952 = vsel %vm620, 0.0, %v1946
      %v1953 = vsel %vm620, 0.0, %v1948
      %v1954 = vsel %vm620, 0.0, %v1950
      %v1955 = vlaneseq
      %v1956 = vshrl.u32 %v1955, 7
      %v1957 = vsub.s32 0, %v1956
      %v1958 = vrot.slane %v1942, %v1957
      %v1959 = vmul.f32 %v1958, %v1951
      %v1960 = vmul.f32 %v1958, %v1952
      %v1961 = vmul.f32 %v1958, %v1953
      %v1962 = vmul.f32 %v1958, %v1954
      %v1963 = vadd.f32 %v1922, %v1959
      %v1964 = vadd.f32 %v1923, %v1960
      %v1965 = vadd.f32 %v1924, %v1961
      %v1966 = vadd.f32 %v1925, %v1962
      %v1967 = vld [vmem:[%s1698 + $0x6] sm:$0x1]
      %1968 = vrot.lane.b32.xlu0 %v1938, 16
      %v1969 = vpop.permute.xlu0 %1968
      %1970 = vrot.lane.b32.xlu0 %v1939, 16
      %v1971 = vpop.permute.xlu0 %1970
      %1972 = vrot.lane.b32.xlu0 %v1940, 16
      %v1973 = vpop.permute.xlu0 %1972
      %1974 = vrot.lane.b32.xlu0 %v1941, 16
      %v1975 = vpop.permute.xlu0 %1974
      %v1976 = vsel %vm620, 0.0, %v1969
      %v1977 = vsel %vm620, 0.0, %v1971
      %v1978 = vsel %vm620, 0.0, %v1973
      %v1979 = vsel %vm620, 0.0, %v1975
      %v1980 = vlaneseq
      %v1981 = vshrl.u32 %v1980, 7
      %v1982 = vsub.s32 0, %v1981
      %v1983 = vrot.slane %v1967, %v1982
      %v1984 = vmul.f32 %v1983, %v1976
      %v1985 = vmul.f32 %v1983, %v1977
      %v1986 = vmul.f32 %v1983, %v1978
      %v1987 = vmul.f32 %v1983, %v1979
      %v1988 = vadd.f32 %v1963, %v1984
      %v1989 = vadd.f32 %v1964, %v1985
      %v1990 = vadd.f32 %v1965, %v1986
      %v1991 = vadd.f32 %v1966, %v1987
      %v1992 = vld [vmem:[%s8 + $0x7] sm:$0x1]
      %v1993 = vlaneseq
      %v1994 = vshrl.u32 %v1993, 7
      %v1995 = vsub.s32 0, %v1994
      %v1996 = vrot.slane %v1992, %v1995
      %v1997 = vmul.f32 %v1996, %v1930
      %v1998 = vmul.f32 %v1996, %v1931
      %v1999 = vmul.f32 %v1996, %v1932
      %v2000 = vmul.f32 %v1996, %v1933
      %v2001 = vadd.f32 %v1988, %v1997
      %v2002 = vadd.f32 %v1989, %v1998
      %v2003 = vadd.f32 %v1990, %v1999
      %v2004 = vadd.f32 %v1991, %v2000
      %v2005 = vld [vmem:[%s1698 + $0x7] sm:$0x1]
      %v2006 = vlaneseq
      %v2007 = vshrl.u32 %v2006, 7
      %v2008 = vsub.s32 0, %v2007
      %v2009 = vrot.slane %v2005, %v2008
      %v2010 = vmul.f32 %v2009, %v1938
      %v2011 = vmul.f32 %v2009, %v1939
      %v2012 = vmul.f32 %v2009, %v1940
      %v2013 = vmul.f32 %v2009, %v1941
      %v2014 = vadd.f32 %v2001, %v2010
      %v2015 = vadd.f32 %v2002, %v2011
      %v2016 = vadd.f32 %v2003, %v2012
      %v2017 = vadd.f32 %v2004, %v2013
      %v2018 = vld [vmem:[%s8 + $0x8] sm:$0x1]
      %2019 = vrot.lane.b32.xlu0 %v1930, 112
      %v2020 = vpop.permute.xlu0 %2019
      %2021 = vrot.lane.b32.xlu0 %v1931, 112
      %v2022 = vpop.permute.xlu0 %2021
      %2023 = vrot.lane.b32.xlu0 %v1932, 112
      %v2024 = vpop.permute.xlu0 %2023
      %2025 = vrot.lane.b32.xlu0 %v1933, 112
      %v2026 = vpop.permute.xlu0 %2025
      %v2027 = vsel %vm621, 0.0, %v2020
      %v2028 = vsel %vm621, 0.0, %v2022
      %v2029 = vsel %vm621, 0.0, %v2024
      %v2030 = vsel %vm621, 0.0, %v2026
      %v2031 = vlaneseq
      %v2032 = vshrl.u32 %v2031, 7
      %v2033 = vsub.s32 0, %v2032
      %v2034 = vrot.slane %v2018, %v2033
      %v2035 = vmul.f32 %v2034, %v2027
      %v2036 = vmul.f32 %v2034, %v2028
      %v2037 = vmul.f32 %v2034, %v2029
      %v2038 = vmul.f32 %v2034, %v2030
      %v2039 = vadd.f32 %v2014, %v2035
      %v2040 = vadd.f32 %v2015, %v2036
      %v2041 = vadd.f32 %v2016, %v2037
      %v2042 = vadd.f32 %v2017, %v2038
      %v2043 = vld [vmem:[%s1698 + $0x8] sm:$0x1]
      %2044 = vrot.lane.b32.xlu0 %v1938, 112
      %v2045 = vpop.permute.xlu0 %2044
      %2046 = vrot.lane.b32.xlu0 %v1939, 112
      %v2047 = vpop.permute.xlu0 %2046
      %2048 = vrot.lane.b32.xlu0 %v1940, 112
      %v2049 = vpop.permute.xlu0 %2048
      %2050 = vrot.lane.b32.xlu0 %v1941, 112
      %v2051 = vpop.permute.xlu0 %2050
      %v2052 = vsel %vm621, 0.0, %v2045
      %v2053 = vsel %vm621, 0.0, %v2047
      %v2054 = vsel %vm621, 0.0, %v2049
      %v2055 = vsel %vm621, 0.0, %v2051
      %v2056 = vlaneseq
      %v2057 = vshrl.u32 %v2056, 7
      %v2058 = vsub.s32 0, %v2057
      %v2059 = vrot.slane %v2043, %v2058
      %v2060 = vmul.f32 %v2059, %v2052
      %v2061 = vmul.f32 %v2059, %v2053
      %v2062 = vmul.f32 %v2059, %v2054
      %v2063 = vmul.f32 %v2059, %v2055
      %v2064 = vadd.f32 %v2039, %v2060
      %v2065 = vadd.f32 %v2040, %v2061
      %v2066 = vadd.f32 %v2041, %v2062
      %v2067 = vadd.f32 %v2042, %v2063
      %2068 = vst [vmem:[%s332] sm:$0xff] %v2064
      %2069 = vst [vmem:[%s332 + $0x8] sm:$0xff] %v2065
      %2070 = vst [vmem:[%s332 + $0x10] sm:$0xff] %v2066
      %2071 = vst [vmem:[%s332 + $0x18] sm:$0xff] %v2067
      %p2072 = scmp.lt.s32.totalorder %s20, 1
      %s2073 = scalar_select %p2072, %s20, 1
      %s2074 = smul.addr %s2073, 4
      %s2075 = smul.addr %s2074, 8
      %s2076 = scalar_lea.vmem %s9, %s2075
      // Predicated region
      $region57: #{multi_fiber_unit.1} parent=55 // pred_check
        %p2077 = pneg %p232
      $region58: #{multi_fiber_unit.1} parent=55 // pred_check_branch
        %2079 = sbr.rel (%p2077) target = $region60
      $region59: #{multi_fiber_unit.1} parent=55 // pred_region
        _
      $region60: #{multi_fiber_unit.1} parent=55 // pred_fallthru
        _
    $region56: #{multi_fiber_unit.1} parent=5 // pred_fallthru
      _
    %p2080 = scmp.le.s32.totalorder 2, %s15
    // Predicated region
    $region61: #{multi_fiber_unit.1} parent=5 // pred_check
      %p2081 = pneg %p2080
    $region62: #{multi_fiber_unit.1} parent=5 // pred_check_branch
      %2083 = sbr.rel (%p2081) target = $region64
    $region63: #{multi_fiber_unit.1} parent=5 // pred_region
      %s2084 = ssub.s32 %s15, 2
      // Predicated region
      $region65: #{multi_fiber_unit.1} parent=63 // pred_check
        %p2085 = pneg %p238
      $region66: #{multi_fiber_unit.1} parent=63 // pred_check_branch
        %2087 = sbr.rel (%p2085) target = $region68
      $region67: #{multi_fiber_unit.1} parent=63 // pred_region
        %p2088 = scmp.lt.s32.totalorder %s21, 1
        %s2089 = scalar_select %p2088, %s21, 1
        %s2090 = smul.addr %s2089, 4
        %s2091 = smul.addr %s2090, 8
        %s2092 = scalar_lea.vmem %s9, %s2091
      $region68: #{multi_fiber_unit.1} parent=63 // pred_fallthru
        _
    $region64: #{multi_fiber_unit.1} parent=5 // pred_fallthru
      _
  $region6: #{multi_fiber_unit.1} parent=0 // loop_footer
    %s19 = sadd.s32 1, %s15
  $region7: #{multi_fiber_unit.1} parent=0 // loop_footer_branch
    %14 = sbr.rel target = $region3
  $region8: #{multi_fiber_unit.1} parent=0 // loop_exit
    _

</llo_original>
